<compile_context>
chip_gen: v7x
topology: tpu7x:2x2x1
jax: 0.10.0
libtpu: 0.0.40
codegen_flags: <defaults>
</compile_context>

<pallas_src>
import functools
import math

import jax
import jax.numpy as jnp
from jax.experimental import pallas as pl
from jax.experimental.pallas import tpu as pltpu

CPAD = 128      # lane-padded channel width of every layer OUTPUT
CIN0 = 8        # conv1 input channels padded 3 -> 8 (cheap K alignment)
FC_HID = 64     # fc1 hidden width (kept at its real size, no N pad)


# --------------------------------------------------------------------------
# Per-generation VMEM budgets
# --------------------------------------------------------------------------
def _round_up(n, m):
    return ((n + m - 1) // m) * m


def _cdiv(a, b):
    return -(-a // b)


@functools.lru_cache(maxsize=None)
def _budgets():
    """(vmem_limit_bytes, per-block input tile budget bytes) per TPU generation."""
    cap = None
    try:
        cap = int(pltpu.get_tpu_info().vmem_capacity_bytes)
    except Exception:
        cap = None
    if cap is not None and cap >= 100 * 1024 * 1024:
        # v5e / v6e: 128 MiB physical VMEM -> larger scoped limit & tiles
        return 64 * 1024 * 1024, 8 * 1024 * 1024
    # v7x (64 MiB VMEM) or unknown: conservative
    return 32 * 1024 * 1024, 4 * 1024 * 1024


def _compiler_params():
    vmem_limit, _ = _budgets()
    return pltpu.CompilerParams(dimension_semantics=("parallel",),
                                vmem_limit_bytes=vmem_limit)


def _grid_tiles(m, bytes_per_row, sublane=16):
    """Pick (tm, mp): 16-row aligned tiles (bf16 sublanes), 256-row aligned when
    large (full MXU passes), >= 2 grid blocks whenever m allows (megacore +
    DMA/compute overlap), each input block under the per-generation budget."""
    _, tile_budget = _budgets()
    cap = max(sublane, ((tile_budget // max(bytes_per_row, 1)) // sublane) * sublane)
    if m <= sublane:
        tm = sublane
        mp = sublane
        return tm, mp
    grid = max(2, _cdiv(m, cap))
    rows = _cdiv(m, grid)
    align = 256 if rows >= 512 else sublane
    tm = _round_up(rows, align)
    mp = grid * tm
    return tm, mp


# --------------------------------------------------------------------------
# Pallas kernels
# --------------------------------------------------------------------------
def _conv_pool_bias_relu_kernel(x_ref, w_ref, b_ref, o_ref, *, ntaps, relu):
    """Fused conv-as-matmul + 2x2 max-pool (ntaps==4) + bias + ReLU.

    x_ref: [ntaps, TM, K] bf16  im2col rows, one slab per pooling tap
    w_ref: [K, 128]       bf16  packed weights, resident across the M grid
    b_ref: [1, 128]       f32   packed bias
    o_ref: [TM, 128]      bf16  lane-dense output
    """
    ntaps_, tm, k = x_ref.shape
    # One MXU matmul over all taps (4*TM rows), then a VPU max over row slices.
    x = x_ref[...].reshape(ntaps_ * tm, k)
    y = jnp.dot(x, w_ref[...], preferred_element_type=jnp.float32)
    r = y[0:tm]
    for t in range(1, ntaps):
        r = jnp.maximum(r, y[t * tm:(t + 1) * tm])
    r = r + b_ref[...]
    if relu:
        r = jnp.maximum(r, 0.0)
    o_ref[...] = r.astype(o_ref.dtype)


def _fc_head_kernel(x_ref, w1_ref, b1_ref, w2_ref, b2_ref, o_ref):
    """relu(x @ w1 + b1) @ w2 + b2.  Hidden (TM, 64) stays in vregs."""
    h = jnp.dot(x_ref[...], w1_ref[...], preferred_element_type=jnp.float32)
    h = jnp.maximum(h + b1_ref[...], 0.0)
    y = jnp.dot(h.astype(jnp.bfloat16), w2_ref[...],
                preferred_element_type=jnp.float32) + b2_ref[...]
    o_ref[...] = y.astype(o_ref.dtype)


# --------------------------------------------------------------------------
# pallas_call wrappers (M-tiled grid, parallel semantics, resident weights)
# --------------------------------------------------------------------------
def conv_matmul(cols, w, b, *, relu=True):
    """cols: [T, M, K] bf16, w: [K, 128] bf16, b: [1, 128] f32 -> [M, 128] bf16."""
    t, m, k = cols.shape
    n = w.shape[1]
    tm, mp = _grid_tiles(m, t * k * cols.dtype.itemsize)
    if mp != m:
        cols = jnp.pad(cols, ((0, 0), (0, mp - m), (0, 0)))
    kern = functools.partial(_conv_pool_bias_relu_kernel, ntaps=t, relu=relu)
    out = pl.pallas_call(
        kern,
        out_shape=jax.ShapeDtypeStruct((mp, n), jnp.bfloat16),
        grid_spec=pltpu.PrefetchScalarGridSpec(
            num_scalar_prefetch=0,
            grid=(mp // tm,),
            in_specs=[
                pl.BlockSpec((t, tm, k), lambda i: (0, i, 0)),
                pl.BlockSpec((k, n), lambda i: (0, 0)),   # weights stay resident
                pl.BlockSpec((1, n), lambda i: (0, 0)),
            ],
            out_specs=pl.BlockSpec((tm, n), lambda i: (i, 0)),
        ),
        compiler_params=_compiler_params(),
    )(cols, w, b)
    return out[:m]


def fc_head(x, w1, b1, w2, b2):
    """x: [M, K] bf16 -> relu(x@w1+b1)@w2+b2 : [M, 128] f32."""
    m, k = x.shape
    n_hid = w1.shape[1]
    n_out = w2.shape[1]
    tm, mp = _grid_tiles(m, k * x.dtype.itemsize)
    if mp != m:
        x = jnp.pad(x, ((0, mp - m), (0, 0)))
    out = pl.pallas_call(
        _fc_head_kernel,
        out_shape=jax.ShapeDtypeStruct((mp, n_out), jnp.float32),
        grid_spec=pltpu.PrefetchScalarGridSpec(
            num_scalar_prefetch=0,
            grid=(mp // tm,),
            in_specs=[
                pl.BlockSpec((tm, k), lambda i: (i, 0)),
                pl.BlockSpec((k, n_hid), lambda i: (0, 0)),
                pl.BlockSpec((1, n_hid), lambda i: (0, 0)),
                pl.BlockSpec((n_hid, n_out), lambda i: (0, 0)),
                pl.BlockSpec((1, n_out), lambda i: (0, 0)),
            ],
            out_specs=pl.BlockSpec((tm, n_out), lambda i: (i, 0)),
        ),
        compiler_params=_compiler_params(),
    )(x, w1, b1, w2, b2)
    return out[:m]


# --------------------------------------------------------------------------
# Plain-JAX glue: NHWC im2col by strided slicing only (no transposes)
# --------------------------------------------------------------------------
def _im2col_pool_taps(x, kh=3, kw=3):
    """x: [B, H, W, C] -> ([4, B*PH*PW, kh*kw*C], (B, PH, PW)) for conv+pool."""
    b, h, w, c = x.shape
    oh, ow = h - kh + 1, w - kw + 1
    ph, pw = oh // 2, ow // 2          # floor pooling, matches MaxPool2d(2, 2)
    taps = []
    for ti in range(2):
        for tj in range(2):
            parts = []
            for ki in range(kh):
                for kj in range(kw):
                    si, sj = ti + ki, tj + kj
                    parts.append(x[:, si:si + 2 * ph:2, sj:sj + 2 * pw:2, :])
            cols = jnp.concatenate(parts, axis=-1)          # [B, PH, PW, kh*kw*C]
            taps.append(cols.reshape(b * ph * pw, kh * kw * c))
    return jnp.stack(taps, axis=0), (b, ph, pw)


def _im2col_taps(x, kh=3, kw=3):
    """x: [B, H, W, C] -> ([1, B*OH*OW, kh*kw*C], (B, OH, OW)) for plain conv."""
    b, h, w, c = x.shape
    oh, ow = h - kh + 1, w - kw + 1
    parts = [x[:, ki:ki + oh, kj:kj + ow, :] for ki in range(kh) for kj in range(kw)]
    cols = jnp.concatenate(parts, axis=-1).reshape(b * oh * ow, kh * kw * c)
    return cols[None], (b, oh, ow)


# --------------------------------------------------------------------------
# Parameter init (PyTorch-style) and one-time packing (outside jit)
# --------------------------------------------------------------------------
def init_params(key):
    def conv_p(k, cout, cin, ksz):
        k1, k2 = jax.random.split(k)
        bound = 1.0 / math.sqrt(cin * ksz * ksz)
        w = jax.random.uniform(k1, (cout, cin, ksz, ksz), jnp.float32, -bound, bound)
        b = jax.random.uniform(k2, (cout,), jnp.float32, -bound, bound)
        return w, b

    def fc_p(k, out_f, in_f):
        k1, k2 = jax.random.split(k)
        bound = 1.0 / math.sqrt(in_f)
        w = jax.random.uniform(k1, (out_f, in_f), jnp.float32, -bound, bound)
        b = jax.random.uniform(k2, (out_f,), jnp.float32, -bound, bound)
        return w, b

    keys = jax.random.split(key, 5)
    return {
        "conv1": conv_p(keys[0], 32, 3, 3),
        "conv2": conv_p(keys[1], 64, 32, 3),
        "conv3": conv_p(keys[2], 64, 64, 3),
        "fc1": fc_p(keys[3], 64, 64 * 4 * 4),
        "fc2": fc_p(keys[4], 100, 64),
    }


def _pad_axis(a, size, axis):
    pads = [(0, 0)] * a.ndim
    pads[axis] = (0, size - a.shape[axis])
    return jnp.pad(a, pads)


def pack_params(raw):
    """Pack PyTorch-layout weights once: real-cin (kh, kw, cin) K order, bf16,
    output N padded to 128 (fc1 hidden kept at 64)."""
    def pack_conv(wb, cin_pad=None):
        w, b = wb
        cout, cin, kh, kw = w.shape
        if cin_pad is not None and cin_pad > cin:
            w = _pad_axis(w, cin_pad, 1)
            cin = cin_pad
        wm = jnp.transpose(w, (2, 3, 1, 0)).reshape(kh * kw * cin, cout)
        wm = _pad_axis(wm, CPAD, 1).astype(jnp.bfloat16)          # [K, 128]
        bm = _pad_axis(b, CPAD, 0).reshape(1, CPAD).astype(jnp.float32)
        return wm, bm

    w_c1, b_c1 = pack_conv(raw["conv1"], CIN0)   # K = 3*3*8   = 72
    w_c2, b_c2 = pack_conv(raw["conv2"])         # K = 3*3*32  = 288
    w_c3, b_c3 = pack_conv(raw["conv3"])         # K = 3*3*64  = 576

    # fc1: PyTorch flattens NCHW (c, h, w); our activations flatten as (h, w, c=64).
    w1, b1 = raw["fc1"]                                           # [64, 1024]
    w1 = w1.reshape(64, 64, 4, 4)                                 # [out, c, h, w]
    w1 = jnp.transpose(w1, (0, 2, 3, 1)).reshape(64, 4 * 4 * 64).T  # [1024, 64]
    w1 = w1.astype(jnp.bfloat16)
    b1 = b1.reshape(1, FC_HID).astype(jnp.float32)

    w2, b2 = raw["fc2"]                                           # [100, 64]
    w2 = _pad_axis(w2.T, CPAD, 1).astype(jnp.bfloat16)            # [64, 128]
    b2 = _pad_axis(b2, CPAD, 0).reshape(1, CPAD).astype(jnp.float32)

    return dict(w_c1=w_c1, b_c1=b_c1, w_c2=w_c2, b_c2=b_c2, w_c3=w_c3, b_c3=b_c3,
                w_f1=w1, b_f1=b1, w_f2=w2, b_f2=b2)


# --------------------------------------------------------------------------
# Forward pass
# --------------------------------------------------------------------------
def cnn_cifar100_forward(p, x_nchw):
    b = x_nchw.shape[0]
    # Boundary conversion only: NCHW -> NHWC bf16, channels padded 3 -> 8.
    x = jnp.transpose(x_nchw, (0, 2, 3, 1))
    x = _pad_axis(x, CIN0, 3).astype(jnp.bfloat16)                # [B, 32, 32, 8]

    # conv1 + ReLU + 2x2 max-pool
    cols, (_, ph, pw) = _im2col_pool_taps(x)                      # [4, B*225, 72]
    x = conv_matmul(cols, p["w_c1"], p["b_c1"])                   # [B*225, 128]
    x = x.reshape(b, ph, pw, CPAD)[..., :32]                      # [B, 15, 15, 32]

    # conv2 + ReLU + 2x2 max-pool
    cols, (_, ph, pw) = _im2col_pool_taps(x)                      # [4, B*36, 288]
    x = conv_matmul(cols, p["w_c2"], p["b_c2"])                   # [B*36, 128]
    x = x.reshape(b, ph, pw, CPAD)[..., :64]                      # [B, 6, 6, 64]

    # conv3 + ReLU
    cols, (_, oh, ow) = _im2col_taps(x)                           # [1, B*16, 576]
    x = conv_matmul(cols, p["w_c3"], p["b_c3"])                   # [B*16, 128]
    x = x.reshape(b, oh, ow, CPAD)[..., :64]                      # [B, 4, 4, 64]

    # flatten (h, w, c) -> fc1 + ReLU + fc2 (fused)
    feats = x.reshape(b, oh * ow * 64)                            # [B, 1024] bf16
    logits = fc_head(feats, p["w_f1"], p["b_f1"], p["w_f2"], p["b_f2"])  # [B, 128]
    return logits[:, :100]


if __name__ == "__main__":
    # fc1 expects 64*4*4 features, which pins the input to 3x32x32 (CIFAR).
    x = jax.random.normal(jax.random.PRNGKey(0), (2, 3, 32, 32), jnp.float32)
    raw_params = init_params(jax.random.PRNGKey(42))
    packed = pack_params(raw_params)           # one-time weight packing, outside jit

    fwd = jax.jit(cnn_cifar100_forward)
    out = fwd(packed, x)
    jax.block_until_ready(out)

    assert out.shape == (2, 100), out.shape
    assert out.dtype == jnp.float32
    print("KERNEL_OK")
</pallas_src>

<mosaic_0001>
module attributes {stable_mosaic.version = 11 : i64} {
  func.func @_conv_pool_bias_relu_kernel(%arg0: i32, %arg1: memref<4x240x72xbf16, #tpu.memory_space<vmem>>, %arg2: memref<72x128xbf16, #tpu.memory_space<vmem>>, %arg3: memref<1x128xf32, #tpu.memory_space<vmem>>, %arg4: memref<240x128xbf16, #tpu.memory_space<vmem>>) attributes {dimension_semantics = [#tpu.dimension_semantics<parallel>], iteration_bounds = array<i64: 2>, scalar_prefetch = 0 : i64, scratch_operands = 0 : i64, tpu.core_type = #tpu.core_type<tc>, window_params = [{transform_indices = @transform_0, window_bounds = array<i64: 4, 240, 72>}, {pipeline_mode = #tpu.pipeline_mode<synchronous>, transform_indices = @transform_1, window_bounds = array<i64: 72, 128>}, {pipeline_mode = #tpu.pipeline_mode<synchronous>, transform_indices = @transform_2, window_bounds = array<i64: 1, 128>}, {transform_indices = @transform_3, window_bounds = array<i64: 240, 128>}]} {
    %c0 = arith.constant 0 : index
    %c0_0 = arith.constant 0 : index
    %c0_1 = arith.constant 0 : index
    %0 = vector.load %arg1[%c0, %c0_0, %c0_1] : memref<4x240x72xbf16, #tpu.memory_space<vmem>>, vector<4x240x72xbf16>
    %1 = vector.shape_cast %0 : vector<4x240x72xbf16> to vector<960x72xbf16>
    %c0_2 = arith.constant 0 : index
    %c0_3 = arith.constant 0 : index
    %2 = vector.load %arg2[%c0_2, %c0_3] : memref<72x128xbf16, #tpu.memory_space<vmem>>, vector<72x128xbf16>
    %cst = arith.constant dense<0.000000e+00> : vector<960x128xf32>
    %3 = tpu.matmul %1, %2, %cst {dimension_numbers = #tpu.dot_dimension_numbers<[1], [0], [0], [1], [0, 0, 1, 1], [], []>} : vector<960x72xbf16>, vector<72x128xbf16>, vector<960x128xf32> -> vector<960x128xf32>
    %4 = vector.extract_strided_slice %3 {offsets = [0, 0], sizes = [240, 128], strides = [1, 1]} : vector<960x128xf32> to vector<240x128xf32>
    %5 = vector.extract_strided_slice %3 {offsets = [240, 0], sizes = [240, 128], strides = [1, 1]} : vector<960x128xf32> to vector<240x128xf32>
    %6 = arith.maximumf %4, %5 : vector<240x128xf32>
    %7 = vector.extract_strided_slice %3 {offsets = [480, 0], sizes = [240, 128], strides = [1, 1]} : vector<960x128xf32> to vector<240x128xf32>
    %8 = arith.maximumf %6, %7 : vector<240x128xf32>
    %9 = vector.extract_strided_slice %3 {offsets = [720, 0], sizes = [240, 128], strides = [1, 1]} : vector<960x128xf32> to vector<240x128xf32>
    %10 = arith.maximumf %8, %9 : vector<240x128xf32>
    %c0_4 = arith.constant 0 : index
    %c0_5 = arith.constant 0 : index
    %11 = vector.load %arg3[%c0_4, %c0_5] : memref<1x128xf32, #tpu.memory_space<vmem>>, vector<1x128xf32>
    %12 = vector.broadcast %11 : vector<1x128xf32> to vector<240x128xf32>
    %13 = arith.addf %10, %12 : vector<240x128xf32>
    %cst_6 = arith.constant 0.000000e+00 : f32
    %14 = vector.broadcast %cst_6 : f32 to vector<240x128xf32>
    %15 = arith.maximumf %13, %14 : vector<240x128xf32>
    %16 = arith.truncf %15 : vector<240x128xf32> to vector<240x128xbf16>
    %c0_7 = arith.constant 0 : index
    %c0_8 = arith.constant 0 : index
    %17 = vector.load %arg4[%c0_7, %c0_8] : memref<240x128xbf16, #tpu.memory_space<vmem>>, vector<240x128xbf16>
    tpu.vector_store %arg4[%c0_7, %c0_8], %16 {strides = array<i32>} : memref<240x128xbf16, #tpu.memory_space<vmem>>, vector<240x128xbf16>,
    return
  }
  func.func @transform_0(%arg0: i32) -> (i32, i32, i32) {
    %c0_i32 = arith.constant 0 : i32
    %c0_i32_0 = arith.constant 0 : i32
    %c0_i32_1 = arith.constant 0 : i32
    return %c0_i32, %arg0, %c0_i32_0 : i32, i32, i32
  }
  func.func @transform_1(%arg0: i32) -> (i32, i32) {
    %c0_i32 = arith.constant 0 : i32
    %c0_i32_0 = arith.constant 0 : i32
    %c0_i32_1 = arith.constant 0 : i32
    return %c0_i32, %c0_i32_0 : i32, i32
  }
  func.func @transform_2(%arg0: i32) -> (i32, i32) {
    %c0_i32 = arith.constant 0 : i32
    %c0_i32_0 = arith.constant 0 : i32
    %c0_i32_1 = arith.constant 0 : i32
    return %c0_i32, %c0_i32_0 : i32, i32
  }
  func.func @transform_3(%arg0: i32) -> (i32, i32) {
    %c0_i32 = arith.constant 0 : i32
    %c0_i32_0 = arith.constant 0 : i32
    return %arg0, %c0_i32 : i32, i32
  }
}

module attributes {stable_mosaic.version = 11 : i64} {
  func.func @_conv_pool_bias_relu_kernel(%arg0: i32, %arg1: memref<4x48x288xbf16, #tpu.memory_space<vmem>>, %arg2: memref<288x128xbf16, #tpu.memory_space<vmem>>, %arg3: memref<1x128xf32, #tpu.memory_space<vmem>>, %arg4: memref<48x128xbf16, #tpu.memory_space<vmem>>) attributes {dimension_semantics = [#tpu.dimension_semantics<parallel>], iteration_bounds = array<i64: 2>, scalar_prefetch = 0 : i64, scratch_operands = 0 : i64, tpu.core_type = #tpu.core_type<tc>, window_params = [{transform_indices = @transform_0, window_bounds = array<i64: 4, 48, 288>}, {pipeline_mode = #tpu.pipeline_mode<synchronous>, transform_indices = @transform_1, window_bounds = array<i64: 288, 128>}, {pipeline_mode = #tpu.pipeline_mode<synchronous>, transform_indices = @transform_2, window_bounds = array<i64: 1, 128>}, {transform_indices = @transform_3, window_bounds = array<i64: 48, 128>}]} {
    %c0 = arith.constant 0 : index
    %c0_0 = arith.constant 0 : index
    %c0_1 = arith.constant 0 : index
    %0 = vector.load %arg1[%c0, %c0_0, %c0_1] : memref<4x48x288xbf16, #tpu.memory_space<vmem>>, vector<4x48x288xbf16>
    %1 = vector.shape_cast %0 : vector<4x48x288xbf16> to vector<192x288xbf16>
    %c0_2 = arith.constant 0 : index
    %c0_3 = arith.constant 0 : index
    %2 = vector.load %arg2[%c0_2, %c0_3] : memref<288x128xbf16, #tpu.memory_space<vmem>>, vector<288x128xbf16>
    %cst = arith.constant dense<0.000000e+00> : vector<192x128xf32>
    %3 = tpu.matmul %1, %2, %cst {dimension_numbers = #tpu.dot_dimension_numbers<[1], [0], [0], [1], [0, 0, 1, 1], [], []>} : vector<192x288xbf16>, vector<288x128xbf16>, vector<192x128xf32> -> vector<192x128xf32>
    %4 = vector.extract_strided_slice %3 {offsets = [0, 0], sizes = [48, 128], strides = [1, 1]} : vector<192x128xf32> to vector<48x128xf32>
    %5 = vector.extract_strided_slice %3 {offsets = [48, 0], sizes = [48, 128], strides = [1, 1]} : vector<192x128xf32> to vector<48x128xf32>
    %6 = arith.maximumf %4, %5 : vector<48x128xf32>
    %7 = vector.extract_strided_slice %3 {offsets = [96, 0], sizes = [48, 128], strides = [1, 1]} : vector<192x128xf32> to vector<48x128xf32>
    %8 = arith.maximumf %6, %7 : vector<48x128xf32>
    %9 = vector.extract_strided_slice %3 {offsets = [144, 0], sizes = [48, 128], strides = [1, 1]} : vector<192x128xf32> to vector<48x128xf32>
    %10 = arith.maximumf %8, %9 : vector<48x128xf32>
    %c0_4 = arith.constant 0 : index
    %c0_5 = arith.constant 0 : index
    %11 = vector.load %arg3[%c0_4, %c0_5] : memref<1x128xf32, #tpu.memory_space<vmem>>, vector<1x128xf32>
    %12 = vector.broadcast %11 : vector<1x128xf32> to vector<48x128xf32>
    %13 = arith.addf %10, %12 : vector<48x128xf32>
    %cst_6 = arith.constant 0.000000e+00 : f32
    %14 = vector.broadcast %cst_6 : f32 to vector<48x128xf32>
    %15 = arith.maximumf %13, %14 : vector<48x128xf32>
    %16 = arith.truncf %15 : vector<48x128xf32> to vector<48x128xbf16>
    %c0_7 = arith.constant 0 : index
    %c0_8 = arith.constant 0 : index
    %17 = vector.load %arg4[%c0_7, %c0_8] : memref<48x128xbf16, #tpu.memory_space<vmem>>, vector<48x128xbf16>
    tpu.vector_store %arg4[%c0_7, %c0_8], %16 {strides = array<i32>} : memref<48x128xbf16, #tpu.memory_space<vmem>>, vector<48x128xbf16>,
    return
  }
  func.func @transform_0(%arg0: i32) -> (i32, i32, i32) {
    %c0_i32 = arith.constant 0 : i32
    %c0_i32_0 = arith.constant 0 : i32
    %c0_i32_1 = arith.constant 0 : i32
    return %c0_i32, %arg0, %c0_i32_0 : i32, i32, i32
  }
  func.func @transform_1(%arg0: i32) -> (i32, i32) {
    %c0_i32 = arith.constant 0 : i32
    %c0_i32_0 = arith.constant 0 : i32
    %c0_i32_1 = arith.constant 0 : i32
    return %c0_i32, %c0_i32_0 : i32, i32
  }
  func.func @transform_2(%arg0: i32) -> (i32, i32) {
    %c0_i32 = arith.constant 0 : i32
    %c0_i32_0 = arith.constant 0 : i32
    %c0_i32_1 = arith.constant 0 : i32
    return %c0_i32, %c0_i32_0 : i32, i32
  }
  func.func @transform_3(%arg0: i32) -> (i32, i32) {
    %c0_i32 = arith.constant 0 : i32
    %c0_i32_0 = arith.constant 0 : i32
    return %arg0, %c0_i32 : i32, i32
  }
}

module attributes {stable_mosaic.version = 11 : i64} {
  func.func @_conv_pool_bias_relu_kernel(%arg0: i32, %arg1: memref<1x16x576xbf16, #tpu.memory_space<vmem>>, %arg2: memref<576x128xbf16, #tpu.memory_space<vmem>>, %arg3: memref<1x128xf32, #tpu.memory_space<vmem>>, %arg4: memref<16x128xbf16, #tpu.memory_space<vmem>>) attributes {dimension_semantics = [#tpu.dimension_semantics<parallel>], iteration_bounds = array<i64: 2>, scalar_prefetch = 0 : i64, scratch_operands = 0 : i64, tpu.core_type = #tpu.core_type<tc>, window_params = [{transform_indices = @transform_0, window_bounds = array<i64: 1, 16, 576>}, {pipeline_mode = #tpu.pipeline_mode<synchronous>, transform_indices = @transform_1, window_bounds = array<i64: 576, 128>}, {pipeline_mode = #tpu.pipeline_mode<synchronous>, transform_indices = @transform_2, window_bounds = array<i64: 1, 128>}, {transform_indices = @transform_3, window_bounds = array<i64: 16, 128>}]} {
    %c0 = arith.constant 0 : index
    %c0_0 = arith.constant 0 : index
    %c0_1 = arith.constant 0 : index
    %0 = vector.load %arg1[%c0, %c0_0, %c0_1] : memref<1x16x576xbf16, #tpu.memory_space<vmem>>, vector<1x16x576xbf16>
    %1 = vector.shape_cast %0 : vector<1x16x576xbf16> to vector<16x576xbf16>
    %c0_2 = arith.constant 0 : index
    %c0_3 = arith.constant 0 : index
    %2 = vector.load %arg2[%c0_2, %c0_3] : memref<576x128xbf16, #tpu.memory_space<vmem>>, vector<576x128xbf16>
    %cst = arith.constant dense<0.000000e+00> : vector<16x128xf32>
    %3 = tpu.matmul %1, %2, %cst {dimension_numbers = #tpu.dot_dimension_numbers<[1], [0], [0], [1], [0, 0, 1, 1], [], []>} : vector<16x576xbf16>, vector<576x128xbf16>, vector<16x128xf32> -> vector<16x128xf32>
    %c0_4 = arith.constant 0 : index
    %c0_5 = arith.constant 0 : index
    %4 = vector.load %arg3[%c0_4, %c0_5] : memref<1x128xf32, #tpu.memory_space<vmem>>, vector<1x128xf32>
    %5 = vector.broadcast %4 : vector<1x128xf32> to vector<16x128xf32>
    %6 = arith.addf %3, %5 : vector<16x128xf32>
    %cst_6 = arith.constant 0.000000e+00 : f32
    %7 = vector.broadcast %cst_6 : f32 to vector<16x128xf32>
    %8 = arith.maximumf %6, %7 : vector<16x128xf32>
    %9 = arith.truncf %8 : vector<16x128xf32> to vector<16x128xbf16>
    %c0_7 = arith.constant 0 : index
    %c0_8 = arith.constant 0 : index
    %10 = vector.load %arg4[%c0_7, %c0_8] : memref<16x128xbf16, #tpu.memory_space<vmem>>, vector<16x128xbf16>
    tpu.vector_store %arg4[%c0_7, %c0_8], %9 {strides = array<i32>} : memref<16x128xbf16, #tpu.memory_space<vmem>>, vector<16x128xbf16>,
    return
  }
  func.func @transform_0(%arg0: i32) -> (i32, i32, i32) {
    %c0_i32 = arith.constant 0 : i32
    %c0_i32_0 = arith.constant 0 : i32
    %c0_i32_1 = arith.constant 0 : i32
    return %c0_i32, %arg0, %c0_i32_0 : i32, i32, i32
  }
  func.func @transform_1(%arg0: i32) -> (i32, i32) {
    %c0_i32 = arith.constant 0 : i32
    %c0_i32_0 = arith.constant 0 : i32
    %c0_i32_1 = arith.constant 0 : i32
    return %c0_i32, %c0_i32_0 : i32, i32
  }
  func.func @transform_2(%arg0: i32) -> (i32, i32) {
    %c0_i32 = arith.constant 0 : i32
    %c0_i32_0 = arith.constant 0 : i32
    %c0_i32_1 = arith.constant 0 : i32
    return %c0_i32, %c0_i32_0 : i32, i32
  }
  func.func @transform_3(%arg0: i32) -> (i32, i32) {
    %c0_i32 = arith.constant 0 : i32
    %c0_i32_0 = arith.constant 0 : i32
    return %arg0, %c0_i32 : i32, i32
  }
}

module attributes {stable_mosaic.version = 11 : i64} {
  func.func @_fc_head_kernel(%arg0: i32, %arg1: memref<16x1024xbf16, #tpu.memory_space<vmem>>, %arg2: memref<1024x64xbf16, #tpu.memory_space<vmem>>, %arg3: memref<1x64xf32, #tpu.memory_space<vmem>>, %arg4: memref<64x128xbf16, #tpu.memory_space<vmem>>, %arg5: memref<1x128xf32, #tpu.memory_space<vmem>>, %arg6: memref<16x128xf32, #tpu.memory_space<vmem>>) attributes {dimension_semantics = [#tpu.dimension_semantics<parallel>], iteration_bounds = array<i64: 1>, scalar_prefetch = 0 : i64, scratch_operands = 0 : i64, tpu.core_type = #tpu.core_type<tc>, window_params = [{transform_indices = @transform_0, window_bounds = array<i64: 16, 1024>}, {pipeline_mode = #tpu.pipeline_mode<synchronous>, transform_indices = @transform_1, window_bounds = array<i64: 1024, 64>}, {pipeline_mode = #tpu.pipeline_mode<synchronous>, transform_indices = @transform_2, window_bounds = array<i64: 1, 64>}, {pipeline_mode = #tpu.pipeline_mode<synchronous>, transform_indices = @transform_3, window_bounds = array<i64: 64, 128>}, {pipeline_mode = #tpu.pipeline_mode<synchronous>, transform_indices = @transform_4, window_bounds = array<i64: 1, 128>}, {transform_indices = @transform_5, window_bounds = array<i64: 16, 128>}]} {
    %c0 = arith.constant 0 : index
    %c0_0 = arith.constant 0 : index
    %0 = vector.load %arg1[%c0, %c0_0] : memref<16x1024xbf16, #tpu.memory_space<vmem>>, vector<16x1024xbf16>
    %c0_1 = arith.constant 0 : index
    %c0_2 = arith.constant 0 : index
    %1 = vector.load %arg2[%c0_1, %c0_2] : memref<1024x64xbf16, #tpu.memory_space<vmem>>, vector<1024x64xbf16>
    %cst = arith.constant dense<0.000000e+00> : vector<16x64xf32>
    %2 = tpu.matmul %0, %1, %cst {dimension_numbers = #tpu.dot_dimension_numbers<[1], [0], [0], [1], [0, 0, 1, 1], [], []>} : vector<16x1024xbf16>, vector<1024x64xbf16>, vector<16x64xf32> -> vector<16x64xf32>
    %c0_3 = arith.constant 0 : index
    %c0_4 = arith.constant 0 : index
    %3 = vector.load %arg3[%c0_3, %c0_4] : memref<1x64xf32, #tpu.memory_space<vmem>>, vector<1x64xf32>
    %4 = vector.broadcast %3 : vector<1x64xf32> to vector<16x64xf32>
    %5 = arith.addf %2, %4 : vector<16x64xf32>
    %cst_5 = arith.constant 0.000000e+00 : f32
    %6 = vector.broadcast %cst_5 : f32 to vector<16x64xf32>
    %7 = arith.maximumf %5, %6 : vector<16x64xf32>
    %8 = arith.truncf %7 : vector<16x64xf32> to vector<16x64xbf16>
    %c0_6 = arith.constant 0 : index
    %c0_7 = arith.constant 0 : index
    %9 = vector.load %arg4[%c0_6, %c0_7] : memref<64x128xbf16, #tpu.memory_space<vmem>>, vector<64x128xbf16>
    %cst_8 = arith.constant dense<0.000000e+00> : vector<16x128xf32>
    %10 = tpu.matmul %8, %9, %cst_8 {dimension_numbers = #tpu.dot_dimension_numbers<[1], [0], [0], [1], [0, 0, 1, 1], [], []>} : vector<16x64xbf16>, vector<64x128xbf16>, vector<16x128xf32> -> vector<16x128xf32>
    %c0_9 = arith.constant 0 : index
    %c0_10 = arith.constant 0 : index
    %11 = vector.load %arg5[%c0_9, %c0_10] : memref<1x128xf32, #tpu.memory_space<vmem>>, vector<1x128xf32>
    %12 = vector.broadcast %11 : vector<1x128xf32> to vector<16x128xf32>
    %13 = arith.addf %10, %12 : vector<16x128xf32>
    %c0_11 = arith.constant 0 : index
    %c0_12 = arith.constant 0 : index
    %14 = vector.load %arg6[%c0_11, %c0_12] : memref<16x128xf32, #tpu.memory_space<vmem>>, vector<16x128xf32>
    tpu.vector_store %arg6[%c0_11, %c0_12], %13 {strides = array<i32>} : memref<16x128xf32, #tpu.memory_space<vmem>>, vector<16x128xf32>,
    return
  }
  func.func @transform_0(%arg0: i32) -> (i32, i32) {
    %c0_i32 = arith.constant 0 : i32
    %c0_i32_0 = arith.constant 0 : i32
    return %arg0, %c0_i32 : i32, i32
  }
  func.func @transform_1(%arg0: i32) -> (i32, i32) {
    %c0_i32 = arith.constant 0 : i32
    %c0_i32_0 = arith.constant 0 : i32
    %c0_i32_1 = arith.constant 0 : i32
    return %c0_i32, %c0_i32_0 : i32, i32
  }
  func.func @transform_2(%arg0: i32) -> (i32, i32) {
    %c0_i32 = arith.constant 0 : i32
    %c0_i32_0 = arith.constant 0 : i32
    %c0_i32_1 = arith.constant 0 : i32
    return %c0_i32, %c0_i32_0 : i32, i32
  }
  func.func @transform_3(%arg0: i32) -> (i32, i32) {
    %c0_i32 = arith.constant 0 : i32
    %c0_i32_0 = arith.constant 0 : i32
    %c0_i32_1 = arith.constant 0 : i32
    return %c0_i32, %c0_i32_0 : i32, i32
  }
  func.func @transform_4(%arg0: i32) -> (i32, i32) {
    %c0_i32 = arith.constant 0 : i32
    %c0_i32_0 = arith.constant 0 : i32
    %c0_i32_1 = arith.constant 0 : i32
    return %c0_i32, %c0_i32_0 : i32, i32
  }
  func.func @transform_5(%arg0: i32) -> (i32, i32) {
    %c0_i32 = arith.constant 0 : i32
    %c0_i32_0 = arith.constant 0 : i32
    return %arg0, %c0_i32 : i32, i32
  }
}

</mosaic_0001>

<llo_original>
// kernel: cnn_cifar100_forward.4
$region0: #{cnn_cifar100_forward.4}
  #allocation0 [shape = 'u32[]', space=smem, size = 0x4, offset = 0x4, fixed_abs, tag = 'smem constant byte address 0x4 - core index']
  #allocation1 [shape = 'u32[144,128]{1,0:T(1,128)}', space=vmem, size = 0x12000, scoped, tag = 'internal scratch']
  %s0 = inlined_call_operand.vmem [shape: bf16[4,480,72], index: 0, kind: input, shape index: {}]
  %s1 = inlined_call_operand.vmem [shape: bf16[72,128], index: 1, kind: input, shape index: {}]
  %s2 = inlined_call_operand.vmem [shape: f32[1,128], index: 2, kind: input, shape index: {}]
  %s3 = inlined_call_operand.vmem [shape: bf16[480,128], index: 3, kind: output, shape index: {}]
  %s4 = sld [smem:[#allocation0]]
  $region86: #{cnn_cifar100_forward.4} parent=0
    _
  %s6 = ssub.s32 1, %s4
  %s7 = scalar_select 0, %s6, %s4
  $region1: #{cnn_cifar100_forward.4} parent=0
    #allocation2 [shape = 'u8[491520]{0}', space=vmem, size = 0x78000, scoped, tag = 'input window, operand 0']
    loop: start=0, step=1, limit=4
    $region2: #{cnn_cifar100_forward.4} parent=1 // loop_pre_header
      _
    $region3: #{cnn_cifar100_forward.4} parent=1 // loop_header
      %s9 = sphi 0, %s13
      %p10 = scmp.ge.s32.totalorder %s9, 4
      %s19 = sphi 0, %s21
      %s22 = sphi 0, %s19
      %s23 = sphi 0, %s22
      %s39 = sphi 0, %s23
      %s43 = sphi 0, %s43
      %s45 = sphi 0, %s43
      %s46 = sphi 0, %s45
      %s60 = sphi 0, %s46
      %s64 = sphi 0, %s64
      %s66 = sphi 0, %s64
      %s67 = sphi 0, %s66
      %s81 = sphi 0, %s67
      %s87 = sphi 0, %s89
      %s90 = sphi 0, %s87
      %s91 = sphi 0, %s90
      %s107 = sphi 0, %s91
    $region4: #{cnn_cifar100_forward.4} parent=1 // loop_header_branch
      %12 = sbr.rel (%p10) target = $region8
    $region5: #{cnn_cifar100_forward.4} parent=1 // loop_body
      %s14 = ssub.s32 %s9, 1
      %s15 = ssub.s32 %s9, 2
      %s16 = sadd.s32 %s9, 1
      %s17 = ssub.s32 %s9, %s16
      %p18 = scmp.eq.s32.totalorder %s17, 0
      %s20 = sadd.s32 %s19, 1
      %s21 = scalar_select %p18, %s19, %s20
      %p24 = pneg %p18
      %p25 = scmp.eq.s32.totalorder %s9, 1
      %p26 = por %p24, %p25
      %p27 = scmp.ne.s32.totalorder %s19, %s22
      %p28 = scmp.eq.s32.totalorder %s9, 0
      %p29 = por %p27, %p28
      %p30 = scmp.ne.s32.totalorder %s19, %s22
      %p31 = scmp.eq.s32.totalorder %s14, 1
      %p32 = por %p30, %p31
      %p33 = scmp.ne.s32.totalorder %s22, %s23
      %p34 = scmp.eq.s32.totalorder %s14, 0
      %p35 = por %p33, %p34
      %p36 = scmp.ne.s32.totalorder %s22, %s23
      %p37 = scmp.eq.s32.totalorder %s15, 1
      %p38 = por %p36, %p37
      %p40 = scmp.ne.s32.totalorder %s23, %s39
      %p41 = scmp.eq.s32.totalorder %s15, 0
      %p42 = por %p40, %p41
      %s44 = sadd.s32 %s43, 1
      %p47 = scmp.eq.s32.totalorder %s9, 1
      %p48 = scmp.ne.s32.totalorder %s43, %s45
      %p49 = scmp.eq.s32.totalorder %s9, 0
      %p50 = por %p48, %p49
      %p51 = scmp.ne.s32.totalorder %s43, %s45
      %p52 = scmp.eq.s32.totalorder %s14, 1
      %p53 = por %p51, %p52
      %p54 = scmp.ne.s32.totalorder %s45, %s46
      %p55 = scmp.eq.s32.totalorder %s14, 0
      %p56 = por %p54, %p55
      %p57 = scmp.ne.s32.totalorder %s45, %s46
      %p58 = scmp.eq.s32.totalorder %s15, 1
      %p59 = por %p57, %p58
      %p61 = scmp.ne.s32.totalorder %s46, %s60
      %p62 = scmp.eq.s32.totalorder %s15, 0
      %p63 = por %p61, %p62
      %s65 = sadd.s32 %s64, 1
      %p68 = scmp.eq.s32.totalorder %s9, 1
      %p69 = scmp.ne.s32.totalorder %s64, %s66
      %p70 = scmp.eq.s32.totalorder %s9, 0
      %p71 = por %p69, %p70
      %p72 = scmp.ne.s32.totalorder %s64, %s66
      %p73 = scmp.eq.s32.totalorder %s14, 1
      %p74 = por %p72, %p73
      %p75 = scmp.ne.s32.totalorder %s66, %s67
      %p76 = scmp.eq.s32.totalorder %s14, 0
      %p77 = por %p75, %p76
      %p78 = scmp.ne.s32.totalorder %s66, %s67
      %p79 = scmp.eq.s32.totalorder %s15, 1
      %p80 = por %p78, %p79
      %p82 = scmp.ne.s32.totalorder %s67, %s81
      %p83 = scmp.eq.s32.totalorder %s15, 0
      %p84 = por %p82, %p83
      %s85 = ssub.s32 %s9, %s16
      %p86 = scmp.eq.s32.totalorder %s85, 0
      %s88 = sadd.s32 %s87, 1
      %s89 = scalar_select %p86, %s87, %s88
      %p92 = pneg %p86
      %p93 = scmp.eq.s32.totalorder %s9, 1
      %p94 = por %p92, %p93
      %p95 = scmp.ne.s32.totalorder %s87, %s90
      %p96 = scmp.eq.s32.totalorder %s9, 0
      %p97 = por %p95, %p96
      %p98 = scmp.ne.s32.totalorder %s87, %s90
      %p99 = scmp.eq.s32.totalorder %s14, 1
      %p100 = por %p98, %p99
      %p101 = scmp.ne.s32.totalorder %s90, %s91
      %p102 = scmp.eq.s32.totalorder %s14, 0
      %p103 = por %p101, %p102
      %p104 = scmp.ne.s32.totalorder %s90, %s91
      %p105 = scmp.eq.s32.totalorder %s15, 1
      %p106 = por %p104, %p105
      %p108 = scmp.ne.s32.totalorder %s91, %s107
      %p109 = scmp.eq.s32.totalorder %s15, 0
      %p110 = por %p108, %p109
      %p111 = scmp.le.s32.totalorder 1, %s9
      %p112 = scmp.lt.s32.totalorder %s9, 3
      %p113 = pnand %p111, %p112
      %p114 = pneg %p113
      // Predicated region
      $region9: #{cnn_cifar100_forward.4} parent=5 // pred_check
        _
      $region10: #{cnn_cifar100_forward.4} parent=5 // pred_check_branch
        %116 = sbr.rel (%p113) target = $region12
      $region11: #{cnn_cifar100_forward.4} parent=5 // pred_region
        %s117 = ssub.s32 %s9, 1
        // Predicated region
        $region13: #{cnn_cifar100_forward.4} parent=11 // pred_check
          %p118 = pneg %p56
        $region14: #{cnn_cifar100_forward.4} parent=11 // pred_check_branch
          %120 = sbr.rel (%p118) target = $region16
        $region15: #{cnn_cifar100_forward.4} parent=11 // pred_region
          _
        $region16: #{cnn_cifar100_forward.4} parent=11 // pred_fallthru
          _
        // Predicated region
        $region17: #{cnn_cifar100_forward.4} parent=11 // pred_check
          %p121 = pneg %p77
        $region18: #{cnn_cifar100_forward.4} parent=11 // pred_check_branch
          %123 = sbr.rel (%p121) target = $region20
        $region19: #{cnn_cifar100_forward.4} parent=11 // pred_region
          _
        $region20: #{cnn_cifar100_forward.4} parent=11 // pred_fallthru
          _
      $region12: #{cnn_cifar100_forward.4} parent=5 // pred_fallthru
        _
      %p124 = scmp.lt.s32.totalorder %s9, 2
      // Predicated region
      $region21: #{cnn_cifar100_forward.4} parent=5 // pred_check
        %p125 = pneg %p124
      $region22: #{cnn_cifar100_forward.4} parent=5 // pred_check_branch
        %127 = sbr.rel (%p125) target = $region24
      $region23: #{cnn_cifar100_forward.4} parent=5 // pred_region
        // Predicated region
        $region25: #{cnn_cifar100_forward.4} parent=23 // pred_check
          %p128 = pneg %p29
        $region26: #{cnn_cifar100_forward.4} parent=23 // pred_check_branch
          %130 = sbr.rel (%p128) target = $region28
        $region27: #{cnn_cifar100_forward.4} parent=23 // pred_region
          %s131 = sand.u32 %s19, 1
          %s132 = sand.u32 %s19, 1
          %s133 = smul.addr %s132, 480
          %s134 = scalar_lea.vmem [#allocation2], %s133
          %s135 = smul.u32 30, %s9
          %s136 = smul.addr %s135, 4
          %s137 = scalar_lea.vmem %s0, %s136
          // Predicated region
          $region29: #{cnn_cifar100_forward.4} parent=27 // pred_check
            _
          $region30: #{cnn_cifar100_forward.4} parent=27 // pred_check_branch
            %139 = sbr.rel (0) target = $region32
          $region31: #{cnn_cifar100_forward.4} parent=27 // pred_region
            // Predicated region
            $region33: #{cnn_cifar100_forward.4} parent=31 // pred_check
              _
            $region34: #{cnn_cifar100_forward.4} parent=31 // pred_check_branch
              %141 = sbr.rel target = $region36
            $region35: #{cnn_cifar100_forward.4} parent=31 // pred_region
              // Predicated region
              $region48: #{cnn_cifar100_forward.4} parent=35 // pred_check
                _
              $region49: #{cnn_cifar100_forward.4} parent=35 // pred_check_branch
                %394 = sbr.rel (0) target = $region51
              $region50: #{cnn_cifar100_forward.4} parent=35 // pred_region
                loop: start=0, step=1, limit=1
                $region52: #{cnn_cifar100_forward.4} parent=50 // loop_pre_header
                  _
                $region53: #{cnn_cifar100_forward.4} parent=50 // loop_header
                  %s396 = sphi 0, %s400
                  %p397 = scmp.ge.s32.totalorder %s396, 1
                  %s401 = sphi %s137, %s137
                  %s402 = sphi %s134, %s134
                $region54: #{cnn_cifar100_forward.4} parent=50 // loop_header_branch
                  %399 = sbr.rel (%p397) target = $region58
                $region55: #{cnn_cifar100_forward.4} parent=50 // loop_body
                  _
                $region56: #{cnn_cifar100_forward.4} parent=50 // loop_footer
                  %s400 = sadd.s32 1, %s396
                $region57: #{cnn_cifar100_forward.4} parent=50 // loop_footer_branch
                  %395 = sbr.rel target = $region53
                $region58: #{cnn_cifar100_forward.4} parent=50 // loop_exit
                  _
                loop: start=0, step=1, limit=1
                $region59: #{cnn_cifar100_forward.4} parent=50 // loop_pre_header
                  _
                $region60: #{cnn_cifar100_forward.4} parent=50 // loop_header
                  %s405 = sphi 0, %s409
                  %p406 = scmp.ge.s32.totalorder %s405, 1
                  %s410 = sphi %s137, %s137
                  %s411 = sphi %s134, %s134
                $region61: #{cnn_cifar100_forward.4} parent=50 // loop_header_branch
                  %408 = sbr.rel (%p406) target = $region65
                $region62: #{cnn_cifar100_forward.4} parent=50 // loop_body
                  %v412 = vld [vmem:[%s410] sm:$0xf]
                  %413 = vst [vmem:[%s411] sm:$0xf] %v412
                  %v414 = vld [vmem:[%s410 + $0x4] sm:$0xf]
                  %415 = vst [vmem:[%s411 + $0x4] sm:$0xf] %v414
                  %v416 = vld [vmem:[%s410 + $0x8] sm:$0xf]
                  %417 = vst [vmem:[%s411 + $0x8] sm:$0xf] %v416
                  %v418 = vld [vmem:[%s410 + $0xc] sm:$0xf]
                  %419 = vst [vmem:[%s411 + $0xc] sm:$0xf] %v418
                  %v420 = vld [vmem:[%s410 + $0x10] sm:$0xf]
                  %421 = vst [vmem:[%s411 + $0x10] sm:$0xf] %v420
                  %v422 = vld [vmem:[%s410 + $0x14] sm:$0xf]
                  %423 = vst [vmem:[%s411 + $0x14] sm:$0xf] %v422
                  %v424 = vld [vmem:[%s410 + $0x18] sm:$0xf]
                  %425 = vst [vmem:[%s411 + $0x18] sm:$0xf] %v424
                  %v426 = vld [vmem:[%s410 + $0x1c] sm:$0xf]
                  %427 = vst [vmem:[%s411 + $0x1c] sm:$0xf] %v426
                  %v428 = vld [vmem:[%s410 + $0x20] sm:$0xf]
                  %429 = vst [vmem:[%s411 + $0x20] sm:$0xf] %v428
                  %v430 = vld [vmem:[%s410 + $0x24] sm:$0xf]
                  %431 = vst [vmem:[%s411 + $0x24] sm:$0xf] %v430
                  %v432 = vld [vmem:[%s410 + $0x28] sm:$0xf]
                  %433 = vst [vmem:[%s411 + $0x28] sm:$0xf] %v432
                  %v434 = vld [vmem:[%s410 + $0x2c] sm:$0xf]
                  %435 = vst [vmem:[%s411 + $0x2c] sm:$0xf] %v434
                  %v436 = vld [vmem:[%s410 + $0x30] sm:$0xf]
                  %437 = vst [vmem:[%s411 + $0x30] sm:$0xf] %v436
                  %v438 = vld [vmem:[%s410 + $0x34] sm:$0xf]
                  %439 = vst [vmem:[%s411 + $0x34] sm:$0xf] %v438
                  %v440 = vld [vmem:[%s410 + $0x38] sm:$0xf]
                  %441 = vst [vmem:[%s411 + $0x38] sm:$0xf] %v440
                  %v442 = vld [vmem:[%s410 + $0x3c] sm:$0xf]
                  %443 = vst [vmem:[%s411 + $0x3c] sm:$0xf] %v442
                  %v444 = vld [vmem:[%s410 + $0x40] sm:$0xf]
                  %445 = vst [vmem:[%s411 + $0x40] sm:$0xf] %v444
                  %v446 = vld [vmem:[%s410 + $0x44] sm:$0xf]
                  %447 = vst [vmem:[%s411 + $0x44] sm:$0xf] %v446
                  %v448 = vld [vmem:[%s410 + $0x48] sm:$0xf]
                  %449 = vst [vmem:[%s411 + $0x48] sm:$0xf] %v448
                  %v450 = vld [vmem:[%s410 + $0x4c] sm:$0xf]
                  %451 = vst [vmem:[%s411 + $0x4c] sm:$0xf] %v450
                  %v452 = vld [vmem:[%s410 + $0x50] sm:$0xf]
                  %453 = vst [vmem:[%s411 + $0x50] sm:$0xf] %v452
                  %v454 = vld [vmem:[%s410 + $0x54] sm:$0xf]
                  %455 = vst [vmem:[%s411 + $0x54] sm:$0xf] %v454
                  %v456 = vld [vmem:[%s410 + $0x58] sm:$0xf]
                  %457 = vst [vmem:[%s411 + $0x58] sm:$0xf] %v456
                  %v458 = vld [vmem:[%s410 + $0x5c] sm:$0xf]
                  %459 = vst [vmem:[%s411 + $0x5c] sm:$0xf] %v458
                  %v460 = vld [vmem:[%s410 + $0x60] sm:$0xf]
                  %461 = vst [vmem:[%s411 + $0x60] sm:$0xf] %v460
                  %v462 = vld [vmem:[%s410 + $0x64] sm:$0xf]
                  %463 = vst [vmem:[%s411 + $0x64] sm:$0xf] %v462
                  %v464 = vld [vmem:[%s410 + $0x68] sm:$0xf]
                  %465 = vst [vmem:[%s411 + $0x68] sm:$0xf] %v464
                  %v466 = vld [vmem:[%s410 + $0x6c] sm:$0xf]
                  %467 = vst [vmem:[%s411 + $0x6c] sm:$0xf] %v466
                  %v468 = vld [vmem:[%s410 + $0x70] sm:$0xf]
                  %469 = vst [vmem:[%s411 + $0x70] sm:$0xf] %v468
                  %v470 = vld [vmem:[%s410 + $0x74] sm:$0xf]
                  %471 = vst [vmem:[%s411 + $0x74] sm:$0xf] %v470
                  %v472 = vld [vmem:[%s410 + $0xf0] sm:$0xf]
                  %473 = vst [vmem:[%s411 + $0x78] sm:$0xf] %v472
                  %v474 = vld [vmem:[%s410 + $0xf4] sm:$0xf]
                  %475 = vst [vmem:[%s411 + $0x7c] sm:$0xf] %v474
                  %v476 = vld [vmem:[%s410 + $0xf8] sm:$0xf]
                  %477 = vst [vmem:[%s411 + $0x80] sm:$0xf] %v476
                  %v478 = vld [vmem:[%s410 + $0xfc] sm:$0xf]
                  %479 = vst [vmem:[%s411 + $0x84] sm:$0xf] %v478
                  %v480 = vld [vmem:[%s410 + $0x100] sm:$0xf]
                  %481 = vst [vmem:[%s411 + $0x88] sm:$0xf] %v480
                  %v482 = vld [vmem:[%s410 + $0x104] sm:$0xf]
                  %483 = vst [vmem:[%s411 + $0x8c] sm:$0xf] %v482
                  %v484 = vld [vmem:[%s410 + $0x108] sm:$0xf]
                  %485 = vst [vmem:[%s411 + $0x90] sm:$0xf] %v484
                  %v486 = vld [vmem:[%s410 + $0x10c] sm:$0xf]
                  %487 = vst [vmem:[%s411 + $0x94] sm:$0xf] %v486
                  %v488 = vld [vmem:[%s410 + $0x110] sm:$0xf]
                  %489 = vst [vmem:[%s411 + $0x98] sm:$0xf] %v488
                  %v490 = vld [vmem:[%s410 + $0x114] sm:$0xf]
                  %491 = vst [vmem:[%s411 + $0x9c] sm:$0xf] %v490
                  %v492 = vld [vmem:[%s410 + $0x118] sm:$0xf]
                  %493 = vst [vmem:[%s411 + $0xa0] sm:$0xf] %v492
                  %v494 = vld [vmem:[%s410 + $0x11c] sm:$0xf]
                  %495 = vst [vmem:[%s411 + $0xa4] sm:$0xf] %v494
                  %v496 = vld [vmem:[%s410 + $0x120] sm:$0xf]
                  %497 = vst [vmem:[%s411 + $0xa8] sm:$0xf] %v496
                  %v498 = vld [vmem:[%s410 + $0x124] sm:$0xf]
                  %499 = vst [vmem:[%s411 + $0xac] sm:$0xf] %v498
                  %v500 = vld [vmem:[%s410 + $0x128] sm:$0xf]
                  %501 = vst [vmem:[%s411 + $0xb0] sm:$0xf] %v500
                  %v502 = vld [vmem:[%s410 + $0x12c] sm:$0xf]
                  %503 = vst [vmem:[%s411 + $0xb4] sm:$0xf] %v502
                  %v504 = vld [vmem:[%s410 + $0x130] sm:$0xf]
                  %505 = vst [vmem:[%s411 + $0xb8] sm:$0xf] %v504
                  %v506 = vld [vmem:[%s410 + $0x134] sm:$0xf]
                  %507 = vst [vmem:[%s411 + $0xbc] sm:$0xf] %v506
                  %v508 = vld [vmem:[%s410 + $0x138] sm:$0xf]
                  %509 = vst [vmem:[%s411 + $0xc0] sm:$0xf] %v508
                  %v510 = vld [vmem:[%s410 + $0x13c] sm:$0xf]
                  %511 = vst [vmem:[%s411 + $0xc4] sm:$0xf] %v510
                  %v512 = vld [vmem:[%s410 + $0x140] sm:$0xf]
                  %513 = vst [vmem:[%s411 + $0xc8] sm:$0xf] %v512
                  %v514 = vld [vmem:[%s410 + $0x144] sm:$0xf]
                  %515 = vst [vmem:[%s411 + $0xcc] sm:$0xf] %v514
                  %v516 = vld [vmem:[%s410 + $0x148] sm:$0xf]
                  %517 = vst [vmem:[%s411 + $0xd0] sm:$0xf] %v516
                  %v518 = vld [vmem:[%s410 + $0x14c] sm:$0xf]
                  %519 = vst [vmem:[%s411 + $0xd4] sm:$0xf] %v518
                  %v520 = vld [vmem:[%s410 + $0x150] sm:$0xf]
                  %521 = vst [vmem:[%s411 + $0xd8] sm:$0xf] %v520
                  %v522 = vld [vmem:[%s410 + $0x154] sm:$0xf]
                  %523 = vst [vmem:[%s411 + $0xdc] sm:$0xf] %v522
                  %v524 = vld [vmem:[%s410 + $0x158] sm:$0xf]
                  %525 = vst [vmem:[%s411 + $0xe0] sm:$0xf] %v524
                  %v526 = vld [vmem:[%s410 + $0x15c] sm:$0xf]
                  %527 = vst [vmem:[%s411 + $0xe4] sm:$0xf] %v526
                  %v528 = vld [vmem:[%s410 + $0x160] sm:$0xf]
                  %529 = vst [vmem:[%s411 + $0xe8] sm:$0xf] %v528
                  %v530 = vld [vmem:[%s410 + $0x164] sm:$0xf]
                  %531 = vst [vmem:[%s411 + $0xec] sm:$0xf] %v530
                  %v532 = vld [vmem:[%s410 + $0x1e0] sm:$0xf]
                  %533 = vst [vmem:[%s411 + $0xf0] sm:$0xf] %v532
                  %v534 = vld [vmem:[%s410 + $0x1e4] sm:$0xf]
                  %535 = vst [vmem:[%s411 + $0xf4] sm:$0xf] %v534
                  %v536 = vld [vmem:[%s410 + $0x1e8] sm:$0xf]
                  %537 = vst [vmem:[%s411 + $0xf8] sm:$0xf] %v536
                  %v538 = vld [vmem:[%s410 + $0x1ec] sm:$0xf]
                  %539 = vst [vmem:[%s411 + $0xfc] sm:$0xf] %v538
                  %v540 = vld [vmem:[%s410 + $0x1f0] sm:$0xf]
                  %541 = vst [vmem:[%s411 + $0x100] sm:$0xf] %v540
                  %v542 = vld [vmem:[%s410 + $0x1f4] sm:$0xf]
                  %543 = vst [vmem:[%s411 + $0x104] sm:$0xf] %v542
                  %v544 = vld [vmem:[%s410 + $0x1f8] sm:$0xf]
                  %545 = vst [vmem:[%s411 + $0x108] sm:$0xf] %v544
                  %v546 = vld [vmem:[%s410 + $0x1fc] sm:$0xf]
                  %547 = vst [vmem:[%s411 + $0x10c] sm:$0xf] %v546
                  %v548 = vld [vmem:[%s410 + $0x200] sm:$0xf]
                  %549 = vst [vmem:[%s411 + $0x110] sm:$0xf] %v548
                  %v550 = vld [vmem:[%s410 + $0x204] sm:$0xf]
                  %551 = vst [vmem:[%s411 + $0x114] sm:$0xf] %v550
                  %v552 = vld [vmem:[%s410 + $0x208] sm:$0xf]
                  %553 = vst [vmem:[%s411 + $0x118] sm:$0xf] %v552
                  %v554 = vld [vmem:[%s410 + $0x20c] sm:$0xf]
                  %555 = vst [vmem:[%s411 + $0x11c] sm:$0xf] %v554
                  %v556 = vld [vmem:[%s410 + $0x210] sm:$0xf]
                  %557 = vst [vmem:[%s411 + $0x120] sm:$0xf] %v556
                  %v558 = vld [vmem:[%s410 + $0x214] sm:$0xf]
                  %559 = vst [vmem:[%s411 + $0x124] sm:$0xf] %v558
                  %v560 = vld [vmem:[%s410 + $0x218] sm:$0xf]
                  %561 = vst [vmem:[%s411 + $0x128] sm:$0xf] %v560
                  %v562 = vld [vmem:[%s410 + $0x21c] sm:$0xf]
                  %563 = vst [vmem:[%s411 + $0x12c] sm:$0xf] %v562
                  %v564 = vld [vmem:[%s410 + $0x220] sm:$0xf]
                  %565 = vst [vmem:[%s411 + $0x130] sm:$0xf] %v564
                  %v566 = vld [vmem:[%s410 + $0x224] sm:$0xf]
                  %567 = vst [vmem:[%s411 + $0x134] sm:$0xf] %v566
                  %v568 = vld [vmem:[%s410 + $0x228] sm:$0xf]
                  %569 = vst [vmem:[%s411 + $0x138] sm:$0xf] %v568
                  %v570 = vld [vmem:[%s410 + $0x22c] sm:$0xf]
                  %571 = vst [vmem:[%s411 + $0x13c] sm:$0xf] %v570
                  %v572 = vld [vmem:[%s410 + $0x230] sm:$0xf]
                  %573 = vst [vmem:[%s411 + $0x140] sm:$0xf] %v572
                  %v574 = vld [vmem:[%s410 + $0x234] sm:$0xf]
                  %575 = vst [vmem:[%s411 + $0x144] sm:$0xf] %v574
                  %v576 = vld [vmem:[%s410 + $0x238] sm:$0xf]
                  %577 = vst [vmem:[%s411 + $0x148] sm:$0xf] %v576
                  %v578 = vld [vmem:[%s410 + $0x23c] sm:$0xf]
                  %579 = vst [vmem:[%s411 + $0x14c] sm:$0xf] %v578
                  %v580 = vld [vmem:[%s410 + $0x240] sm:$0xf]
                  %581 = vst [vmem:[%s411 + $0x150] sm:$0xf] %v580
                  %v582 = vld [vmem:[%s410 + $0x244] sm:$0xf]
                  %583 = vst [vmem:[%s411 + $0x154] sm:$0xf] %v582
                  %v584 = vld [vmem:[%s410 + $0x248] sm:$0xf]
                  %585 = vst [vmem:[%s411 + $0x158] sm:$0xf] %v584
                  %v586 = vld [vmem:[%s410 + $0x24c] sm:$0xf]
                  %587 = vst [vmem:[%s411 + $0x15c] sm:$0xf] %v586
                  %v588 = vld [vmem:[%s410 + $0x250] sm:$0xf]
                  %589 = vst [vmem:[%s411 + $0x160] sm:$0xf] %v588
                  %v590 = vld [vmem:[%s410 + $0x254] sm:$0xf]
                  %591 = vst [vmem:[%s411 + $0x164] sm:$0xf] %v590
                  %v592 = vld [vmem:[%s410 + $0x2d0] sm:$0xf]
                  %593 = vst [vmem:[%s411 + $0x168] sm:$0xf] %v592
                  %v594 = vld [vmem:[%s410 + $0x2d4] sm:$0xf]
                  %595 = vst [vmem:[%s411 + $0x16c] sm:$0xf] %v594
                  %v596 = vld [vmem:[%s410 + $0x2d8] sm:$0xf]
                  %597 = vst [vmem:[%s411 + $0x170] sm:$0xf] %v596
                  %v598 = vld [vmem:[%s410 + $0x2dc] sm:$0xf]
                  %599 = vst [vmem:[%s411 + $0x174] sm:$0xf] %v598
                  %v600 = vld [vmem:[%s410 + $0x2e0] sm:$0xf]
                  %601 = vst [vmem:[%s411 + $0x178] sm:$0xf] %v600
                  %v602 = vld [vmem:[%s410 + $0x2e4] sm:$0xf]
                  %603 = vst [vmem:[%s411 + $0x17c] sm:$0xf] %v602
                  %v604 = vld [vmem:[%s410 + $0x2e8] sm:$0xf]
                  %605 = vst [vmem:[%s411 + $0x180] sm:$0xf] %v604
                  %v606 = vld [vmem:[%s410 + $0x2ec] sm:$0xf]
                  %607 = vst [vmem:[%s411 + $0x184] sm:$0xf] %v606
                  %v608 = vld [vmem:[%s410 + $0x2f0] sm:$0xf]
                  %609 = vst [vmem:[%s411 + $0x188] sm:$0xf] %v608
                  %v610 = vld [vmem:[%s410 + $0x2f4] sm:$0xf]
                  %611 = vst [vmem:[%s411 + $0x18c] sm:$0xf] %v610
                  %v612 = vld [vmem:[%s410 + $0x2f8] sm:$0xf]
                  %613 = vst [vmem:[%s411 + $0x190] sm:$0xf] %v612
                  %v614 = vld [vmem:[%s410 + $0x2fc] sm:$0xf]
                  %615 = vst [vmem:[%s411 + $0x194] sm:$0xf] %v614
                  %v616 = vld [vmem:[%s410 + $0x300] sm:$0xf]
                  %617 = vst [vmem:[%s411 + $0x198] sm:$0xf] %v616
                  %v618 = vld [vmem:[%s410 + $0x304] sm:$0xf]
                  %619 = vst [vmem:[%s411 + $0x19c] sm:$0xf] %v618
                  %v620 = vld [vmem:[%s410 + $0x308] sm:$0xf]
                  %621 = vst [vmem:[%s411 + $0x1a0] sm:$0xf] %v620
                  %v622 = vld [vmem:[%s410 + $0x30c] sm:$0xf]
                  %623 = vst [vmem:[%s411 + $0x1a4] sm:$0xf] %v622
                  %v624 = vld [vmem:[%s410 + $0x310] sm:$0xf]
                  %625 = vst [vmem:[%s411 + $0x1a8] sm:$0xf] %v624
                  %v626 = vld [vmem:[%s410 + $0x314] sm:$0xf]
                  %627 = vst [vmem:[%s411 + $0x1ac] sm:$0xf] %v626
                  %v628 = vld [vmem:[%s410 + $0x318] sm:$0xf]
                  %629 = vst [vmem:[%s411 + $0x1b0] sm:$0xf] %v628
                  %v630 = vld [vmem:[%s410 + $0x31c] sm:$0xf]
                  %631 = vst [vmem:[%s411 + $0x1b4] sm:$0xf] %v630
                  %v632 = vld [vmem:[%s410 + $0x320] sm:$0xf]
                  %633 = vst [vmem:[%s411 + $0x1b8] sm:$0xf] %v632
                  %v634 = vld [vmem:[%s410 + $0x324] sm:$0xf]
                  %635 = vst [vmem:[%s411 + $0x1bc] sm:$0xf] %v634
                  %v636 = vld [vmem:[%s410 + $0x328] sm:$0xf]
                  %637 = vst [vmem:[%s411 + $0x1c0] sm:$0xf] %v636
                  %v638 = vld [vmem:[%s410 + $0x32c] sm:$0xf]
                  %639 = vst [vmem:[%s411 + $0x1c4] sm:$0xf] %v638
                  %v640 = vld [vmem:[%s410 + $0x330] sm:$0xf]
                  %641 = vst [vmem:[%s411 + $0x1c8] sm:$0xf] %v640
                  %v642 = vld [vmem:[%s410 + $0x334] sm:$0xf]
                  %643 = vst [vmem:[%s411 + $0x1cc] sm:$0xf] %v642
                  %v644 = vld [vmem:[%s410 + $0x338] sm:$0xf]
                  %645 = vst [vmem:[%s411 + $0x1d0] sm:$0xf] %v644
                  %v646 = vld [vmem:[%s410 + $0x33c] sm:$0xf]
                  %647 = vst [vmem:[%s411 + $0x1d4] sm:$0xf] %v646
                  %v648 = vld [vmem:[%s410 + $0x340] sm:$0xf]
                  %649 = vst [vmem:[%s411 + $0x1d8] sm:$0xf] %v648
                  %v650 = vld [vmem:[%s410 + $0x344] sm:$0xf]
                  %651 = vst [vmem:[%s411 + $0x1dc] sm:$0xf] %v650
                $region63: #{cnn_cifar100_forward.4} parent=50 // loop_footer
                  %s409 = sadd.s32 1, %s405
                $region64: #{cnn_cifar100_forward.4} parent=50 // loop_footer_branch
                  %404 = sbr.rel target = $region60
                $region65: #{cnn_cifar100_forward.4} parent=50 // loop_exit
                  _
              $region51: #{cnn_cifar100_forward.4} parent=35 // pred_fallthru
                _
            $region36: #{cnn_cifar100_forward.4} parent=31 // pred_fallthru
              _
            // Predicated region
            $region37: #{cnn_cifar100_forward.4} parent=31 // pred_check
              _
            $region38: #{cnn_cifar100_forward.4} parent=31 // pred_check_branch
              %143 = sbr.rel (0) target = $region40
            $region39: #{cnn_cifar100_forward.4} parent=31 // pred_region
              loop: start=0, step=1, limit=1
              $region41: #{cnn_cifar100_forward.4} parent=39 // loop_pre_header
                _
              $region42: #{cnn_cifar100_forward.4} parent=39 // loop_header
                %s146 = sphi 0, %s150
                %p147 = scmp.ge.s32.totalorder %s146, 1
                %s151 = sphi %s137, %s137
                %s152 = sphi %s134, %s134
              $region43: #{cnn_cifar100_forward.4} parent=39 // loop_header_branch
                %149 = sbr.rel (%p147) target = $region47
              $region44: #{cnn_cifar100_forward.4} parent=39 // loop_body
                %v153 = vld [vmem:[%s151] sm:$0xf]
                %154 = vst [vmem:[%s152] sm:$0xf] %v153
                %v155 = vld [vmem:[%s151 + $0x4] sm:$0xf]
                %156 = vst [vmem:[%s152 + $0x4] sm:$0xf] %v155
                %v157 = vld [vmem:[%s151 + $0x8] sm:$0xf]
                %158 = vst [vmem:[%s152 + $0x8] sm:$0xf] %v157
                %v159 = vld [vmem:[%s151 + $0xc] sm:$0xf]
                %160 = vst [vmem:[%s152 + $0xc] sm:$0xf] %v159
                %v161 = vld [vmem:[%s151 + $0x10] sm:$0xf]
                %162 = vst [vmem:[%s152 + $0x10] sm:$0xf] %v161
                %v163 = vld [vmem:[%s151 + $0x14] sm:$0xf]
                %164 = vst [vmem:[%s152 + $0x14] sm:$0xf] %v163
                %v165 = vld [vmem:[%s151 + $0x18] sm:$0xf]
                %166 = vst [vmem:[%s152 + $0x18] sm:$0xf] %v165
                %v167 = vld [vmem:[%s151 + $0x1c] sm:$0xf]
                %168 = vst [vmem:[%s152 + $0x1c] sm:$0xf] %v167
                %v169 = vld [vmem:[%s151 + $0x20] sm:$0xf]
                %170 = vst [vmem:[%s152 + $0x20] sm:$0xf] %v169
                %v171 = vld [vmem:[%s151 + $0x24] sm:$0xf]
                %172 = vst [vmem:[%s152 + $0x24] sm:$0xf] %v171
                %v173 = vld [vmem:[%s151 + $0x28] sm:$0xf]
                %174 = vst [vmem:[%s152 + $0x28] sm:$0xf] %v173
                %v175 = vld [vmem:[%s151 + $0x2c] sm:$0xf]
                %176 = vst [vmem:[%s152 + $0x2c] sm:$0xf] %v175
                %v177 = vld [vmem:[%s151 + $0x30] sm:$0xf]
                %178 = vst [vmem:[%s152 + $0x30] sm:$0xf] %v177
                %v179 = vld [vmem:[%s151 + $0x34] sm:$0xf]
                %180 = vst [vmem:[%s152 + $0x34] sm:$0xf] %v179
                %v181 = vld [vmem:[%s151 + $0x38] sm:$0xf]
                %182 = vst [vmem:[%s152 + $0x38] sm:$0xf] %v181
                %v183 = vld [vmem:[%s151 + $0x3c] sm:$0xf]
                %184 = vst [vmem:[%s152 + $0x3c] sm:$0xf] %v183
                %v185 = vld [vmem:[%s151 + $0x40] sm:$0xf]
                %186 = vst [vmem:[%s152 + $0x40] sm:$0xf] %v185
                %v187 = vld [vmem:[%s151 + $0x44] sm:$0xf]
                %188 = vst [vmem:[%s152 + $0x44] sm:$0xf] %v187
                %v189 = vld [vmem:[%s151 + $0x48] sm:$0xf]
                %190 = vst [vmem:[%s152 + $0x48] sm:$0xf] %v189
                %v191 = vld [vmem:[%s151 + $0x4c] sm:$0xf]
                %192 = vst [vmem:[%s152 + $0x4c] sm:$0xf] %v191
                %v193 = vld [vmem:[%s151 + $0x50] sm:$0xf]
                %194 = vst [vmem:[%s152 + $0x50] sm:$0xf] %v193
                %v195 = vld [vmem:[%s151 + $0x54] sm:$0xf]
                %196 = vst [vmem:[%s152 + $0x54] sm:$0xf] %v195
                %v197 = vld [vmem:[%s151 + $0x58] sm:$0xf]
                %198 = vst [vmem:[%s152 + $0x58] sm:$0xf] %v197
                %v199 = vld [vmem:[%s151 + $0x5c] sm:$0xf]
                %200 = vst [vmem:[%s152 + $0x5c] sm:$0xf] %v199
                %v201 = vld [vmem:[%s151 + $0x60] sm:$0xf]
                %202 = vst [vmem:[%s152 + $0x60] sm:$0xf] %v201
                %v203 = vld [vmem:[%s151 + $0x64] sm:$0xf]
                %204 = vst [vmem:[%s152 + $0x64] sm:$0xf] %v203
                %v205 = vld [vmem:[%s151 + $0x68] sm:$0xf]
                %206 = vst [vmem:[%s152 + $0x68] sm:$0xf] %v205
                %v207 = vld [vmem:[%s151 + $0x6c] sm:$0xf]
                %208 = vst [vmem:[%s152 + $0x6c] sm:$0xf] %v207
                %v209 = vld [vmem:[%s151 + $0x70] sm:$0xf]
                %210 = vst [vmem:[%s152 + $0x70] sm:$0xf] %v209
                %v211 = vld [vmem:[%s151 + $0x74] sm:$0xf]
                %212 = vst [vmem:[%s152 + $0x74] sm:$0xf] %v211
                %v213 = vld [vmem:[%s151 + $0xf0] sm:$0xf]
                %214 = vst [vmem:[%s152 + $0x78] sm:$0xf] %v213
                %v215 = vld [vmem:[%s151 + $0xf4] sm:$0xf]
                %216 = vst [vmem:[%s152 + $0x7c] sm:$0xf] %v215
                %v217 = vld [vmem:[%s151 + $0xf8] sm:$0xf]
                %218 = vst [vmem:[%s152 + $0x80] sm:$0xf] %v217
                %v219 = vld [vmem:[%s151 + $0xfc] sm:$0xf]
                %220 = vst [vmem:[%s152 + $0x84] sm:$0xf] %v219
                %v221 = vld [vmem:[%s151 + $0x100] sm:$0xf]
                %222 = vst [vmem:[%s152 + $0x88] sm:$0xf] %v221
                %v223 = vld [vmem:[%s151 + $0x104] sm:$0xf]
                %224 = vst [vmem:[%s152 + $0x8c] sm:$0xf] %v223
                %v225 = vld [vmem:[%s151 + $0x108] sm:$0xf]
                %226 = vst [vmem:[%s152 + $0x90] sm:$0xf] %v225
                %v227 = vld [vmem:[%s151 + $0x10c] sm:$0xf]
                %228 = vst [vmem:[%s152 + $0x94] sm:$0xf] %v227
                %v229 = vld [vmem:[%s151 + $0x110] sm:$0xf]
                %230 = vst [vmem:[%s152 + $0x98] sm:$0xf] %v229
                %v231 = vld [vmem:[%s151 + $0x114] sm:$0xf]
                %232 = vst [vmem:[%s152 + $0x9c] sm:$0xf] %v231
                %v233 = vld [vmem:[%s151 + $0x118] sm:$0xf]
                %234 = vst [vmem:[%s152 + $0xa0] sm:$0xf] %v233
                %v235 = vld [vmem:[%s151 + $0x11c] sm:$0xf]
                %236 = vst [vmem:[%s152 + $0xa4] sm:$0xf] %v235
                %v237 = vld [vmem:[%s151 + $0x120] sm:$0xf]
                %238 = vst [vmem:[%s152 + $0xa8] sm:$0xf] %v237
                %v239 = vld [vmem:[%s151 + $0x124] sm:$0xf]
                %240 = vst [vmem:[%s152 + $0xac] sm:$0xf] %v239
                %v241 = vld [vmem:[%s151 + $0x128] sm:$0xf]
                %242 = vst [vmem:[%s152 + $0xb0] sm:$0xf] %v241
                %v243 = vld [vmem:[%s151 + $0x12c] sm:$0xf]
                %244 = vst [vmem:[%s152 + $0xb4] sm:$0xf] %v243
                %v245 = vld [vmem:[%s151 + $0x130] sm:$0xf]
                %246 = vst [vmem:[%s152 + $0xb8] sm:$0xf] %v245
                %v247 = vld [vmem:[%s151 + $0x134] sm:$0xf]
                %248 = vst [vmem:[%s152 + $0xbc] sm:$0xf] %v247
                %v249 = vld [vmem:[%s151 + $0x138] sm:$0xf]
                %250 = vst [vmem:[%s152 + $0xc0] sm:$0xf] %v249
                %v251 = vld [vmem:[%s151 + $0x13c] sm:$0xf]
                %252 = vst [vmem:[%s152 + $0xc4] sm:$0xf] %v251
                %v253 = vld [vmem:[%s151 + $0x140] sm:$0xf]
                %254 = vst [vmem:[%s152 + $0xc8] sm:$0xf] %v253
                %v255 = vld [vmem:[%s151 + $0x144] sm:$0xf]
                %256 = vst [vmem:[%s152 + $0xcc] sm:$0xf] %v255
                %v257 = vld [vmem:[%s151 + $0x148] sm:$0xf]
                %258 = vst [vmem:[%s152 + $0xd0] sm:$0xf] %v257
                %v259 = vld [vmem:[%s151 + $0x14c] sm:$0xf]
                %260 = vst [vmem:[%s152 + $0xd4] sm:$0xf] %v259
                %v261 = vld [vmem:[%s151 + $0x150] sm:$0xf]
                %262 = vst [vmem:[%s152 + $0xd8] sm:$0xf] %v261
                %v263 = vld [vmem:[%s151 + $0x154] sm:$0xf]
                %264 = vst [vmem:[%s152 + $0xdc] sm:$0xf] %v263
                %v265 = vld [vmem:[%s151 + $0x158] sm:$0xf]
                %266 = vst [vmem:[%s152 + $0xe0] sm:$0xf] %v265
                %v267 = vld [vmem:[%s151 + $0x15c] sm:$0xf]
                %268 = vst [vmem:[%s152 + $0xe4] sm:$0xf] %v267
                %v269 = vld [vmem:[%s151 + $0x160] sm:$0xf]
                %270 = vst [vmem:[%s152 + $0xe8] sm:$0xf] %v269
                %v271 = vld [vmem:[%s151 + $0x164] sm:$0xf]
                %272 = vst [vmem:[%s152 + $0xec] sm:$0xf] %v271
                %v273 = vld [vmem:[%s151 + $0x1e0] sm:$0xf]
                %274 = vst [vmem:[%s152 + $0xf0] sm:$0xf] %v273
                %v275 = vld [vmem:[%s151 + $0x1e4] sm:$0xf]
                %276 = vst [vmem:[%s152 + $0xf4] sm:$0xf] %v275
                %v277 = vld [vmem:[%s151 + $0x1e8] sm:$0xf]
                %278 = vst [vmem:[%s152 + $0xf8] sm:$0xf] %v277
                %v279 = vld [vmem:[%s151 + $0x1ec] sm:$0xf]
                %280 = vst [vmem:[%s152 + $0xfc] sm:$0xf] %v279
                %v281 = vld [vmem:[%s151 + $0x1f0] sm:$0xf]
                %282 = vst [vmem:[%s152 + $0x100] sm:$0xf] %v281
                %v283 = vld [vmem:[%s151 + $0x1f4] sm:$0xf]
                %284 = vst [vmem:[%s152 + $0x104] sm:$0xf] %v283
                %v285 = vld [vmem:[%s151 + $0x1f8] sm:$0xf]
                %286 = vst [vmem:[%s152 + $0x108] sm:$0xf] %v285
                %v287 = vld [vmem:[%s151 + $0x1fc] sm:$0xf]
                %288 = vst [vmem:[%s152 + $0x10c] sm:$0xf] %v287
                %v289 = vld [vmem:[%s151 + $0x200] sm:$0xf]
                %290 = vst [vmem:[%s152 + $0x110] sm:$0xf] %v289
                %v291 = vld [vmem:[%s151 + $0x204] sm:$0xf]
                %292 = vst [vmem:[%s152 + $0x114] sm:$0xf] %v291
                %v293 = vld [vmem:[%s151 + $0x208] sm:$0xf]
                %294 = vst [vmem:[%s152 + $0x118] sm:$0xf] %v293
                %v295 = vld [vmem:[%s151 + $0x20c] sm:$0xf]
                %296 = vst [vmem:[%s152 + $0x11c] sm:$0xf] %v295
                %v297 = vld [vmem:[%s151 + $0x210] sm:$0xf]
                %298 = vst [vmem:[%s152 + $0x120] sm:$0xf] %v297
                %v299 = vld [vmem:[%s151 + $0x214] sm:$0xf]
                %300 = vst [vmem:[%s152 + $0x124] sm:$0xf] %v299
                %v301 = vld [vmem:[%s151 + $0x218] sm:$0xf]
                %302 = vst [vmem:[%s152 + $0x128] sm:$0xf] %v301
                %v303 = vld [vmem:[%s151 + $0x21c] sm:$0xf]
                %304 = vst [vmem:[%s152 + $0x12c] sm:$0xf] %v303
                %v305 = vld [vmem:[%s151 + $0x220] sm:$0xf]
                %306 = vst [vmem:[%s152 + $0x130] sm:$0xf] %v305
                %v307 = vld [vmem:[%s151 + $0x224] sm:$0xf]
                %308 = vst [vmem:[%s152 + $0x134] sm:$0xf] %v307
                %v309 = vld [vmem:[%s151 + $0x228] sm:$0xf]
                %310 = vst [vmem:[%s152 + $0x138] sm:$0xf] %v309
                %v311 = vld [vmem:[%s151 + $0x22c] sm:$0xf]
                %312 = vst [vmem:[%s152 + $0x13c] sm:$0xf] %v311
                %v313 = vld [vmem:[%s151 + $0x230] sm:$0xf]
                %314 = vst [vmem:[%s152 + $0x140] sm:$0xf] %v313
                %v315 = vld [vmem:[%s151 + $0x234] sm:$0xf]
                %316 = vst [vmem:[%s152 + $0x144] sm:$0xf] %v315
                %v317 = vld [vmem:[%s151 + $0x238] sm:$0xf]
                %318 = vst [vmem:[%s152 + $0x148] sm:$0xf] %v317
                %v319 = vld [vmem:[%s151 + $0x23c] sm:$0xf]
                %320 = vst [vmem:[%s152 + $0x14c] sm:$0xf] %v319
                %v321 = vld [vmem:[%s151 + $0x240] sm:$0xf]
                %322 = vst [vmem:[%s152 + $0x150] sm:$0xf] %v321
                %v323 = vld [vmem:[%s151 + $0x244] sm:$0xf]
                %324 = vst [vmem:[%s152 + $0x154] sm:$0xf] %v323
                %v325 = vld [vmem:[%s151 + $0x248] sm:$0xf]
                %326 = vst [vmem:[%s152 + $0x158] sm:$0xf] %v325
                %v327 = vld [vmem:[%s151 + $0x24c] sm:$0xf]
                %328 = vst [vmem:[%s152 + $0x15c] sm:$0xf] %v327
                %v329 = vld [vmem:[%s151 + $0x250] sm:$0xf]
                %330 = vst [vmem:[%s152 + $0x160] sm:$0xf] %v329
                %v331 = vld [vmem:[%s151 + $0x254] sm:$0xf]
                %332 = vst [vmem:[%s152 + $0x164] sm:$0xf] %v331
                %v333 = vld [vmem:[%s151 + $0x2d0] sm:$0xf]
                %334 = vst [vmem:[%s152 + $0x168] sm:$0xf] %v333
                %v335 = vld [vmem:[%s151 + $0x2d4] sm:$0xf]
                %336 = vst [vmem:[%s152 + $0x16c] sm:$0xf] %v335
                %v337 = vld [vmem:[%s151 + $0x2d8] sm:$0xf]
                %338 = vst [vmem:[%s152 + $0x170] sm:$0xf] %v337
                %v339 = vld [vmem:[%s151 + $0x2dc] sm:$0xf]
                %340 = vst [vmem:[%s152 + $0x174] sm:$0xf] %v339
                %v341 = vld [vmem:[%s151 + $0x2e0] sm:$0xf]
                %342 = vst [vmem:[%s152 + $0x178] sm:$0xf] %v341
                %v343 = vld [vmem:[%s151 + $0x2e4] sm:$0xf]
                %344 = vst [vmem:[%s152 + $0x17c] sm:$0xf] %v343
                %v345 = vld [vmem:[%s151 + $0x2e8] sm:$0xf]
                %346 = vst [vmem:[%s152 + $0x180] sm:$0xf] %v345
                %v347 = vld [vmem:[%s151 + $0x2ec] sm:$0xf]
                %348 = vst [vmem:[%s152 + $0x184] sm:$0xf] %v347
                %v349 = vld [vmem:[%s151 + $0x2f0] sm:$0xf]
                %350 = vst [vmem:[%s152 + $0x188] sm:$0xf] %v349
                %v351 = vld [vmem:[%s151 + $0x2f4] sm:$0xf]
                %352 = vst [vmem:[%s152 + $0x18c] sm:$0xf] %v351
                %v353 = vld [vmem:[%s151 + $0x2f8] sm:$0xf]
                %354 = vst [vmem:[%s152 + $0x190] sm:$0xf] %v353
                %v355 = vld [vmem:[%s151 + $0x2fc] sm:$0xf]
                %356 = vst [vmem:[%s152 + $0x194] sm:$0xf] %v355
                %v357 = vld [vmem:[%s151 + $0x300] sm:$0xf]
                %358 = vst [vmem:[%s152 + $0x198] sm:$0xf] %v357
                %v359 = vld [vmem:[%s151 + $0x304] sm:$0xf]
                %360 = vst [vmem:[%s152 + $0x19c] sm:$0xf] %v359
                %v361 = vld [vmem:[%s151 + $0x308] sm:$0xf]
                %362 = vst [vmem:[%s152 + $0x1a0] sm:$0xf] %v361
                %v363 = vld [vmem:[%s151 + $0x30c] sm:$0xf]
                %364 = vst [vmem:[%s152 + $0x1a4] sm:$0xf] %v363
                %v365 = vld [vmem:[%s151 + $0x310] sm:$0xf]
                %366 = vst [vmem:[%s152 + $0x1a8] sm:$0xf] %v365
                %v367 = vld [vmem:[%s151 + $0x314] sm:$0xf]
                %368 = vst [vmem:[%s152 + $0x1ac] sm:$0xf] %v367
                %v369 = vld [vmem:[%s151 + $0x318] sm:$0xf]
                %370 = vst [vmem:[%s152 + $0x1b0] sm:$0xf] %v369
                %v371 = vld [vmem:[%s151 + $0x31c] sm:$0xf]
                %372 = vst [vmem:[%s152 + $0x1b4] sm:$0xf] %v371
                %v373 = vld [vmem:[%s151 + $0x320] sm:$0xf]
                %374 = vst [vmem:[%s152 + $0x1b8] sm:$0xf] %v373
                %v375 = vld [vmem:[%s151 + $0x324] sm:$0xf]
                %376 = vst [vmem:[%s152 + $0x1bc] sm:$0xf] %v375
                %v377 = vld [vmem:[%s151 + $0x328] sm:$0xf]
                %378 = vst [vmem:[%s152 + $0x1c0] sm:$0xf] %v377
                %v379 = vld [vmem:[%s151 + $0x32c] sm:$0xf]
                %380 = vst [vmem:[%s152 + $0x1c4] sm:$0xf] %v379
                %v381 = vld [vmem:[%s151 + $0x330] sm:$0xf]
                %382 = vst [vmem:[%s152 + $0x1c8] sm:$0xf] %v381
                %v383 = vld [vmem:[%s151 + $0x334] sm:$0xf]
                %384 = vst [vmem:[%s152 + $0x1cc] sm:$0xf] %v383
                %v385 = vld [vmem:[%s151 + $0x338] sm:$0xf]
                %386 = vst [vmem:[%s152 + $0x1d0] sm:$0xf] %v385
                %v387 = vld [vmem:[%s151 + $0x33c] sm:$0xf]
                %388 = vst [vmem:[%s152 + $0x1d4] sm:$0xf] %v387
                %v389 = vld [vmem:[%s151 + $0x340] sm:$0xf]
                %390 = vst [vmem:[%s152 + $0x1d8] sm:$0xf] %v389
                %v391 = vld [vmem:[%s151 + $0x344] sm:$0xf]
                %392 = vst [vmem:[%s152 + $0x1dc] sm:$0xf] %v391
              $region45: #{cnn_cifar100_forward.4} parent=39 // loop_footer
                %s150 = sadd.s32 1, %s146
              $region46: #{cnn_cifar100_forward.4} parent=39 // loop_footer_branch
                %145 = sbr.rel target = $region42
              $region47: #{cnn_cifar100_forward.4} parent=39 // loop_exit
                _
            $region40: #{cnn_cifar100_forward.4} parent=31 // pred_fallthru
              _
          $region32: #{cnn_cifar100_forward.4} parent=27 // pred_fallthru
            _
          %652 = vnop
        $region28: #{cnn_cifar100_forward.4} parent=23 // pred_fallthru
          _
      $region24: #{cnn_cifar100_forward.4} parent=5 // pred_fallthru
        _
      %p653 = scmp.le.s32.totalorder 1, %s9
      %p654 = scmp.lt.s32.totalorder %s9, 3
      %p655 = pnand %p653, %p654
      %p656 = pneg %p655
      // Predicated region
      $region66: #{cnn_cifar100_forward.4} parent=5 // pred_check
        _
      $region67: #{cnn_cifar100_forward.4} parent=5 // pred_check_branch
        %658 = sbr.rel (%p655) target = $region69
      $region68: #{cnn_cifar100_forward.4} parent=5 // pred_region
        %s659 = ssub.s32 %s9, 1
        %s660 = sand.u32 %s22, 1
        %s661 = sand.u32 %s22, 1
        %s662 = smul.addr %s661, 480
        %s663 = scalar_lea.vmem [#allocation2], %s662
        // Predicated region
        $region70: #{cnn_cifar100_forward.4} parent=68 // pred_check
          %p664 = pneg %p35
        $region71: #{cnn_cifar100_forward.4} parent=68 // pred_check_branch
          %666 = sbr.rel (%p664) target = $region73
        $region72: #{cnn_cifar100_forward.4} parent=68 // pred_region
          _
        $region73: #{cnn_cifar100_forward.4} parent=68 // pred_fallthru
          _
        %s667 = sand.u32 %s22, 1
        %s668 = sand.u32 %s22, 1
        %s669 = smul.addr %s668, 480
        %s670 = scalar_lea.vmem [#allocation2], %s669
        %p671 = pneg %p35
        %p672 = pneg %p32
        %p673 = pneg %p56
        %p674 = pneg %p53
        %p675 = pneg %p77
        %p676 = pneg %p74
        %p677 = pneg %p103
        %p678 = pneg %p100
        %s679 = smul.u32 30, %s14
        %p680 = scmp.lt.s32.totalorder %s679, 59
        %s681 = scalar_select %p680, %s679, 59
        %s682 = smul.addr %s681, 4
        %s683 = scalar_lea.vmem %s3, %s682
        %s684 = smul.u32 30, %s14
        %s685 = smul.u32 30, %s14
        %p686 = scmp.lt.s32.totalorder %s685, 59
        %s687 = scalar_select %p686, %s685, 59
        %s688 = smul.addr %s687, 4
        %s689 = scalar_lea.vmem %s3, %s688
        %s690 = smul.u32 30, %s14
        %v692 = vld [vmem:[%s663] sm:$0xf]
        %v693 = vld [vmem:[%s663 + $0x4] sm:$0xf]
        %v694 = vld [vmem:[%s663 + $0x8] sm:$0xf]
        %v695 = vld [vmem:[%s663 + $0xc] sm:$0xf]
        %v696 = vld [vmem:[%s663 + $0x10] sm:$0xf]
        %v697 = vld [vmem:[%s663 + $0x14] sm:$0xf]
        %v698 = vld [vmem:[%s663 + $0x18] sm:$0xf]
        %v699 = vld [vmem:[%s663 + $0x1c] sm:$0xf]
        %v700 = vld [vmem:[%s663 + $0x20] sm:$0xf]
        %v701 = vld [vmem:[%s663 + $0x24] sm:$0xf]
        %v702 = vld [vmem:[%s663 + $0x28] sm:$0xf]
        %v703 = vld [vmem:[%s663 + $0x2c] sm:$0xf]
        %v704 = vld [vmem:[%s663 + $0x30] sm:$0xf]
        %v705 = vld [vmem:[%s663 + $0x34] sm:$0xf]
        %v706 = vld [vmem:[%s663 + $0x38] sm:$0xf]
        %v707 = vld [vmem:[%s663 + $0x3c] sm:$0xf]
        %v708 = vld [vmem:[%s663 + $0x40] sm:$0xf]
        %v709 = vld [vmem:[%s663 + $0x44] sm:$0xf]
        %v710 = vld [vmem:[%s663 + $0x48] sm:$0xf]
        %v711 = vld [vmem:[%s663 + $0x4c] sm:$0xf]
        %v712 = vld [vmem:[%s663 + $0x50] sm:$0xf]
        %v713 = vld [vmem:[%s663 + $0x54] sm:$0xf]
        %v714 = vld [vmem:[%s663 + $0x58] sm:$0xf]
        %v715 = vld [vmem:[%s663 + $0x5c] sm:$0xf]
        %v716 = vld [vmem:[%s663 + $0x60] sm:$0xf]
        %v717 = vld [vmem:[%s663 + $0x64] sm:$0xf]
        %v718 = vld [vmem:[%s663 + $0x68] sm:$0xf]
        %v719 = vld [vmem:[%s663 + $0x6c] sm:$0xf]
        %v720 = vld [vmem:[%s663 + $0x70] sm:$0xf]
        %v721 = vld [vmem:[%s663 + $0x74] sm:$0xf]
        %v722 = vld [vmem:[%s663 + $0x78] sm:$0xf]
        %v723 = vld [vmem:[%s663 + $0x7c] sm:$0xf]
        %v724 = vld [vmem:[%s663 + $0x80] sm:$0xf]
        %v725 = vld [vmem:[%s663 + $0x84] sm:$0xf]
        %v726 = vld [vmem:[%s663 + $0x88] sm:$0xf]
        %v727 = vld [vmem:[%s663 + $0x8c] sm:$0xf]
        %v728 = vld [vmem:[%s663 + $0x90] sm:$0xf]
        %v729 = vld [vmem:[%s663 + $0x94] sm:$0xf]
        %v730 = vld [vmem:[%s663 + $0x98] sm:$0xf]
        %v731 = vld [vmem:[%s663 + $0x9c] sm:$0xf]
        %v732 = vld [vmem:[%s663 + $0xa0] sm:$0xf]
        %v733 = vld [vmem:[%s663 + $0xa4] sm:$0xf]
        %v734 = vld [vmem:[%s663 + $0xa8] sm:$0xf]
        %v735 = vld [vmem:[%s663 + $0xac] sm:$0xf]
        %v736 = vld [vmem:[%s663 + $0xb0] sm:$0xf]
        %v737 = vld [vmem:[%s663 + $0xb4] sm:$0xf]
        %v738 = vld [vmem:[%s663 + $0xb8] sm:$0xf]
        %v739 = vld [vmem:[%s663 + $0xbc] sm:$0xf]
        %v740 = vld [vmem:[%s663 + $0xc0] sm:$0xf]
        %v741 = vld [vmem:[%s663 + $0xc4] sm:$0xf]
        %v742 = vld [vmem:[%s663 + $0xc8] sm:$0xf]
        %v743 = vld [vmem:[%s663 + $0xcc] sm:$0xf]
        %v744 = vld [vmem:[%s663 + $0xd0] sm:$0xf]
        %v745 = vld [vmem:[%s663 + $0xd4] sm:$0xf]
        %v746 = vld [vmem:[%s663 + $0xd8] sm:$0xf]
        %v747 = vld [vmem:[%s663 + $0xdc] sm:$0xf]
        %v748 = vld [vmem:[%s663 + $0xe0] sm:$0xf]
        %v749 = vld [vmem:[%s663 + $0xe4] sm:$0xf]
        %v750 = vld [vmem:[%s663 + $0xe8] sm:$0xf]
        %v751 = vld [vmem:[%s663 + $0xec] sm:$0xf]
        %v752 = vld [vmem:[%s663 + $0xf0] sm:$0xf]
        %v753 = vld [vmem:[%s663 + $0xf4] sm:$0xf]
        %v754 = vld [vmem:[%s663 + $0xf8] sm:$0xf]
        %v755 = vld [vmem:[%s663 + $0xfc] sm:$0xf]
        %v756 = vld [vmem:[%s663 + $0x100] sm:$0xf]
        %v757 = vld [vmem:[%s663 + $0x104] sm:$0xf]
        %v758 = vld [vmem:[%s663 + $0x108] sm:$0xf]
        %v759 = vld [vmem:[%s663 + $0x10c] sm:$0xf]
        %v760 = vld [vmem:[%s663 + $0x110] sm:$0xf]
        %v761 = vld [vmem:[%s663 + $0x114] sm:$0xf]
        %v762 = vld [vmem:[%s663 + $0x118] sm:$0xf]
        %v763 = vld [vmem:[%s663 + $0x11c] sm:$0xf]
        %v764 = vld [vmem:[%s663 + $0x120] sm:$0xf]
        %v765 = vld [vmem:[%s663 + $0x124] sm:$0xf]
        %v766 = vld [vmem:[%s663 + $0x128] sm:$0xf]
        %v767 = vld [vmem:[%s663 + $0x12c] sm:$0xf]
        %v768 = vld [vmem:[%s663 + $0x130] sm:$0xf]
        %v769 = vld [vmem:[%s663 + $0x134] sm:$0xf]
        %v770 = vld [vmem:[%s663 + $0x138] sm:$0xf]
        %v771 = vld [vmem:[%s663 + $0x13c] sm:$0xf]
        %v772 = vld [vmem:[%s663 + $0x140] sm:$0xf]
        %v773 = vld [vmem:[%s663 + $0x144] sm:$0xf]
        %v774 = vld [vmem:[%s663 + $0x148] sm:$0xf]
        %v775 = vld [vmem:[%s663 + $0x14c] sm:$0xf]
        %v776 = vld [vmem:[%s663 + $0x150] sm:$0xf]
        %v777 = vld [vmem:[%s663 + $0x154] sm:$0xf]
        %v778 = vld [vmem:[%s663 + $0x158] sm:$0xf]
        %v779 = vld [vmem:[%s663 + $0x15c] sm:$0xf]
        %v780 = vld [vmem:[%s663 + $0x160] sm:$0xf]
        %v781 = vld [vmem:[%s663 + $0x164] sm:$0xf]
        %v782 = vld [vmem:[%s663 + $0x168] sm:$0xf]
        %v783 = vld [vmem:[%s663 + $0x16c] sm:$0xf]
        %v784 = vld [vmem:[%s663 + $0x170] sm:$0xf]
        %v785 = vld [vmem:[%s663 + $0x174] sm:$0xf]
        %v786 = vld [vmem:[%s663 + $0x178] sm:$0xf]
        %v787 = vld [vmem:[%s663 + $0x17c] sm:$0xf]
        %v788 = vld [vmem:[%s663 + $0x180] sm:$0xf]
        %v789 = vld [vmem:[%s663 + $0x184] sm:$0xf]
        %v790 = vld [vmem:[%s663 + $0x188] sm:$0xf]
        %v791 = vld [vmem:[%s663 + $0x18c] sm:$0xf]
        %v792 = vld [vmem:[%s663 + $0x190] sm:$0xf]
        %v793 = vld [vmem:[%s663 + $0x194] sm:$0xf]
        %v794 = vld [vmem:[%s663 + $0x198] sm:$0xf]
        %v795 = vld [vmem:[%s663 + $0x19c] sm:$0xf]
        %v796 = vld [vmem:[%s663 + $0x1a0] sm:$0xf]
        %v797 = vld [vmem:[%s663 + $0x1a4] sm:$0xf]
        %v798 = vld [vmem:[%s663 + $0x1a8] sm:$0xf]
        %v799 = vld [vmem:[%s663 + $0x1ac] sm:$0xf]
        %v800 = vld [vmem:[%s663 + $0x1b0] sm:$0xf]
        %v801 = vld [vmem:[%s663 + $0x1b4] sm:$0xf]
        %v802 = vld [vmem:[%s663 + $0x1b8] sm:$0xf]
        %v803 = vld [vmem:[%s663 + $0x1bc] sm:$0xf]
        %v804 = vld [vmem:[%s663 + $0x1c0] sm:$0xf]
        %v805 = vld [vmem:[%s663 + $0x1c4] sm:$0xf]
        %v806 = vld [vmem:[%s663 + $0x1c8] sm:$0xf]
        %v807 = vld [vmem:[%s663 + $0x1cc] sm:$0xf]
        %v808 = vld [vmem:[%s663 + $0x1d0] sm:$0xf]
        %v809 = vld [vmem:[%s663 + $0x1d4] sm:$0xf]
        %v810 = vld [vmem:[%s663 + $0x1d8] sm:$0xf]
        %v811 = vld [vmem:[%s663 + $0x1dc] sm:$0xf]
        %v812 = vld [vmem:[%s1] sm:$0xf]
        %v813 = vld [vmem:[%s1 + $0x4] sm:$0xf]
        %v814 = vld [vmem:[%s1 + $0x8] sm:$0xf]
        %v815 = vld [vmem:[%s1 + $0xc] sm:$0xf]
        %v816 = vld [vmem:[%s1 + $0x10] sm:$0xf]
        %v817 = vld [vmem:[%s1 + $0x14] sm:$0xf]
        %v818 = vld [vmem:[%s1 + $0x18] sm:$0xf]
        %v819 = vld [vmem:[%s1 + $0x1c] sm:$0xf]
        %v820 = vld [vmem:[%s1 + $0x20] sm:$0xf]
        %v941 = vunpack.c.l.b16 %v692
        %v942 = vunpack.c.l.b16 %v693
        %v943 = vunpack.c.l.b16 %v694
        %v944 = vunpack.c.l.b16 %v695
        %v945 = vunpack.c.l.b16 %v696
        %v946 = vunpack.c.l.b16 %v697
        %v947 = vunpack.c.l.b16 %v698
        %v948 = vunpack.c.l.b16 %v699
        %v949 = vunpack.c.l.b16 %v700
        %v950 = vunpack.c.l.b16 %v701
        %v951 = vunpack.c.l.b16 %v702
        %v952 = vunpack.c.l.b16 %v703
        %v953 = vunpack.c.l.b16 %v704
        %v954 = vunpack.c.l.b16 %v705
        %v955 = vunpack.c.l.b16 %v706
        %v956 = vunpack.c.l.b16 %v707
        %v957 = vunpack.c.l.b16 %v708
        %v958 = vunpack.c.l.b16 %v709
        %v959 = vunpack.c.l.b16 %v710
        %v960 = vunpack.c.l.b16 %v711
        %v961 = vunpack.c.l.b16 %v712
        %v962 = vunpack.c.l.b16 %v713
        %v963 = vunpack.c.l.b16 %v714
        %v964 = vunpack.c.l.b16 %v715
        %v965 = vunpack.c.l.b16 %v716
        %v966 = vunpack.c.l.b16 %v717
        %v967 = vunpack.c.l.b16 %v718
        %v968 = vunpack.c.l.b16 %v719
        %v969 = vunpack.c.l.b16 %v720
        %v970 = vunpack.c.l.b16 %v721
        %v971 = vunpack.c.l.b16 %v722
        %v972 = vunpack.c.l.b16 %v723
        %v973 = vunpack.c.l.b16 %v724
        %v974 = vunpack.c.l.b16 %v725
        %v975 = vunpack.c.l.b16 %v726
        %v976 = vunpack.c.l.b16 %v727
        %v977 = vunpack.c.l.b16 %v728
        %v978 = vunpack.c.l.b16 %v729
        %v979 = vunpack.c.l.b16 %v730
        %v980 = vunpack.c.l.b16 %v731
        %v981 = vunpack.c.l.b16 %v732
        %v982 = vunpack.c.l.b16 %v733
        %v983 = vunpack.c.l.b16 %v734
        %v984 = vunpack.c.l.b16 %v735
        %v985 = vunpack.c.l.b16 %v736
        %v986 = vunpack.c.l.b16 %v737
        %v987 = vunpack.c.l.b16 %v738
        %v988 = vunpack.c.l.b16 %v739
        %v989 = vunpack.c.l.b16 %v740
        %v990 = vunpack.c.l.b16 %v741
        %v991 = vunpack.c.l.b16 %v742
        %v992 = vunpack.c.l.b16 %v743
        %v993 = vunpack.c.l.b16 %v744
        %v994 = vunpack.c.l.b16 %v745
        %v995 = vunpack.c.l.b16 %v746
        %v996 = vunpack.c.l.b16 %v747
        %v997 = vunpack.c.l.b16 %v748
        %v998 = vunpack.c.l.b16 %v749
        %v999 = vunpack.c.l.b16 %v750
        %v1000 = vunpack.c.l.b16 %v751
        %v1001 = vunpack.c.l.b16 %v752
        %v1002 = vunpack.c.l.b16 %v753
        %v1003 = vunpack.c.l.b16 %v754
        %v1004 = vunpack.c.l.b16 %v755
        %v1005 = vunpack.c.l.b16 %v756
        %v1006 = vunpack.c.l.b16 %v757
        %v1007 = vunpack.c.l.b16 %v758
        %v1008 = vunpack.c.l.b16 %v759
        %v1009 = vunpack.c.l.b16 %v760
        %v1010 = vunpack.c.l.b16 %v761
        %v1011 = vunpack.c.l.b16 %v762
        %v1012 = vunpack.c.l.b16 %v763
        %v1013 = vunpack.c.l.b16 %v764
        %v1014 = vunpack.c.l.b16 %v765
        %v1015 = vunpack.c.l.b16 %v766
        %v1016 = vunpack.c.l.b16 %v767
        %v1017 = vunpack.c.l.b16 %v768
        %v1018 = vunpack.c.l.b16 %v769
        %v1019 = vunpack.c.l.b16 %v770
        %v1020 = vunpack.c.l.b16 %v771
        %v1021 = vunpack.c.l.b16 %v772
        %v1022 = vunpack.c.l.b16 %v773
        %v1023 = vunpack.c.l.b16 %v774
        %v1024 = vunpack.c.l.b16 %v775
        %v1025 = vunpack.c.l.b16 %v776
        %v1026 = vunpack.c.l.b16 %v777
        %v1027 = vunpack.c.l.b16 %v778
        %v1028 = vunpack.c.l.b16 %v779
        %v1029 = vunpack.c.l.b16 %v780
        %v1030 = vunpack.c.l.b16 %v781
        %v1031 = vunpack.c.l.b16 %v782
        %v1032 = vunpack.c.l.b16 %v783
        %v1033 = vunpack.c.l.b16 %v784
        %v1034 = vunpack.c.l.b16 %v785
        %v1035 = vunpack.c.l.b16 %v786
        %v1036 = vunpack.c.l.b16 %v787
        %v1037 = vunpack.c.l.b16 %v788
        %v1038 = vunpack.c.l.b16 %v789
        %v1039 = vunpack.c.l.b16 %v790
        %v1040 = vunpack.c.l.b16 %v791
        %v1041 = vunpack.c.l.b16 %v792
        %v1042 = vunpack.c.l.b16 %v793
        %v1043 = vunpack.c.l.b16 %v794
        %v1044 = vunpack.c.l.b16 %v795
        %v1045 = vunpack.c.l.b16 %v796
        %v1046 = vunpack.c.l.b16 %v797
        %v1047 = vunpack.c.l.b16 %v798
        %v1048 = vunpack.c.l.b16 %v799
        %v1049 = vunpack.c.l.b16 %v800
        %v1050 = vunpack.c.l.b16 %v801
        %v1051 = vunpack.c.l.b16 %v802
        %v1052 = vunpack.c.l.b16 %v803
        %v1053 = vunpack.c.l.b16 %v804
        %v1054 = vunpack.c.l.b16 %v805
        %v1055 = vunpack.c.l.b16 %v806
        %v1056 = vunpack.c.l.b16 %v807
        %v1057 = vunpack.c.l.b16 %v808
        %v1058 = vunpack.c.l.b16 %v809
        %v1059 = vunpack.c.l.b16 %v810
        %v1060 = vunpack.c.l.b16 %v811
        %v1061 = vpack.c.b16 %v942, %v941
        %v1062 = vpack.c.b16 %v944, %v943
        %v1063 = vpack.c.b16 %v946, %v945
        %v1064 = vpack.c.b16 %v948, %v947
        %v1065 = vpack.c.b16 %v950, %v949
        %v1066 = vpack.c.b16 %v952, %v951
        %v1067 = vpack.c.b16 %v954, %v953
        %v1068 = vpack.c.b16 %v956, %v955
        %v1069 = vpack.c.b16 %v958, %v957
        %v1070 = vpack.c.b16 %v960, %v959
        %v1071 = vpack.c.b16 %v962, %v961
        %v1072 = vpack.c.b16 %v964, %v963
        %v1073 = vpack.c.b16 %v966, %v965
        %v1074 = vpack.c.b16 %v968, %v967
        %v1075 = vpack.c.b16 %v970, %v969
        %v1076 = vpack.c.b16 %v972, %v971
        %v1077 = vpack.c.b16 %v974, %v973
        %v1078 = vpack.c.b16 %v976, %v975
        %v1079 = vpack.c.b16 %v978, %v977
        %v1080 = vpack.c.b16 %v980, %v979
        %v1081 = vpack.c.b16 %v982, %v981
        %v1082 = vpack.c.b16 %v984, %v983
        %v1083 = vpack.c.b16 %v986, %v985
        %v1084 = vpack.c.b16 %v988, %v987
        %v1085 = vpack.c.b16 %v990, %v989
        %v1086 = vpack.c.b16 %v992, %v991
        %v1087 = vpack.c.b16 %v994, %v993
        %v1088 = vpack.c.b16 %v996, %v995
        %v1089 = vpack.c.b16 %v998, %v997
        %v1090 = vpack.c.b16 %v1000, %v999
        %v1091 = vpack.c.b16 %v1002, %v1001
        %v1092 = vpack.c.b16 %v1004, %v1003
        %v1093 = vpack.c.b16 %v1006, %v1005
        %v1094 = vpack.c.b16 %v1008, %v1007
        %v1095 = vpack.c.b16 %v1010, %v1009
        %v1096 = vpack.c.b16 %v1012, %v1011
        %v1097 = vpack.c.b16 %v1014, %v1013
        %v1098 = vpack.c.b16 %v1016, %v1015
        %v1099 = vpack.c.b16 %v1018, %v1017
        %v1100 = vpack.c.b16 %v1020, %v1019
        %v1101 = vpack.c.b16 %v1022, %v1021
        %v1102 = vpack.c.b16 %v1024, %v1023
        %v1103 = vpack.c.b16 %v1026, %v1025
        %v1104 = vpack.c.b16 %v1028, %v1027
        %v1105 = vpack.c.b16 %v1030, %v1029
        %v1106 = vpack.c.b16 %v1032, %v1031
        %v1107 = vpack.c.b16 %v1034, %v1033
        %v1108 = vpack.c.b16 %v1036, %v1035
        %v1109 = vpack.c.b16 %v1038, %v1037
        %v1110 = vpack.c.b16 %v1040, %v1039
        %v1111 = vpack.c.b16 %v1042, %v1041
        %v1112 = vpack.c.b16 %v1044, %v1043
        %v1113 = vpack.c.b16 %v1046, %v1045
        %v1114 = vpack.c.b16 %v1048, %v1047
        %v1115 = vpack.c.b16 %v1050, %v1049
        %v1116 = vpack.c.b16 %v1052, %v1051
        %v1117 = vpack.c.b16 %v1054, %v1053
        %v1118 = vpack.c.b16 %v1056, %v1055
        %v1119 = vpack.c.b16 %v1058, %v1057
        %v1120 = vpack.c.b16 %v1060, %v1059
        %v1130 = vunpack.c.l.b16 %v812
        %v1131 = vunpack.c.l.b16 %v813
        %v1132 = vunpack.c.l.b16 %v814
        %v1133 = vunpack.c.l.b16 %v815
        %v1134 = vunpack.c.l.b16 %v816
        %v1135 = vunpack.c.l.b16 %v817
        %v1136 = vunpack.c.l.b16 %v818
        %v1137 = vunpack.c.l.b16 %v819
        %v1138 = vunpack.c.l.b16 %v820
        %v1139 = vpack.c.b16 %v1131, %v1130
        %v1140 = vpack.c.b16 %v1133, %v1132
        %v1141 = vpack.c.b16 %v1135, %v1134
        %v1142 = vpack.c.b16 %v1137, %v1136
        %v1143 = vpack.c.b16 %v1138, %v1138
        %vm1148 = vcmask 588800
        %v1150 = vsel %vm1148, %v1061, 0
        %v1153 = vsel %vm1148, %v1062, 0
        %v1156 = vsel %vm1148, %v1063, 0
        %v1159 = vsel %vm1148, %v1064, 0
        %v1162 = vsel %vm1148, %v1065, 0
        %v1165 = vsel %vm1148, %v1066, 0
        %v1168 = vsel %vm1148, %v1067, 0
        %v1171 = vsel %vm1148, %v1068, 0
        %v1174 = vsel %vm1148, %v1069, 0
        %v1177 = vsel %vm1148, %v1070, 0
        %v1180 = vsel %vm1148, %v1071, 0
        %v1183 = vsel %vm1148, %v1072, 0
        %v1186 = vsel %vm1148, %v1073, 0
        %v1189 = vsel %vm1148, %v1074, 0
        %v1192 = vsel %vm1148, %v1075, 0
        %v1195 = vsel %vm1148, %v1076, 0
        %v1198 = vsel %vm1148, %v1077, 0
        %v1201 = vsel %vm1148, %v1078, 0
        %v1204 = vsel %vm1148, %v1079, 0
        %v1207 = vsel %vm1148, %v1080, 0
        %v1210 = vsel %vm1148, %v1081, 0
        %v1213 = vsel %vm1148, %v1082, 0
        %v1216 = vsel %vm1148, %v1083, 0
        %v1219 = vsel %vm1148, %v1084, 0
        %v1222 = vsel %vm1148, %v1085, 0
        %v1225 = vsel %vm1148, %v1086, 0
        %v1228 = vsel %vm1148, %v1087, 0
        %v1231 = vsel %vm1148, %v1088, 0
        %v1234 = vsel %vm1148, %v1089, 0
        %v1237 = vsel %vm1148, %v1090, 0
        %v1240 = vsel %vm1148, %v1091, 0
        %v1243 = vsel %vm1148, %v1092, 0
        %v1246 = vsel %vm1148, %v1093, 0
        %v1249 = vsel %vm1148, %v1094, 0
        %v1252 = vsel %vm1148, %v1095, 0
        %v1255 = vsel %vm1148, %v1096, 0
        %v1258 = vsel %vm1148, %v1097, 0
        %v1261 = vsel %vm1148, %v1098, 0
        %v1264 = vsel %vm1148, %v1099, 0
        %v1267 = vsel %vm1148, %v1100, 0
        %v1270 = vsel %vm1148, %v1101, 0
        %v1273 = vsel %vm1148, %v1102, 0
        %v1276 = vsel %vm1148, %v1103, 0
        %v1279 = vsel %vm1148, %v1104, 0
        %v1282 = vsel %vm1148, %v1105, 0
        %v1285 = vsel %vm1148, %v1106, 0
        %v1288 = vsel %vm1148, %v1107, 0
        %v1291 = vsel %vm1148, %v1108, 0
        %v1294 = vsel %vm1148, %v1109, 0
        %v1297 = vsel %vm1148, %v1110, 0
        %v1300 = vsel %vm1148, %v1111, 0
        %v1303 = vsel %vm1148, %v1112, 0
        %v1306 = vsel %vm1148, %v1113, 0
        %v1309 = vsel %vm1148, %v1114, 0
        %v1312 = vsel %vm1148, %v1115, 0
        %v1315 = vsel %vm1148, %v1116, 0
        %v1318 = vsel %vm1148, %v1117, 0
        %v1321 = vsel %vm1148, %v1118, 0
        %v1324 = vsel %vm1148, %v1119, 0
        %v1327 = vsel %vm1148, %v1120, 0
        %vm1329 = vcmask 1043456
        %v1331 = vsel %vm1329, %v1143, 0
        %1333 = vmatprep.subr.bf16.mxu0 0
        %1334 = vmatpush1.bf16.msra.mxu0 %v1139
        %1335 = vmatprep.subr.bf16.mxu0 0
        %1336 = vmatpush1.bf16.msra.mxu0 %v1140
        %1337 = vmatprep.subr.bf16.mxu0 0
        %1338 = vmatpush1.bf16.msra.mxu0 %v1141
        %1339 = vmatprep.subr.bf16.mxu0 0
        %1340 = vmatpush1.bf16.msra.mxu0 %v1142
        %1341 = vmatprep.subr.bf16.mxu0 0
        %1342 = vmatpush1.bf16.msra.mxu0 %v1331
        %1343 = vmatprep.subr.bf16.mxu0 0
        %1344 = vmatpush1.bf16.msra.mxu0 0
        %1345 = vmatprep.subr.bf16.mxu0 0
        %1346 = vmatpush1.bf16.msra.mxu0 0
        %1347 = vmatprep.subr.bf16.mxu0 0
        %1348 = vmatpush1.bf16.msra.mxu0 0
        %1349 = vmatprep.subr.bf16.mxu0 0
        %1350 = vmatpush1.bf16.msra.mxu0 0
        %1351 = vmatprep.subr.bf16.mxu0 0
        %1352 = vmatpush1.bf16.msra.mxu0 0
        %1353 = vmatprep.subr.bf16.mxu0 0
        %1354 = vmatpush1.bf16.msra.mxu0 0
        %1355 = vmatprep.subr.bf16.mxu0 0
        %1356 = vmatpush1.bf16.msra.mxu0 0
        %1357 = vmatprep.subr.bf16.mxu0 0
        %1358 = vmatpush1.bf16.msra.mxu0 0
        %1359 = vmatprep.subr.bf16.mxu0 0
        %1360 = vmatpush1.bf16.msra.mxu0 0
        %1361 = vmatprep.subr.bf16.mxu0 0
        %1362 = vmatpush1.bf16.msra.mxu0 0
        %1363 = vmatprep.subr.bf16.mxu0 0
        %1364 = vmatpush1.bf16.msra.mxu0 0
        %1365 = vmatprep.mubr.bf16.mxu0 0
        %1366 = vmatmul.mubr.bf16.gmra.mrb[0].mxu0 %v1150
        %v1367 = vpop.f32.mrb[0].mxu0
        %v1368 = vadd.f32 0.0, %v1367
        %v1369 = vpop.f32.mrb[0].mxu0
        %v1370 = vpop.f32.mrb[0].mxu0
        %v1371 = vadd.f32 0.0, %v1370
        %v1372 = vpop.f32.mrb[0].mxu0
        %1373 = vmatprep.mubr.bf16.mxu0 0
        %1374 = vmatmul.mubr.bf16.gmra.mrb[0].mxu0 %v1153
        %v1375 = vpop.f32.mrb[0].mxu0
        %v1376 = vadd.f32 0.0, %v1375
        %v1377 = vpop.f32.mrb[0].mxu0
        %v1378 = vpop.f32.mrb[0].mxu0
        %v1379 = vadd.f32 0.0, %v1378
        %v1380 = vpop.f32.mrb[0].mxu0
        %1381 = vmatprep.mubr.bf16.mxu0 0
        %1382 = vmatmul.mubr.bf16.gmra.mrb[0].mxu0 %v1156
        %v1383 = vpop.f32.mrb[0].mxu0
        %v1384 = vadd.f32 0.0, %v1383
        %v1385 = vpop.f32.mrb[0].mxu0
        %v1386 = vpop.f32.mrb[0].mxu0
        %v1387 = vadd.f32 0.0, %v1386
        %v1388 = vpop.f32.mrb[0].mxu0
        %1389 = vmatprep.mubr.bf16.mxu0 0
        %1390 = vmatmul.mubr.bf16.gmra.mrb[0].mxu0 %v1159
        %v1391 = vpop.f32.mrb[0].mxu0
        %v1392 = vadd.f32 0.0, %v1391
        %v1393 = vpop.f32.mrb[0].mxu0
        %v1394 = vpop.f32.mrb[0].mxu0
        %v1395 = vadd.f32 0.0, %v1394
        %v1396 = vpop.f32.mrb[0].mxu0
        %1397 = vmatprep.mubr.bf16.mxu0 0
        %1398 = vmatmul.mubr.bf16.gmra.mrb[0].mxu0 %v1162
        %v1399 = vpop.f32.mrb[0].mxu0
        %v1400 = vadd.f32 0.0, %v1399
        %v1401 = vpop.f32.mrb[0].mxu0
        %v1402 = vpop.f32.mrb[0].mxu0
        %v1403 = vadd.f32 0.0, %v1402
        %v1404 = vpop.f32.mrb[0].mxu0
        %1405 = vmatprep.mubr.bf16.mxu0 0
        %1406 = vmatmul.mubr.bf16.gmra.mrb[0].mxu0 %v1165
        %v1407 = vpop.f32.mrb[0].mxu0
        %v1408 = vadd.f32 0.0, %v1407
        %v1409 = vpop.f32.mrb[0].mxu0
        %v1410 = vpop.f32.mrb[0].mxu0
        %v1411 = vadd.f32 0.0, %v1410
        %v1412 = vpop.f32.mrb[0].mxu0
        %1413 = vmatprep.mubr.bf16.mxu0 0
        %1414 = vmatmul.mubr.bf16.gmra.mrb[0].mxu0 %v1168
        %v1415 = vpop.f32.mrb[0].mxu0
        %v1416 = vadd.f32 0.0, %v1415
        %v1417 = vpop.f32.mrb[0].mxu0
        %v1418 = vpop.f32.mrb[0].mxu0
        %v1419 = vadd.f32 0.0, %v1418
        %v1420 = vpop.f32.mrb[0].mxu0
        %1421 = vmatprep.mubr.bf16.mxu0 0
        %1422 = vmatmul.mubr.bf16.gmra.mrb[0].mxu0 %v1171
        %v1423 = vpop.f32.mrb[0].mxu0
        %v1424 = vadd.f32 0.0, %v1423
        %v1425 = vpop.f32.mrb[0].mxu0
        %v1426 = vpop.f32.mrb[0].mxu0
        %v1427 = vadd.f32 0.0, %v1426
        %v1428 = vpop.f32.mrb[0].mxu0
        %1429 = vmatprep.mubr.bf16.mxu0 0
        %1430 = vmatmul.mubr.bf16.gmra.mrb[0].mxu0 %v1174
        %v1431 = vpop.f32.mrb[0].mxu0
        %v1432 = vadd.f32 0.0, %v1431
        %v1433 = vpop.f32.mrb[0].mxu0
        %v1434 = vpop.f32.mrb[0].mxu0
        %v1435 = vadd.f32 0.0, %v1434
        %v1436 = vpop.f32.mrb[0].mxu0
        %1437 = vmatprep.mubr.bf16.mxu0 0
        %1438 = vmatmul.mubr.bf16.gmra.mrb[0].mxu0 %v1177
        %v1439 = vpop.f32.mrb[0].mxu0
        %v1440 = vadd.f32 0.0, %v1439
        %v1441 = vpop.f32.mrb[0].mxu0
        %v1442 = vpop.f32.mrb[0].mxu0
        %v1443 = vadd.f32 0.0, %v1442
        %v1444 = vpop.f32.mrb[0].mxu0
        %1445 = vmatprep.mubr.bf16.mxu0 0
        %1446 = vmatmul.mubr.bf16.gmra.mrb[0].mxu0 %v1180
        %v1447 = vpop.f32.mrb[0].mxu0
        %v1448 = vadd.f32 0.0, %v1447
        %v1449 = vpop.f32.mrb[0].mxu0
        %v1450 = vpop.f32.mrb[0].mxu0
        %v1451 = vadd.f32 0.0, %v1450
        %v1452 = vpop.f32.mrb[0].mxu0
        %1453 = vmatprep.mubr.bf16.mxu0 0
        %1454 = vmatmul.mubr.bf16.gmra.mrb[0].mxu0 %v1183
        %v1455 = vpop.f32.mrb[0].mxu0
        %v1456 = vadd.f32 0.0, %v1455
        %v1457 = vpop.f32.mrb[0].mxu0
        %v1458 = vpop.f32.mrb[0].mxu0
        %v1459 = vadd.f32 0.0, %v1458
        %v1460 = vpop.f32.mrb[0].mxu0
        %1461 = vmatprep.mubr.bf16.mxu0 0
        %1462 = vmatmul.mubr.bf16.gmra.mrb[0].mxu0 %v1186
        %v1463 = vpop.f32.mrb[0].mxu0
        %v1464 = vadd.f32 0.0, %v1463
        %v1465 = vpop.f32.mrb[0].mxu0
        %v1466 = vpop.f32.mrb[0].mxu0
        %v1467 = vadd.f32 0.0, %v1466
        %v1468 = vpop.f32.mrb[0].mxu0
        %1469 = vmatprep.mubr.bf16.mxu0 0
        %1470 = vmatmul.mubr.bf16.gmra.mrb[0].mxu0 %v1189
        %v1471 = vpop.f32.mrb[0].mxu0
        %v1472 = vadd.f32 0.0, %v1471
        %v1473 = vpop.f32.mrb[0].mxu0
        %v1474 = vpop.f32.mrb[0].mxu0
        %v1475 = vadd.f32 0.0, %v1474
        %v1476 = vpop.f32.mrb[0].mxu0
        %1477 = vmatprep.mubr.bf16.mxu0 0
        %1478 = vmatmul.mubr.bf16.gmra.mrb[0].mxu0 %v1192
        %v1479 = vpop.f32.mrb[0].mxu0
        %v1480 = vadd.f32 0.0, %v1479
        %v1481 = vpop.f32.mrb[0].mxu0
        %v1482 = vpop.f32.mrb[0].mxu0
        %v1483 = vadd.f32 0.0, %v1482
        %v1484 = vpop.f32.mrb[0].mxu0
        %1485 = vmatprep.mubr.bf16.mxu0 0
        %1486 = vmatmul.mubr.bf16.gmra.mrb[0].mxu0 %v1195
        %v1487 = vpop.f32.mrb[0].mxu0
        %v1488 = vadd.f32 0.0, %v1487
        %v1489 = vpop.f32.mrb[0].mxu0
        %v1490 = vpop.f32.mrb[0].mxu0
        %v1491 = vadd.f32 0.0, %v1490
        %v1492 = vpop.f32.mrb[0].mxu0
        %1493 = vmatprep.mubr.bf16.mxu0 0
        %1494 = vmatmul.mubr.bf16.gmra.mrb[0].mxu0 %v1198
        %v1495 = vpop.f32.mrb[0].mxu0
        %v1496 = vadd.f32 0.0, %v1495
        %v1497 = vpop.f32.mrb[0].mxu0
        %v1498 = vpop.f32.mrb[0].mxu0
        %v1499 = vadd.f32 0.0, %v1498
        %v1500 = vpop.f32.mrb[0].mxu0
        %1501 = vmatprep.mubr.bf16.mxu0 0
        %1502 = vmatmul.mubr.bf16.gmra.mrb[0].mxu0 %v1201
        %v1503 = vpop.f32.mrb[0].mxu0
        %v1504 = vadd.f32 0.0, %v1503
        %v1505 = vpop.f32.mrb[0].mxu0
        %v1506 = vpop.f32.mrb[0].mxu0
        %v1507 = vadd.f32 0.0, %v1506
        %v1508 = vpop.f32.mrb[0].mxu0
        %1509 = vmatprep.mubr.bf16.mxu0 0
        %1510 = vmatmul.mubr.bf16.gmra.mrb[0].mxu0 %v1204
        %v1511 = vpop.f32.mrb[0].mxu0
        %v1512 = vadd.f32 0.0, %v1511
        %v1513 = vpop.f32.mrb[0].mxu0
        %v1514 = vpop.f32.mrb[0].mxu0
        %v1515 = vadd.f32 0.0, %v1514
        %v1516 = vpop.f32.mrb[0].mxu0
        %1517 = vmatprep.mubr.bf16.mxu0 0
        %1518 = vmatmul.mubr.bf16.gmra.mrb[0].mxu0 %v1207
        %v1519 = vpop.f32.mrb[0].mxu0
        %v1520 = vadd.f32 0.0, %v1519
        %v1521 = vpop.f32.mrb[0].mxu0
        %v1522 = vpop.f32.mrb[0].mxu0
        %v1523 = vadd.f32 0.0, %v1522
        %v1524 = vpop.f32.mrb[0].mxu0
        %1525 = vmatprep.mubr.bf16.mxu0 0
        %1526 = vmatmul.mubr.bf16.gmra.mrb[0].mxu0 %v1210
        %v1527 = vpop.f32.mrb[0].mxu0
        %v1528 = vadd.f32 0.0, %v1527
        %v1529 = vpop.f32.mrb[0].mxu0
        %v1530 = vpop.f32.mrb[0].mxu0
        %v1531 = vadd.f32 0.0, %v1530
        %v1532 = vpop.f32.mrb[0].mxu0
        %1533 = vmatprep.mubr.bf16.mxu0 0
        %1534 = vmatmul.mubr.bf16.gmra.mrb[0].mxu0 %v1213
        %v1535 = vpop.f32.mrb[0].mxu0
        %v1536 = vadd.f32 0.0, %v1535
        %v1537 = vpop.f32.mrb[0].mxu0
        %v1538 = vpop.f32.mrb[0].mxu0
        %v1539 = vadd.f32 0.0, %v1538
        %v1540 = vpop.f32.mrb[0].mxu0
        %1541 = vmatprep.mubr.bf16.mxu0 0
        %1542 = vmatmul.mubr.bf16.gmra.mrb[0].mxu0 %v1216
        %v1543 = vpop.f32.mrb[0].mxu0
        %v1544 = vadd.f32 0.0, %v1543
        %v1545 = vpop.f32.mrb[0].mxu0
        %v1546 = vpop.f32.mrb[0].mxu0
        %v1547 = vadd.f32 0.0, %v1546
        %v1548 = vpop.f32.mrb[0].mxu0
        %1549 = vmatprep.mubr.bf16.mxu0 0
        %1550 = vmatmul.mubr.bf16.gmra.mrb[0].mxu0 %v1219
        %v1551 = vpop.f32.mrb[0].mxu0
        %v1552 = vadd.f32 0.0, %v1551
        %v1553 = vpop.f32.mrb[0].mxu0
        %v1554 = vpop.f32.mrb[0].mxu0
        %v1555 = vadd.f32 0.0, %v1554
        %v1556 = vpop.f32.mrb[0].mxu0
        %1557 = vmatprep.mubr.bf16.mxu0 0
        %1558 = vmatmul.mubr.bf16.gmra.mrb[0].mxu0 %v1222
        %v1559 = vpop.f32.mrb[0].mxu0
        %v1560 = vadd.f32 0.0, %v1559
        %v1561 = vpop.f32.mrb[0].mxu0
        %v1562 = vpop.f32.mrb[0].mxu0
        %v1563 = vadd.f32 0.0, %v1562
        %v1564 = vpop.f32.mrb[0].mxu0
        %1565 = vmatprep.mubr.bf16.mxu0 0
        %1566 = vmatmul.mubr.bf16.gmra.mrb[0].mxu0 %v1225
        %v1567 = vpop.f32.mrb[0].mxu0
        %v1568 = vadd.f32 0.0, %v1567
        %v1569 = vpop.f32.mrb[0].mxu0
        %v1570 = vpop.f32.mrb[0].mxu0
        %v1571 = vadd.f32 0.0, %v1570
        %v1572 = vpop.f32.mrb[0].mxu0
        %1573 = vmatprep.mubr.bf16.mxu0 0
        %1574 = vmatmul.mubr.bf16.gmra.mrb[0].mxu0 %v1228
        %v1575 = vpop.f32.mrb[0].mxu0
        %v1576 = vadd.f32 0.0, %v1575
        %v1577 = vpop.f32.mrb[0].mxu0
        %v1578 = vpop.f32.mrb[0].mxu0
        %v1579 = vadd.f32 0.0, %v1578
        %v1580 = vpop.f32.mrb[0].mxu0
        %1581 = vmatprep.mubr.bf16.mxu0 0
        %1582 = vmatmul.mubr.bf16.gmra.mrb[0].mxu0 %v1231
        %v1583 = vpop.f32.mrb[0].mxu0
        %v1584 = vadd.f32 0.0, %v1583
        %v1585 = vpop.f32.mrb[0].mxu0
        %v1586 = vpop.f32.mrb[0].mxu0
        %v1587 = vadd.f32 0.0, %v1586
        %v1588 = vpop.f32.mrb[0].mxu0
        %1589 = vmatprep.mubr.bf16.mxu0 0
        %1590 = vmatmul.mubr.bf16.gmra.mrb[0].mxu0 %v1234
        %v1591 = vpop.f32.mrb[0].mxu0
        %v1592 = vadd.f32 0.0, %v1591
        %v1593 = vpop.f32.mrb[0].mxu0
        %v1594 = vpop.f32.mrb[0].mxu0
        %v1595 = vadd.f32 0.0, %v1594
        %v1596 = vpop.f32.mrb[0].mxu0
        %1597 = vmatprep.mubr.bf16.mxu0 0
        %1598 = vmatmul.mubr.bf16.gmra.mrb[0].mxu0 %v1237
        %v1599 = vpop.f32.mrb[0].mxu0
        %v1600 = vadd.f32 0.0, %v1599
        %v1601 = vpop.f32.mrb[0].mxu0
        %v1602 = vpop.f32.mrb[0].mxu0
        %v1603 = vadd.f32 0.0, %v1602
        %v1604 = vpop.f32.mrb[0].mxu0
        %1605 = vmatprep.mubr.bf16.mxu0 0
        %1606 = vmatmul.mubr.bf16.gmra.mrb[0].mxu0 %v1240
        %v1607 = vpop.f32.mrb[0].mxu0
        %v1608 = vadd.f32 0.0, %v1607
        %v1609 = vpop.f32.mrb[0].mxu0
        %v1610 = vpop.f32.mrb[0].mxu0
        %v1611 = vadd.f32 0.0, %v1610
        %v1612 = vpop.f32.mrb[0].mxu0
        %1613 = vmatprep.mubr.bf16.mxu0 0
        %1614 = vmatmul.mubr.bf16.gmra.mrb[0].mxu0 %v1243
        %v1615 = vpop.f32.mrb[0].mxu0
        %v1616 = vadd.f32 0.0, %v1615
        %v1617 = vpop.f32.mrb[0].mxu0
        %v1618 = vpop.f32.mrb[0].mxu0
        %v1619 = vadd.f32 0.0, %v1618
        %v1620 = vpop.f32.mrb[0].mxu0
        %1621 = vmatprep.mubr.bf16.mxu0 0
        %1622 = vmatmul.mubr.bf16.gmra.mrb[0].mxu0 %v1246
        %v1623 = vpop.f32.mrb[0].mxu0
        %v1624 = vadd.f32 0.0, %v1623
        %v1625 = vpop.f32.mrb[0].mxu0
        %v1626 = vpop.f32.mrb[0].mxu0
        %v1627 = vadd.f32 0.0, %v1626
        %v1628 = vpop.f32.mrb[0].mxu0
        %1629 = vmatprep.mubr.bf16.mxu0 0
        %1630 = vmatmul.mubr.bf16.gmra.mrb[0].mxu0 %v1249
        %v1631 = vpop.f32.mrb[0].mxu0
        %v1632 = vadd.f32 0.0, %v1631
        %v1633 = vpop.f32.mrb[0].mxu0
        %v1634 = vpop.f32.mrb[0].mxu0
        %v1635 = vadd.f32 0.0, %v1634
        %v1636 = vpop.f32.mrb[0].mxu0
        %1637 = vmatprep.mubr.bf16.mxu0 0
        %1638 = vmatmul.mubr.bf16.gmra.mrb[0].mxu0 %v1252
        %v1639 = vpop.f32.mrb[0].mxu0
        %v1640 = vadd.f32 0.0, %v1639
        %v1641 = vpop.f32.mrb[0].mxu0
        %v1642 = vpop.f32.mrb[0].mxu0
        %v1643 = vadd.f32 0.0, %v1642
        %v1644 = vpop.f32.mrb[0].mxu0
        %1645 = vmatprep.mubr.bf16.mxu0 0
        %1646 = vmatmul.mubr.bf16.gmra.mrb[0].mxu0 %v1255
        %v1647 = vpop.f32.mrb[0].mxu0
        %v1648 = vadd.f32 0.0, %v1647
        %v1649 = vpop.f32.mrb[0].mxu0
        %v1650 = vpop.f32.mrb[0].mxu0
        %v1651 = vadd.f32 0.0, %v1650
        %v1652 = vpop.f32.mrb[0].mxu0
        %1653 = vmatprep.mubr.bf16.mxu0 0
        %1654 = vmatmul.mubr.bf16.gmra.mrb[0].mxu0 %v1258
        %v1655 = vpop.f32.mrb[0].mxu0
        %v1656 = vadd.f32 0.0, %v1655
        %v1657 = vpop.f32.mrb[0].mxu0
        %v1658 = vpop.f32.mrb[0].mxu0
        %v1659 = vadd.f32 0.0, %v1658
        %v1660 = vpop.f32.mrb[0].mxu0
        %1661 = vmatprep.mubr.bf16.mxu0 0
        %1662 = vmatmul.mubr.bf16.gmra.mrb[0].mxu0 %v1261
        %v1663 = vpop.f32.mrb[0].mxu0
        %v1664 = vadd.f32 0.0, %v1663
        %v1665 = vpop.f32.mrb[0].mxu0
        %v1666 = vpop.f32.mrb[0].mxu0
        %v1667 = vadd.f32 0.0, %v1666
        %v1668 = vpop.f32.mrb[0].mxu0
        %1669 = vmatprep.mubr.bf16.mxu0 0
        %1670 = vmatmul.mubr.bf16.gmra.mrb[0].mxu0 %v1264
        %v1671 = vpop.f32.mrb[0].mxu0
        %v1672 = vadd.f32 0.0, %v1671
        %v1673 = vpop.f32.mrb[0].mxu0
        %v1674 = vpop.f32.mrb[0].mxu0
        %v1675 = vadd.f32 0.0, %v1674
        %v1676 = vpop.f32.mrb[0].mxu0
        %1677 = vmatprep.mubr.bf16.mxu0 0
        %1678 = vmatmul.mubr.bf16.gmra.mrb[0].mxu0 %v1267
        %v1679 = vpop.f32.mrb[0].mxu0
        %v1680 = vadd.f32 0.0, %v1679
        %v1681 = vpop.f32.mrb[0].mxu0
        %v1682 = vpop.f32.mrb[0].mxu0
        %v1683 = vadd.f32 0.0, %v1682
        %v1684 = vpop.f32.mrb[0].mxu0
        %1685 = vmatprep.mubr.bf16.mxu0 0
        %1686 = vmatmul.mubr.bf16.gmra.mrb[0].mxu0 %v1270
        %v1687 = vpop.f32.mrb[0].mxu0
        %v1688 = vadd.f32 0.0, %v1687
        %v1689 = vpop.f32.mrb[0].mxu0
        %v1690 = vpop.f32.mrb[0].mxu0
        %v1691 = vadd.f32 0.0, %v1690
        %v1692 = vpop.f32.mrb[0].mxu0
        %1693 = vmatprep.mubr.bf16.mxu0 0
        %1694 = vmatmul.mubr.bf16.gmra.mrb[0].mxu0 %v1273
        %v1695 = vpop.f32.mrb[0].mxu0
        %v1696 = vadd.f32 0.0, %v1695
        %v1697 = vpop.f32.mrb[0].mxu0
        %v1698 = vpop.f32.mrb[0].mxu0
        %v1699 = vadd.f32 0.0, %v1698
        %v1700 = vpop.f32.mrb[0].mxu0
        %1701 = vmatprep.mubr.bf16.mxu0 0
        %1702 = vmatmul.mubr.bf16.gmra.mrb[0].mxu0 %v1276
        %v1703 = vpop.f32.mrb[0].mxu0
        %v1704 = vadd.f32 0.0, %v1703
        %v1705 = vpop.f32.mrb[0].mxu0
        %v1706 = vpop.f32.mrb[0].mxu0
        %v1707 = vadd.f32 0.0, %v1706
        %v1708 = vpop.f32.mrb[0].mxu0
        %1709 = vmatprep.mubr.bf16.mxu0 0
        %1710 = vmatmul.mubr.bf16.gmra.mrb[0].mxu0 %v1279
        %v1711 = vpop.f32.mrb[0].mxu0
        %v1712 = vadd.f32 0.0, %v1711
        %v1713 = vpop.f32.mrb[0].mxu0
        %v1714 = vpop.f32.mrb[0].mxu0
        %v1715 = vadd.f32 0.0, %v1714
        %v1716 = vpop.f32.mrb[0].mxu0
        %1717 = vmatprep.mubr.bf16.mxu0 0
        %1718 = vmatmul.mubr.bf16.gmra.mrb[0].mxu0 %v1282
        %v1719 = vpop.f32.mrb[0].mxu0
        %v1720 = vadd.f32 0.0, %v1719
        %v1721 = vpop.f32.mrb[0].mxu0
        %v1722 = vpop.f32.mrb[0].mxu0
        %v1723 = vadd.f32 0.0, %v1722
        %v1724 = vpop.f32.mrb[0].mxu0
        %1725 = vmatprep.mubr.bf16.mxu0 0
        %1726 = vmatmul.mubr.bf16.gmra.mrb[0].mxu0 %v1285
        %v1727 = vpop.f32.mrb[0].mxu0
        %v1728 = vadd.f32 0.0, %v1727
        %v1729 = vpop.f32.mrb[0].mxu0
        %v1730 = vpop.f32.mrb[0].mxu0
        %v1731 = vadd.f32 0.0, %v1730
        %v1732 = vpop.f32.mrb[0].mxu0
        %1733 = vmatprep.mubr.bf16.mxu0 0
        %1734 = vmatmul.mubr.bf16.gmra.mrb[0].mxu0 %v1288
        %v1735 = vpop.f32.mrb[0].mxu0
        %v1736 = vadd.f32 0.0, %v1735
        %v1737 = vpop.f32.mrb[0].mxu0
        %v1738 = vpop.f32.mrb[0].mxu0
        %v1739 = vadd.f32 0.0, %v1738
        %v1740 = vpop.f32.mrb[0].mxu0
        %1741 = vmatprep.mubr.bf16.mxu0 0
        %1742 = vmatmul.mubr.bf16.gmra.mrb[0].mxu0 %v1291
        %v1743 = vpop.f32.mrb[0].mxu0
        %v1744 = vadd.f32 0.0, %v1743
        %v1745 = vpop.f32.mrb[0].mxu0
        %v1746 = vpop.f32.mrb[0].mxu0
        %v1747 = vadd.f32 0.0, %v1746
        %v1748 = vpop.f32.mrb[0].mxu0
        %1749 = vmatprep.mubr.bf16.mxu0 0
        %1750 = vmatmul.mubr.bf16.gmra.mrb[0].mxu0 %v1294
        %v1751 = vpop.f32.mrb[0].mxu0
        %v1752 = vadd.f32 0.0, %v1751
        %v1753 = vpop.f32.mrb[0].mxu0
        %v1754 = vpop.f32.mrb[0].mxu0
        %v1755 = vadd.f32 0.0, %v1754
        %v1756 = vpop.f32.mrb[0].mxu0
        %1757 = vmatprep.mubr.bf16.mxu0 0
        %1758 = vmatmul.mubr.bf16.gmra.mrb[0].mxu0 %v1297
        %v1759 = vpop.f32.mrb[0].mxu0
        %v1760 = vadd.f32 0.0, %v1759
        %v1761 = vpop.f32.mrb[0].mxu0
        %v1762 = vpop.f32.mrb[0].mxu0
        %v1763 = vadd.f32 0.0, %v1762
        %v1764 = vpop.f32.mrb[0].mxu0
        %1765 = vmatprep.mubr.bf16.mxu0 0
        %1766 = vmatmul.mubr.bf16.gmra.mrb[0].mxu0 %v1300
        %v1767 = vpop.f32.mrb[0].mxu0
        %v1768 = vadd.f32 0.0, %v1767
        %v1769 = vpop.f32.mrb[0].mxu0
        %v1770 = vpop.f32.mrb[0].mxu0
        %v1771 = vadd.f32 0.0, %v1770
        %v1772 = vpop.f32.mrb[0].mxu0
        %1773 = vmatprep.mubr.bf16.mxu0 0
        %1774 = vmatmul.mubr.bf16.gmra.mrb[0].mxu0 %v1303
        %v1775 = vpop.f32.mrb[0].mxu0
        %v1776 = vadd.f32 0.0, %v1775
        %v1777 = vpop.f32.mrb[0].mxu0
        %v1778 = vpop.f32.mrb[0].mxu0
        %v1779 = vadd.f32 0.0, %v1778
        %v1780 = vpop.f32.mrb[0].mxu0
        %1781 = vmatprep.mubr.bf16.mxu0 0
        %1782 = vmatmul.mubr.bf16.gmra.mrb[0].mxu0 %v1306
        %v1783 = vpop.f32.mrb[0].mxu0
        %v1784 = vadd.f32 0.0, %v1783
        %v1785 = vpop.f32.mrb[0].mxu0
        %v1786 = vpop.f32.mrb[0].mxu0
        %v1787 = vadd.f32 0.0, %v1786
        %v1788 = vpop.f32.mrb[0].mxu0
        %1789 = vmatprep.mubr.bf16.mxu0 0
        %1790 = vmatmul.mubr.bf16.gmra.mrb[0].mxu0 %v1309
        %v1791 = vpop.f32.mrb[0].mxu0
        %v1792 = vadd.f32 0.0, %v1791
        %v1793 = vpop.f32.mrb[0].mxu0
        %v1794 = vpop.f32.mrb[0].mxu0
        %v1795 = vadd.f32 0.0, %v1794
        %v1796 = vpop.f32.mrb[0].mxu0
        %1797 = vmatprep.mubr.bf16.mxu0 0
        %1798 = vmatmul.mubr.bf16.gmra.mrb[0].mxu0 %v1312
        %v1799 = vpop.f32.mrb[0].mxu0
        %v1800 = vadd.f32 0.0, %v1799
        %v1801 = vpop.f32.mrb[0].mxu0
        %v1802 = vpop.f32.mrb[0].mxu0
        %v1803 = vadd.f32 0.0, %v1802
        %v1804 = vpop.f32.mrb[0].mxu0
        %1805 = vmatprep.mubr.bf16.mxu0 0
        %1806 = vmatmul.mubr.bf16.gmra.mrb[0].mxu0 %v1315
        %v1807 = vpop.f32.mrb[0].mxu0
        %v1808 = vadd.f32 0.0, %v1807
        %v1809 = vpop.f32.mrb[0].mxu0
        %v1810 = vpop.f32.mrb[0].mxu0
        %v1811 = vadd.f32 0.0, %v1810
        %v1812 = vpop.f32.mrb[0].mxu0
        %1813 = vmatprep.mubr.bf16.mxu0 0
        %1814 = vmatmul.mubr.bf16.gmra.mrb[0].mxu0 %v1318
        %v1815 = vpop.f32.mrb[0].mxu0
        %v1816 = vadd.f32 0.0, %v1815
        %v1817 = vpop.f32.mrb[0].mxu0
        %v1818 = vpop.f32.mrb[0].mxu0
        %v1819 = vadd.f32 0.0, %v1818
        %v1820 = vpop.f32.mrb[0].mxu0
        %1821 = vmatprep.mubr.bf16.mxu0 0
        %1822 = vmatmul.mubr.bf16.gmra.mrb[0].mxu0 %v1321
        %v1823 = vpop.f32.mrb[0].mxu0
        %v1824 = vadd.f32 0.0, %v1823
        %v1825 = vpop.f32.mrb[0].mxu0
        %v1826 = vpop.f32.mrb[0].mxu0
        %v1827 = vadd.f32 0.0, %v1826
        %v1828 = vpop.f32.mrb[0].mxu0
        %1829 = vmatprep.mubr.bf16.mxu0 0
        %1830 = vmatmul.mubr.bf16.gmra.mrb[0].mxu0 %v1324
        %v1831 = vpop.f32.mrb[0].mxu0
        %v1832 = vadd.f32 0.0, %v1831
        %v1833 = vpop.f32.mrb[0].mxu0
        %v1834 = vpop.f32.mrb[0].mxu0
        %v1835 = vadd.f32 0.0, %v1834
        %v1836 = vpop.f32.mrb[0].mxu0
        %1837 = vmatprep.mubr.bf16.mxu0 0
        %1838 = vmatmul.mubr.bf16.gmra.mrb[0].mxu0 %v1327
        %v1839 = vpop.f32.mrb[0].mxu0
        %v1840 = vadd.f32 0.0, %v1839
        %v1841 = vpop.f32.mrb[0].mxu0
        %v1842 = vpop.f32.mrb[0].mxu0
        %v1843 = vadd.f32 0.0, %v1842
        %v1844 = vpop.f32.mrb[0].mxu0
        %1845 = vdwg.mxu0
        %v1846 = vmax.f32 %v1368, %v1488
        %v1847 = vmax.f32 %v1371, %v1491
        %v1848 = vmax.f32 %v1376, %v1496
        %v1849 = vmax.f32 %v1379, %v1499
        %v1850 = vmax.f32 %v1384, %v1504
        %v1851 = vmax.f32 %v1387, %v1507
        %v1852 = vmax.f32 %v1392, %v1512
        %v1853 = vmax.f32 %v1395, %v1515
        %v1854 = vmax.f32 %v1400, %v1520
        %v1855 = vmax.f32 %v1403, %v1523
        %v1856 = vmax.f32 %v1408, %v1528
        %v1857 = vmax.f32 %v1411, %v1531
        %v1858 = vmax.f32 %v1416, %v1536
        %v1859 = vmax.f32 %v1419, %v1539
        %v1860 = vmax.f32 %v1424, %v1544
        %v1861 = vmax.f32 %v1427, %v1547
        %v1862 = vmax.f32 %v1432, %v1552
        %v1863 = vmax.f32 %v1435, %v1555
        %v1864 = vmax.f32 %v1440, %v1560
        %v1865 = vmax.f32 %v1443, %v1563
        %v1866 = vmax.f32 %v1448, %v1568
        %v1867 = vmax.f32 %v1451, %v1571
        %v1868 = vmax.f32 %v1456, %v1576
        %v1869 = vmax.f32 %v1459, %v1579
        %v1870 = vmax.f32 %v1464, %v1584
        %v1871 = vmax.f32 %v1467, %v1587
        %v1872 = vmax.f32 %v1472, %v1592
        %v1873 = vmax.f32 %v1475, %v1595
        %v1874 = vmax.f32 %v1480, %v1600
        %v1875 = vmax.f32 %v1483, %v1603
        %v1876 = vmax.f32 %v1846, %v1608
        %v1877 = vmax.f32 %v1847, %v1611
        %v1878 = vmax.f32 %v1848, %v1616
        %v1879 = vmax.f32 %v1849, %v1619
        %v1880 = vmax.f32 %v1850, %v1624
        %v1881 = vmax.f32 %v1851, %v1627
        %v1882 = vmax.f32 %v1852, %v1632
        %v1883 = vmax.f32 %v1853, %v1635
        %v1884 = vmax.f32 %v1854, %v1640
        %v1885 = vmax.f32 %v1855, %v1643
        %v1886 = vmax.f32 %v1856, %v1648
        %v1887 = vmax.f32 %v1857, %v1651
        %v1888 = vmax.f32 %v1858, %v1656
        %v1889 = vmax.f32 %v1859, %v1659
        %v1890 = vmax.f32 %v1860, %v1664
        %v1891 = vmax.f32 %v1861, %v1667
        %v1892 = vmax.f32 %v1862, %v1672
        %v1893 = vmax.f32 %v1863, %v1675
        %v1894 = vmax.f32 %v1864, %v1680
        %v1895 = vmax.f32 %v1865, %v1683
        %v1896 = vmax.f32 %v1866, %v1688
        %v1897 = vmax.f32 %v1867, %v1691
        %v1898 = vmax.f32 %v1868, %v1696
        %v1899 = vmax.f32 %v1869, %v1699
        %v1900 = vmax.f32 %v1870, %v1704
        %v1901 = vmax.f32 %v1871, %v1707
        %v1902 = vmax.f32 %v1872, %v1712
        %v1903 = vmax.f32 %v1873, %v1715
        %v1904 = vmax.f32 %v1874, %v1720
        %v1905 = vmax.f32 %v1875, %v1723
        %v1906 = vmax.f32 %v1876, %v1728
        %v1907 = vmax.f32 %v1877, %v1731
        %v1908 = vmax.f32 %v1878, %v1736
        %v1909 = vmax.f32 %v1879, %v1739
        %v1910 = vmax.f32 %v1880, %v1744
        %v1911 = vmax.f32 %v1881, %v1747
        %v1912 = vmax.f32 %v1882, %v1752
        %v1913 = vmax.f32 %v1883, %v1755
        %v1914 = vmax.f32 %v1884, %v1760
        %v1915 = vmax.f32 %v1885, %v1763
        %v1916 = vmax.f32 %v1886, %v1768
        %v1917 = vmax.f32 %v1887, %v1771
        %v1918 = vmax.f32 %v1888, %v1776
        %v1919 = vmax.f32 %v1889, %v1779
        %v1920 = vmax.f32 %v1890, %v1784
        %v1921 = vmax.f32 %v1891, %v1787
        %v1922 = vmax.f32 %v1892, %v1792
        %v1923 = vmax.f32 %v1893, %v1795
        %v1924 = vmax.f32 %v1894, %v1800
        %v1925 = vmax.f32 %v1895, %v1803
        %v1926 = vmax.f32 %v1896, %v1808
        %v1927 = vmax.f32 %v1897, %v1811
        %v1928 = vmax.f32 %v1898, %v1816
        %v1929 = vmax.f32 %v1899, %v1819
        %v1930 = vmax.f32 %v1900, %v1824
        %v1931 = vmax.f32 %v1901, %v1827
        %v1932 = vmax.f32 %v1902, %v1832
        %v1933 = vmax.f32 %v1903, %v1835
        %v1934 = vmax.f32 %v1904, %v1840
        %v1935 = vmax.f32 %v1905, %v1843
        %v1936 = vld [vmem:[%s2] sm:$0x1]
        %v1938 = vlaneseq
        %v1939 = vshrl.u32 %v1938, 7
        %v1940 = vsub.s32 0, %v1939
        %v1941 = vrot.slane %v1936, %v1940
        %v1943 = vadd.f32 %v1906, %v1941
        %v1944 = vadd.f32 %v1907, %v1941
        %v1945 = vadd.f32 %v1908, %v1941
        %v1946 = vadd.f32 %v1909, %v1941
        %v1947 = vadd.f32 %v1910, %v1941
        %v1948 = vadd.f32 %v1911, %v1941
        %v1949 = vadd.f32 %v1912, %v1941
        %v1950 = vadd.f32 %v1913, %v1941
        %v1951 = vadd.f32 %v1914, %v1941
        %v1952 = vadd.f32 %v1915, %v1941
        %v1953 = vadd.f32 %v1916, %v1941
        %v1954 = vadd.f32 %v1917, %v1941
        %v1955 = vadd.f32 %v1918, %v1941
        %v1956 = vadd.f32 %v1919, %v1941
        %v1957 = vadd.f32 %v1920, %v1941
        %v1958 = vadd.f32 %v1921, %v1941
        %v1959 = vadd.f32 %v1922, %v1941
        %v1960 = vadd.f32 %v1923, %v1941
        %v1961 = vadd.f32 %v1924, %v1941
        %v1962 = vadd.f32 %v1925, %v1941
        %v1963 = vadd.f32 %v1926, %v1941
        %v1964 = vadd.f32 %v1927, %v1941
        %v1965 = vadd.f32 %v1928, %v1941
        %v1966 = vadd.f32 %v1929, %v1941
        %v1967 = vadd.f32 %v1930, %v1941
        %v1968 = vadd.f32 %v1931, %v1941
        %v1969 = vadd.f32 %v1932, %v1941
        %v1970 = vadd.f32 %v1933, %v1941
        %v1971 = vadd.f32 %v1934, %v1941
        %v1972 = vadd.f32 %v1935, %v1941
        %v1973 = vmax.f32 %v1943, 0.0
        %v1974 = vmax.f32 %v1944, 0.0
        %v1975 = vmax.f32 %v1945, 0.0
        %v1976 = vmax.f32 %v1946, 0.0
        %v1977 = vmax.f32 %v1947, 0.0
        %v1978 = vmax.f32 %v1948, 0.0
        %v1979 = vmax.f32 %v1949, 0.0
        %v1980 = vmax.f32 %v1950, 0.0
        %v1981 = vmax.f32 %v1951, 0.0
        %v1982 = vmax.f32 %v1952, 0.0
        %v1983 = vmax.f32 %v1953, 0.0
        %v1984 = vmax.f32 %v1954, 0.0
        %v1985 = vmax.f32 %v1955, 0.0
        %v1986 = vmax.f32 %v1956, 0.0
        %v1987 = vmax.f32 %v1957, 0.0
        %v1988 = vmax.f32 %v1958, 0.0
        %v1989 = vmax.f32 %v1959, 0.0
        %v1990 = vmax.f32 %v1960, 0.0
        %v1991 = vmax.f32 %v1961, 0.0
        %v1992 = vmax.f32 %v1962, 0.0
        %v1993 = vmax.f32 %v1963, 0.0
        %v1994 = vmax.f32 %v1964, 0.0
        %v1995 = vmax.f32 %v1965, 0.0
        %v1996 = vmax.f32 %v1966, 0.0
        %v1997 = vmax.f32 %v1967, 0.0
        %v1998 = vmax.f32 %v1968, 0.0
        %v1999 = vmax.f32 %v1969, 0.0
        %v2000 = vmax.f32 %v1970, 0.0
        %v2001 = vmax.f32 %v1971, 0.0
        %v2002 = vmax.f32 %v1972, 0.0
        %v2003 = vpack.c.bf16 %v1974, %v1973
        %v2004 = vpack.c.bf16 %v1976, %v1975
        %v2005 = vpack.c.bf16 %v1978, %v1977
        %v2006 = vpack.c.bf16 %v1980, %v1979
        %v2007 = vpack.c.bf16 %v1982, %v1981
        %v2008 = vpack.c.bf16 %v1984, %v1983
        %v2009 = vpack.c.bf16 %v1986, %v1985
        %v2010 = vpack.c.bf16 %v1988, %v1987
        %v2011 = vpack.c.bf16 %v1990, %v1989
        %v2012 = vpack.c.bf16 %v1992, %v1991
        %v2013 = vpack.c.bf16 %v1994, %v1993
        %v2014 = vpack.c.bf16 %v1996, %v1995
        %v2015 = vpack.c.bf16 %v1998, %v1997
        %v2016 = vpack.c.bf16 %v2000, %v1999
        %v2017 = vpack.c.bf16 %v2002, %v2001
        %v2033 = vunpack.c.l.b16 %v2003
        %v2034 = vunpack.c.h.b16 %v2003
        %v2035 = vunpack.c.l.b16 %v2004
        %v2036 = vunpack.c.h.b16 %v2004
        %v2037 = vunpack.c.l.b16 %v2005
        %v2038 = vunpack.c.h.b16 %v2005
        %v2039 = vunpack.c.l.b16 %v2006
        %v2040 = vunpack.c.h.b16 %v2006
        %v2041 = vunpack.c.l.b16 %v2007
        %v2042 = vunpack.c.h.b16 %v2007
        %v2043 = vunpack.c.l.b16 %v2008
        %v2044 = vunpack.c.h.b16 %v2008
        %v2045 = vunpack.c.l.b16 %v2009
        %v2046 = vunpack.c.h.b16 %v2009
        %v2047 = vunpack.c.l.b16 %v2010
        %v2048 = vunpack.c.h.b16 %v2010
        %v2049 = vunpack.c.l.b16 %v2011
        %v2050 = vunpack.c.h.b16 %v2011
        %v2051 = vunpack.c.l.b16 %v2012
        %v2052 = vunpack.c.h.b16 %v2012
        %v2053 = vunpack.c.l.b16 %v2013
        %v2054 = vunpack.c.h.b16 %v2013
        %v2055 = vunpack.c.l.b16 %v2014
        %v2056 = vunpack.c.h.b16 %v2014
        %v2057 = vunpack.c.l.b16 %v2015
        %v2058 = vunpack.c.h.b16 %v2015
        %v2059 = vunpack.c.l.b16 %v2016
        %v2060 = vunpack.c.h.b16 %v2016
        %v2061 = vunpack.c.l.b16 %v2017
        %v2062 = vunpack.c.h.b16 %v2017
        %v2063 = vpack.c.b16 %v2033, %v2033
        %v2064 = vpack.c.b16 %v2034, %v2034
        %v2065 = vpack.c.b16 %v2035, %v2035
        %v2066 = vpack.c.b16 %v2036, %v2036
        %v2067 = vpack.c.b16 %v2037, %v2037
        %v2068 = vpack.c.b16 %v2038, %v2038
        %v2069 = vpack.c.b16 %v2039, %v2039
        %v2070 = vpack.c.b16 %v2040, %v2040
        %v2071 = vpack.c.b16 %v2041, %v2041
        %v2072 = vpack.c.b16 %v2042, %v2042
        %v2073 = vpack.c.b16 %v2043, %v2043
        %v2074 = vpack.c.b16 %v2044, %v2044
        %v2075 = vpack.c.b16 %v2045, %v2045
        %v2076 = vpack.c.b16 %v2046, %v2046
        %v2077 = vpack.c.b16 %v2047, %v2047
        %v2078 = vpack.c.b16 %v2048, %v2048
        %v2079 = vpack.c.b16 %v2049, %v2049
        %v2080 = vpack.c.b16 %v2050, %v2050
        %v2081 = vpack.c.b16 %v2051, %v2051
        %v2082 = vpack.c.b16 %v2052, %v2052
        %v2083 = vpack.c.b16 %v2053, %v2053
        %v2084 = vpack.c.b16 %v2054, %v2054
        %v2085 = vpack.c.b16 %v2055, %v2055
        %v2086 = vpack.c.b16 %v2056, %v2056
        %v2087 = vpack.c.b16 %v2057, %v2057
        %v2088 = vpack.c.b16 %v2058, %v2058
        %v2089 = vpack.c.b16 %v2059, %v2059
        %v2090 = vpack.c.b16 %v2060, %v2060
        %v2091 = vpack.c.b16 %v2061, %v2061
        %v2092 = vpack.c.b16 %v2062, %v2062
        %2123 = vst [vmem:[%s689] sm:$0xf] %v2063
        %2124 = vst [vmem:[%s689 + $0x4] sm:$0xf] %v2064
        %2125 = vst [vmem:[%s689 + $0x8] sm:$0xf] %v2065
        %2126 = vst [vmem:[%s689 + $0xc] sm:$0xf] %v2066
        %2127 = vst [vmem:[%s689 + $0x10] sm:$0xf] %v2067
        %2128 = vst [vmem:[%s689 + $0x14] sm:$0xf] %v2068
        %2129 = vst [vmem:[%s689 + $0x18] sm:$0xf] %v2069
        %2130 = vst [vmem:[%s689 + $0x1c] sm:$0xf] %v2070
        %2131 = vst [vmem:[%s689 + $0x20] sm:$0xf] %v2071
        %2132 = vst [vmem:[%s689 + $0x24] sm:$0xf] %v2072
        %2133 = vst [vmem:[%s689 + $0x28] sm:$0xf] %v2073
        %2134 = vst [vmem:[%s689 + $0x2c] sm:$0xf] %v2074
        %2135 = vst [vmem:[%s689 + $0x30] sm:$0xf] %v2075
        %2136 = vst [vmem:[%s689 + $0x34] sm:$0xf] %v2076
        %2137 = vst [vmem:[%s689 + $0x38] sm:$0xf] %v2077
        %2138 = vst [vmem:[%s689 + $0x3c] sm:$0xf] %v2078
        %2139 = vst [vmem:[%s689 + $0x40] sm:$0xf] %v2079
        %2140 = vst [vmem:[%s689 + $0x44] sm:$0xf] %v2080
        %2141 = vst [vmem:[%s689 + $0x48] sm:$0xf] %v2081
        %2142 = vst [vmem:[%s689 + $0x4c] sm:$0xf] %v2082
        %2143 = vst [vmem:[%s689 + $0x50] sm:$0xf] %v2083
        %2144 = vst [vmem:[%s689 + $0x54] sm:$0xf] %v2084
        %2145 = vst [vmem:[%s689 + $0x58] sm:$0xf] %v2085
        %2146 = vst [vmem:[%s689 + $0x5c] sm:$0xf] %v2086
        %2147 = vst [vmem:[%s689 + $0x60] sm:$0xf] %v2087
        %2148 = vst [vmem:[%s689 + $0x64] sm:$0xf] %v2088
        %2149 = vst [vmem:[%s689 + $0x68] sm:$0xf] %v2089
        %2150 = vst [vmem:[%s689 + $0x6c] sm:$0xf] %v2090
        %2151 = vst [vmem:[%s689 + $0x70] sm:$0xf] %v2091
        %2152 = vst [vmem:[%s689 + $0x74] sm:$0xf] %v2092
        %s2153 = smul.u32 30, %s14
        %p2154 = scmp.lt.s32.totalorder %s2153, 59
        %s2155 = scalar_select %p2154, %s2153, 59
        %s2156 = smul.addr %s2155, 4
        %s2157 = scalar_lea.vmem %s3, %s2156
        // Predicated region
        $region74: #{cnn_cifar100_forward.4} parent=68 // pred_check
          %p2158 = pneg %p100
        $region75: #{cnn_cifar100_forward.4} parent=68 // pred_check_branch
          %2160 = sbr.rel (%p2158) target = $region77
        $region76: #{cnn_cifar100_forward.4} parent=68 // pred_region
          %s2161 = smul.u32 30, %s14
        $region77: #{cnn_cifar100_forward.4} parent=68 // pred_fallthru
          _
      $region69: #{cnn_cifar100_forward.4} parent=5 // pred_fallthru
        _
      %p2162 = scmp.le.s32.totalorder 2, %s9
      // Predicated region
      $region78: #{cnn_cifar100_forward.4} parent=5 // pred_check
        %p2163 = pneg %p2162
      $region79: #{cnn_cifar100_forward.4} parent=5 // pred_check_branch
        %2165 = sbr.rel (%p2163) target = $region81
      $region80: #{cnn_cifar100_forward.4} parent=5 // pred_region
        %s2166 = ssub.s32 %s9, 2
        // Predicated region
        $region82: #{cnn_cifar100_forward.4} parent=80 // pred_check
          %p2167 = pneg %p106
        $region83: #{cnn_cifar100_forward.4} parent=80 // pred_check_branch
          %2169 = sbr.rel (%p2167) target = $region85
        $region84: #{cnn_cifar100_forward.4} parent=80 // pred_region
          %s2170 = smul.u32 30, %s15
          %p2171 = scmp.lt.s32.totalorder %s2170, 59
          %s2172 = scalar_select %p2171, %s2170, 59
          %s2173 = smul.addr %s2172, 4
          %s2174 = scalar_lea.vmem %s3, %s2173
        $region85: #{cnn_cifar100_forward.4} parent=80 // pred_fallthru
          _
      $region81: #{cnn_cifar100_forward.4} parent=5 // pred_fallthru
        _
    $region6: #{cnn_cifar100_forward.4} parent=1 // loop_footer
      %s13 = sadd.s32 1, %s9
    $region7: #{cnn_cifar100_forward.4} parent=1 // loop_footer_branch
      %8 = sbr.rel target = $region3
    $region8: #{cnn_cifar100_forward.4} parent=1 // loop_exit
      _

// kernel: cnn_cifar100_forward.5
$region0: #{cnn_cifar100_forward.5}
  #allocation0 [shape = 'u32[]', space=smem, size = 0x4, offset = 0x4, fixed_abs, tag = 'smem constant byte address 0x4 - core index']
  #allocation1 [shape = 'u32[144,128]{1,0:T(1,128)}', space=vmem, size = 0x12000, scoped, tag = 'internal scratch']
  %s0 = inlined_call_operand.vmem [shape: bf16[4,96,288], index: 0, kind: input, shape index: {}]
  %s1 = inlined_call_operand.vmem [shape: bf16[288,128], index: 1, kind: input, shape index: {}]
  %s2 = inlined_call_operand.vmem [shape: f32[1,128], index: 2, kind: input, shape index: {}]
  %s3 = inlined_call_operand.vmem [shape: bf16[96,128], index: 3, kind: output, shape index: {}]
  %s4 = sld [smem:[#allocation0]]
  $region71: #{cnn_cifar100_forward.5} parent=0
    _
  %s6 = ssub.s32 1, %s4
  %s7 = scalar_select 0, %s6, %s4
  $region1: #{cnn_cifar100_forward.5} parent=0
    #allocation2 [shape = 'u8[294912]{0}', space=vmem, size = 0x48000, scoped, tag = 'input window, operand 0']
    loop: start=0, step=1, limit=4
    $region2: #{cnn_cifar100_forward.5} parent=1 // loop_pre_header
      _
    $region3: #{cnn_cifar100_forward.5} parent=1 // loop_header
      %s9 = sphi 0, %s13
      %p10 = scmp.ge.s32.totalorder %s9, 4
      %s19 = sphi 0, %s21
      %s22 = sphi 0, %s19
      %s23 = sphi 0, %s22
      %s39 = sphi 0, %s23
      %s43 = sphi 0, %s43
      %s45 = sphi 0, %s43
      %s46 = sphi 0, %s45
      %s60 = sphi 0, %s46
      %s64 = sphi 0, %s64
      %s66 = sphi 0, %s64
      %s67 = sphi 0, %s66
      %s81 = sphi 0, %s67
      %s87 = sphi 0, %s89
      %s90 = sphi 0, %s87
      %s91 = sphi 0, %s90
      %s107 = sphi 0, %s91
    $region4: #{cnn_cifar100_forward.5} parent=1 // loop_header_branch
      %12 = sbr.rel (%p10) target = $region8
    $region5: #{cnn_cifar100_forward.5} parent=1 // loop_body
      %s14 = ssub.s32 %s9, 1
      %s15 = ssub.s32 %s9, 2
      %s16 = sadd.s32 %s9, 1
      %s17 = ssub.s32 %s9, %s16
      %p18 = scmp.eq.s32.totalorder %s17, 0
      %s20 = sadd.s32 %s19, 1
      %s21 = scalar_select %p18, %s19, %s20
      %p24 = pneg %p18
      %p25 = scmp.eq.s32.totalorder %s9, 1
      %p26 = por %p24, %p25
      %p27 = scmp.ne.s32.totalorder %s19, %s22
      %p28 = scmp.eq.s32.totalorder %s9, 0
      %p29 = por %p27, %p28
      %p30 = scmp.ne.s32.totalorder %s19, %s22
      %p31 = scmp.eq.s32.totalorder %s14, 1
      %p32 = por %p30, %p31
      %p33 = scmp.ne.s32.totalorder %s22, %s23
      %p34 = scmp.eq.s32.totalorder %s14, 0
      %p35 = por %p33, %p34
      %p36 = scmp.ne.s32.totalorder %s22, %s23
      %p37 = scmp.eq.s32.totalorder %s15, 1
      %p38 = por %p36, %p37
      %p40 = scmp.ne.s32.totalorder %s23, %s39
      %p41 = scmp.eq.s32.totalorder %s15, 0
      %p42 = por %p40, %p41
      %s44 = sadd.s32 %s43, 1
      %p47 = scmp.eq.s32.totalorder %s9, 1
      %p48 = scmp.ne.s32.totalorder %s43, %s45
      %p49 = scmp.eq.s32.totalorder %s9, 0
      %p50 = por %p48, %p49
      %p51 = scmp.ne.s32.totalorder %s43, %s45
      %p52 = scmp.eq.s32.totalorder %s14, 1
      %p53 = por %p51, %p52
      %p54 = scmp.ne.s32.totalorder %s45, %s46
      %p55 = scmp.eq.s32.totalorder %s14, 0
      %p56 = por %p54, %p55
      %p57 = scmp.ne.s32.totalorder %s45, %s46
      %p58 = scmp.eq.s32.totalorder %s15, 1
      %p59 = por %p57, %p58
      %p61 = scmp.ne.s32.totalorder %s46, %s60
      %p62 = scmp.eq.s32.totalorder %s15, 0
      %p63 = por %p61, %p62
      %s65 = sadd.s32 %s64, 1
      %p68 = scmp.eq.s32.totalorder %s9, 1
      %p69 = scmp.ne.s32.totalorder %s64, %s66
      %p70 = scmp.eq.s32.totalorder %s9, 0
      %p71 = por %p69, %p70
      %p72 = scmp.ne.s32.totalorder %s64, %s66
      %p73 = scmp.eq.s32.totalorder %s14, 1
      %p74 = por %p72, %p73
      %p75 = scmp.ne.s32.totalorder %s66, %s67
      %p76 = scmp.eq.s32.totalorder %s14, 0
      %p77 = por %p75, %p76
      %p78 = scmp.ne.s32.totalorder %s66, %s67
      %p79 = scmp.eq.s32.totalorder %s15, 1
      %p80 = por %p78, %p79
      %p82 = scmp.ne.s32.totalorder %s67, %s81
      %p83 = scmp.eq.s32.totalorder %s15, 0
      %p84 = por %p82, %p83
      %s85 = ssub.s32 %s9, %s16
      %p86 = scmp.eq.s32.totalorder %s85, 0
      %s88 = sadd.s32 %s87, 1
      %s89 = scalar_select %p86, %s87, %s88
      %p92 = pneg %p86
      %p93 = scmp.eq.s32.totalorder %s9, 1
      %p94 = por %p92, %p93
      %p95 = scmp.ne.s32.totalorder %s87, %s90
      %p96 = scmp.eq.s32.totalorder %s9, 0
      %p97 = por %p95, %p96
      %p98 = scmp.ne.s32.totalorder %s87, %s90
      %p99 = scmp.eq.s32.totalorder %s14, 1
      %p100 = por %p98, %p99
      %p101 = scmp.ne.s32.totalorder %s90, %s91
      %p102 = scmp.eq.s32.totalorder %s14, 0
      %p103 = por %p101, %p102
      %p104 = scmp.ne.s32.totalorder %s90, %s91
      %p105 = scmp.eq.s32.totalorder %s15, 1
      %p106 = por %p104, %p105
      %p108 = scmp.ne.s32.totalorder %s91, %s107
      %p109 = scmp.eq.s32.totalorder %s15, 0
      %p110 = por %p108, %p109
      %p111 = scmp.le.s32.totalorder 1, %s9
      %p112 = scmp.lt.s32.totalorder %s9, 3
      %p113 = pnand %p111, %p112
      %p114 = pneg %p113
      // Predicated region
      $region9: #{cnn_cifar100_forward.5} parent=5 // pred_check
        _
      $region10: #{cnn_cifar100_forward.5} parent=5 // pred_check_branch
        %116 = sbr.rel (%p113) target = $region12
      $region11: #{cnn_cifar100_forward.5} parent=5 // pred_region
        %s117 = ssub.s32 %s9, 1
        // Predicated region
        $region13: #{cnn_cifar100_forward.5} parent=11 // pred_check
          %p118 = pneg %p56
        $region14: #{cnn_cifar100_forward.5} parent=11 // pred_check_branch
          %120 = sbr.rel (%p118) target = $region16
        $region15: #{cnn_cifar100_forward.5} parent=11 // pred_region
          _
        $region16: #{cnn_cifar100_forward.5} parent=11 // pred_fallthru
          _
        // Predicated region
        $region17: #{cnn_cifar100_forward.5} parent=11 // pred_check
          %p121 = pneg %p77
        $region18: #{cnn_cifar100_forward.5} parent=11 // pred_check_branch
          %123 = sbr.rel (%p121) target = $region20
        $region19: #{cnn_cifar100_forward.5} parent=11 // pred_region
          _
        $region20: #{cnn_cifar100_forward.5} parent=11 // pred_fallthru
          _
      $region12: #{cnn_cifar100_forward.5} parent=5 // pred_fallthru
        _
      %p124 = scmp.lt.s32.totalorder %s9, 2
      // Predicated region
      $region21: #{cnn_cifar100_forward.5} parent=5 // pred_check
        %p125 = pneg %p124
      $region22: #{cnn_cifar100_forward.5} parent=5 // pred_check_branch
        %127 = sbr.rel (%p125) target = $region24
      $region23: #{cnn_cifar100_forward.5} parent=5 // pred_region
        // Predicated region
        $region25: #{cnn_cifar100_forward.5} parent=23 // pred_check
          %p128 = pneg %p29
        $region26: #{cnn_cifar100_forward.5} parent=23 // pred_check_branch
          %130 = sbr.rel (%p128) target = $region28
        $region27: #{cnn_cifar100_forward.5} parent=23 // pred_region
          %s131 = sand.u32 %s19, 1
          %s132 = sand.u32 %s19, 1
          %s133 = smul.addr %s132, 288
          %s134 = scalar_lea.vmem [#allocation2], %s133
          %s135 = smul.u32 6, %s9
          %s136 = smul.addr %s135, 3
          %s137 = smul.addr %s136, 4
          %s138 = scalar_lea.vmem %s0, %s137
          // Predicated region
          $region29: #{cnn_cifar100_forward.5} parent=27 // pred_check
            _
          $region30: #{cnn_cifar100_forward.5} parent=27 // pred_check_branch
            %140 = sbr.rel (0) target = $region32
          $region31: #{cnn_cifar100_forward.5} parent=27 // pred_region
            // Predicated region
            $region33: #{cnn_cifar100_forward.5} parent=31 // pred_check
              _
            $region34: #{cnn_cifar100_forward.5} parent=31 // pred_check_branch
              %142 = sbr.rel (0) target = $region36
            $region35: #{cnn_cifar100_forward.5} parent=31 // pred_region
              %s143 = scalar_lea.vmem %s138, 8
              %s144 = scalar_lea.vmem %s134, 8 [#allocation2]
              loop: start=0, step=1, limit=1
              $region37: #{cnn_cifar100_forward.5} parent=35 // loop_pre_header
                _
              $region38: #{cnn_cifar100_forward.5} parent=35 // loop_header
                %s146 = sphi 0, %s150
                %p147 = scmp.ge.s32.totalorder %s146, 1
                %s151 = sphi %s138, %s138
                %s152 = sphi %s134, %s134
              $region39: #{cnn_cifar100_forward.5} parent=35 // loop_header_branch
                %149 = sbr.rel (%p147) target = $region43
              $region40: #{cnn_cifar100_forward.5} parent=35 // loop_body
                %v153 = vld [vmem:[%s151] sm:$0xff]
                %154 = vst [vmem:[%s152] sm:$0xff] %v153
                %v155 = vld [vmem:[%s151 + $0xc] sm:$0xff]
                %156 = vst [vmem:[%s152 + $0xc] sm:$0xff] %v155
                %v157 = vld [vmem:[%s151 + $0x18] sm:$0xff]
                %158 = vst [vmem:[%s152 + $0x18] sm:$0xff] %v157
                %v159 = vld [vmem:[%s151 + $0x24] sm:$0xff]
                %160 = vst [vmem:[%s152 + $0x24] sm:$0xff] %v159
                %v161 = vld [vmem:[%s151 + $0x30] sm:$0xff]
                %162 = vst [vmem:[%s152 + $0x30] sm:$0xff] %v161
                %v163 = vld [vmem:[%s151 + $0x3c] sm:$0xff]
                %164 = vst [vmem:[%s152 + $0x3c] sm:$0xff] %v163
                %v165 = vld [vmem:[%s151 + $0x90] sm:$0xff]
                %166 = vst [vmem:[%s152 + $0x48] sm:$0xff] %v165
                %v167 = vld [vmem:[%s151 + $0x9c] sm:$0xff]
                %168 = vst [vmem:[%s152 + $0x54] sm:$0xff] %v167
                %v169 = vld [vmem:[%s151 + $0xa8] sm:$0xff]
                %170 = vst [vmem:[%s152 + $0x60] sm:$0xff] %v169
                %v171 = vld [vmem:[%s151 + $0xb4] sm:$0xff]
                %172 = vst [vmem:[%s152 + $0x6c] sm:$0xff] %v171
                %v173 = vld [vmem:[%s151 + $0xc0] sm:$0xff]
                %174 = vst [vmem:[%s152 + $0x78] sm:$0xff] %v173
                %v175 = vld [vmem:[%s151 + $0xcc] sm:$0xff]
                %176 = vst [vmem:[%s152 + $0x84] sm:$0xff] %v175
                %v177 = vld [vmem:[%s151 + $0x120] sm:$0xff]
                %178 = vst [vmem:[%s152 + $0x90] sm:$0xff] %v177
                %v179 = vld [vmem:[%s151 + $0x12c] sm:$0xff]
                %180 = vst [vmem:[%s152 + $0x9c] sm:$0xff] %v179
                %v181 = vld [vmem:[%s151 + $0x138] sm:$0xff]
                %182 = vst [vmem:[%s152 + $0xa8] sm:$0xff] %v181
                %v183 = vld [vmem:[%s151 + $0x144] sm:$0xff]
                %184 = vst [vmem:[%s152 + $0xb4] sm:$0xff] %v183
                %v185 = vld [vmem:[%s151 + $0x150] sm:$0xff]
                %186 = vst [vmem:[%s152 + $0xc0] sm:$0xff] %v185
                %v187 = vld [vmem:[%s151 + $0x15c] sm:$0xff]
                %188 = vst [vmem:[%s152 + $0xcc] sm:$0xff] %v187
                %v189 = vld [vmem:[%s151 + $0x1b0] sm:$0xff]
                %190 = vst [vmem:[%s152 + $0xd8] sm:$0xff] %v189
                %v191 = vld [vmem:[%s151 + $0x1bc] sm:$0xff]
                %192 = vst [vmem:[%s152 + $0xe4] sm:$0xff] %v191
                %v193 = vld [vmem:[%s151 + $0x1c8] sm:$0xff]
                %194 = vst [vmem:[%s152 + $0xf0] sm:$0xff] %v193
                %v195 = vld [vmem:[%s151 + $0x1d4] sm:$0xff]
                %196 = vst [vmem:[%s152 + $0xfc] sm:$0xff] %v195
                %v197 = vld [vmem:[%s151 + $0x1e0] sm:$0xff]
                %198 = vst [vmem:[%s152 + $0x108] sm:$0xff] %v197
                %v199 = vld [vmem:[%s151 + $0x1ec] sm:$0xff]
                %200 = vst [vmem:[%s152 + $0x114] sm:$0xff] %v199
              $region41: #{cnn_cifar100_forward.5} parent=35 // loop_footer
                %s150 = sadd.s32 1, %s146
              $region42: #{cnn_cifar100_forward.5} parent=35 // loop_footer_branch
                %145 = sbr.rel target = $region38
              $region43: #{cnn_cifar100_forward.5} parent=35 // loop_exit
                _
              loop: start=0, step=1, limit=1
              $region44: #{cnn_cifar100_forward.5} parent=35 // loop_pre_header
                _
              $region45: #{cnn_cifar100_forward.5} parent=35 // loop_header
                %s203 = sphi 0, %s207
                %p204 = scmp.ge.s32.totalorder %s203, 1
                %s208 = sphi %s143, %s143
                %s209 = sphi %s144, %s144
              $region46: #{cnn_cifar100_forward.5} parent=35 // loop_header_branch
                %206 = sbr.rel (%p204) target = $region50
              $region47: #{cnn_cifar100_forward.5} parent=35 // loop_body
                %v210 = vld [vmem:[%s208] sm:$0xf]
                %211 = vst [vmem:[%s209] sm:$0xf] %v210
                %v212 = vld [vmem:[%s208 + $0xc] sm:$0xf]
                %213 = vst [vmem:[%s209 + $0xc] sm:$0xf] %v212
                %v214 = vld [vmem:[%s208 + $0x18] sm:$0xf]
                %215 = vst [vmem:[%s209 + $0x18] sm:$0xf] %v214
                %v216 = vld [vmem:[%s208 + $0x24] sm:$0xf]
                %217 = vst [vmem:[%s209 + $0x24] sm:$0xf] %v216
                %v218 = vld [vmem:[%s208 + $0x30] sm:$0xf]
                %219 = vst [vmem:[%s209 + $0x30] sm:$0xf] %v218
                %v220 = vld [vmem:[%s208 + $0x3c] sm:$0xf]
                %221 = vst [vmem:[%s209 + $0x3c] sm:$0xf] %v220
                %v222 = vld [vmem:[%s208 + $0x90] sm:$0xf]
                %223 = vst [vmem:[%s209 + $0x48] sm:$0xf] %v222
                %v224 = vld [vmem:[%s208 + $0x9c] sm:$0xf]
                %225 = vst [vmem:[%s209 + $0x54] sm:$0xf] %v224
                %v226 = vld [vmem:[%s208 + $0xa8] sm:$0xf]
                %227 = vst [vmem:[%s209 + $0x60] sm:$0xf] %v226
                %v228 = vld [vmem:[%s208 + $0xb4] sm:$0xf]
                %229 = vst [vmem:[%s209 + $0x6c] sm:$0xf] %v228
                %v230 = vld [vmem:[%s208 + $0xc0] sm:$0xf]
                %231 = vst [vmem:[%s209 + $0x78] sm:$0xf] %v230
                %v232 = vld [vmem:[%s208 + $0xcc] sm:$0xf]
                %233 = vst [vmem:[%s209 + $0x84] sm:$0xf] %v232
                %v234 = vld [vmem:[%s208 + $0x120] sm:$0xf]
                %235 = vst [vmem:[%s209 + $0x90] sm:$0xf] %v234
                %v236 = vld [vmem:[%s208 + $0x12c] sm:$0xf]
                %237 = vst [vmem:[%s209 + $0x9c] sm:$0xf] %v236
                %v238 = vld [vmem:[%s208 + $0x138] sm:$0xf]
                %239 = vst [vmem:[%s209 + $0xa8] sm:$0xf] %v238
                %v240 = vld [vmem:[%s208 + $0x144] sm:$0xf]
                %241 = vst [vmem:[%s209 + $0xb4] sm:$0xf] %v240
                %v242 = vld [vmem:[%s208 + $0x150] sm:$0xf]
                %243 = vst [vmem:[%s209 + $0xc0] sm:$0xf] %v242
                %v244 = vld [vmem:[%s208 + $0x15c] sm:$0xf]
                %245 = vst [vmem:[%s209 + $0xcc] sm:$0xf] %v244
                %v246 = vld [vmem:[%s208 + $0x1b0] sm:$0xf]
                %247 = vst [vmem:[%s209 + $0xd8] sm:$0xf] %v246
                %v248 = vld [vmem:[%s208 + $0x1bc] sm:$0xf]
                %249 = vst [vmem:[%s209 + $0xe4] sm:$0xf] %v248
                %v250 = vld [vmem:[%s208 + $0x1c8] sm:$0xf]
                %251 = vst [vmem:[%s209 + $0xf0] sm:$0xf] %v250
                %v252 = vld [vmem:[%s208 + $0x1d4] sm:$0xf]
                %253 = vst [vmem:[%s209 + $0xfc] sm:$0xf] %v252
                %v254 = vld [vmem:[%s208 + $0x1e0] sm:$0xf]
                %255 = vst [vmem:[%s209 + $0x108] sm:$0xf] %v254
                %v256 = vld [vmem:[%s208 + $0x1ec] sm:$0xf]
                %257 = vst [vmem:[%s209 + $0x114] sm:$0xf] %v256
              $region48: #{cnn_cifar100_forward.5} parent=35 // loop_footer
                %s207 = sadd.s32 1, %s203
              $region49: #{cnn_cifar100_forward.5} parent=35 // loop_footer_branch
                %202 = sbr.rel target = $region45
              $region50: #{cnn_cifar100_forward.5} parent=35 // loop_exit
                _
            $region36: #{cnn_cifar100_forward.5} parent=31 // pred_fallthru
              _
          $region32: #{cnn_cifar100_forward.5} parent=27 // pred_fallthru
            _
          %258 = vnop
        $region28: #{cnn_cifar100_forward.5} parent=23 // pred_fallthru
          _
      $region24: #{cnn_cifar100_forward.5} parent=5 // pred_fallthru
        _
      %p259 = scmp.le.s32.totalorder 1, %s9
      %p260 = scmp.lt.s32.totalorder %s9, 3
      %p261 = pnand %p259, %p260
      %p262 = pneg %p261
      // Predicated region
      $region51: #{cnn_cifar100_forward.5} parent=5 // pred_check
        _
      $region52: #{cnn_cifar100_forward.5} parent=5 // pred_check_branch
        %264 = sbr.rel (%p261) target = $region54
      $region53: #{cnn_cifar100_forward.5} parent=5 // pred_region
        %s265 = ssub.s32 %s9, 1
        %s266 = sand.u32 %s22, 1
        %s267 = sand.u32 %s22, 1
        %s268 = smul.addr %s267, 288
        %s269 = scalar_lea.vmem [#allocation2], %s268
        // Predicated region
        $region55: #{cnn_cifar100_forward.5} parent=53 // pred_check
          %p270 = pneg %p35
        $region56: #{cnn_cifar100_forward.5} parent=53 // pred_check_branch
          %272 = sbr.rel (%p270) target = $region58
        $region57: #{cnn_cifar100_forward.5} parent=53 // pred_region
          _
        $region58: #{cnn_cifar100_forward.5} parent=53 // pred_fallthru
          _
        %s273 = sand.u32 %s22, 1
        %s274 = sand.u32 %s22, 1
        %s275 = smul.addr %s274, 288
        %s276 = scalar_lea.vmem [#allocation2], %s275
        %p277 = pneg %p35
        %p278 = pneg %p32
        %p279 = pneg %p56
        %p280 = pneg %p53
        %p281 = pneg %p77
        %p282 = pneg %p74
        %p283 = pneg %p103
        %p284 = pneg %p100
        %s285 = smul.u32 6, %s14
        %p286 = scmp.lt.s32.totalorder %s285, 11
        %s287 = scalar_select %p286, %s285, 11
        %s288 = smul.addr %s287, 4
        %s289 = scalar_lea.vmem %s3, %s288
        %s290 = smul.u32 6, %s14
        %s291 = smul.u32 6, %s14
        %p292 = scmp.lt.s32.totalorder %s291, 11
        %s293 = scalar_select %p292, %s291, 11
        %s294 = smul.addr %s293, 4
        %s295 = scalar_lea.vmem %s3, %s294
        %s296 = smul.u32 6, %s14
        %v298 = vld [vmem:[%s269] sm:$0xff]
        %v299 = vld [vmem:[%s269 + $0x8] sm:$0xf]
        %v300 = vld [vmem:[%s269 + $0xc] sm:$0xff]
        %v301 = vld [vmem:[%s269 + $0x14] sm:$0xf]
        %v302 = vld [vmem:[%s269 + $0x18] sm:$0xff]
        %v303 = vld [vmem:[%s269 + $0x20] sm:$0xf]
        %v304 = vld [vmem:[%s269 + $0x24] sm:$0xff]
        %v305 = vld [vmem:[%s269 + $0x2c] sm:$0xf]
        %v306 = vld [vmem:[%s269 + $0x30] sm:$0xff]
        %v307 = vld [vmem:[%s269 + $0x38] sm:$0xf]
        %v308 = vld [vmem:[%s269 + $0x3c] sm:$0xff]
        %v309 = vld [vmem:[%s269 + $0x44] sm:$0xf]
        %v310 = vld [vmem:[%s269 + $0x48] sm:$0xff]
        %v311 = vld [vmem:[%s269 + $0x50] sm:$0xf]
        %v312 = vld [vmem:[%s269 + $0x54] sm:$0xff]
        %v313 = vld [vmem:[%s269 + $0x5c] sm:$0xf]
        %v314 = vld [vmem:[%s269 + $0x60] sm:$0xff]
        %v315 = vld [vmem:[%s269 + $0x68] sm:$0xf]
        %v316 = vld [vmem:[%s269 + $0x6c] sm:$0xff]
        %v317 = vld [vmem:[%s269 + $0x74] sm:$0xf]
        %v318 = vld [vmem:[%s269 + $0x78] sm:$0xff]
        %v319 = vld [vmem:[%s269 + $0x80] sm:$0xf]
        %v320 = vld [vmem:[%s269 + $0x84] sm:$0xff]
        %v321 = vld [vmem:[%s269 + $0x8c] sm:$0xf]
        %v322 = vld [vmem:[%s269 + $0x90] sm:$0xff]
        %v323 = vld [vmem:[%s269 + $0x98] sm:$0xf]
        %v324 = vld [vmem:[%s269 + $0x9c] sm:$0xff]
        %v325 = vld [vmem:[%s269 + $0xa4] sm:$0xf]
        %v326 = vld [vmem:[%s269 + $0xa8] sm:$0xff]
        %v327 = vld [vmem:[%s269 + $0xb0] sm:$0xf]
        %v328 = vld [vmem:[%s269 + $0xb4] sm:$0xff]
        %v329 = vld [vmem:[%s269 + $0xbc] sm:$0xf]
        %v330 = vld [vmem:[%s269 + $0xc0] sm:$0xff]
        %v331 = vld [vmem:[%s269 + $0xc8] sm:$0xf]
        %v332 = vld [vmem:[%s269 + $0xcc] sm:$0xff]
        %v333 = vld [vmem:[%s269 + $0xd4] sm:$0xf]
        %v334 = vld [vmem:[%s269 + $0xd8] sm:$0xff]
        %v335 = vld [vmem:[%s269 + $0xe0] sm:$0xf]
        %v336 = vld [vmem:[%s269 + $0xe4] sm:$0xff]
        %v337 = vld [vmem:[%s269 + $0xec] sm:$0xf]
        %v338 = vld [vmem:[%s269 + $0xf0] sm:$0xff]
        %v339 = vld [vmem:[%s269 + $0xf8] sm:$0xf]
        %v340 = vld [vmem:[%s269 + $0xfc] sm:$0xff]
        %v341 = vld [vmem:[%s269 + $0x104] sm:$0xf]
        %v342 = vld [vmem:[%s269 + $0x108] sm:$0xff]
        %v343 = vld [vmem:[%s269 + $0x110] sm:$0xf]
        %v344 = vld [vmem:[%s269 + $0x114] sm:$0xff]
        %v345 = vld [vmem:[%s269 + $0x11c] sm:$0xf]
        %v346 = vld [vmem:[%s1] sm:$0xf]
        %v347 = vld [vmem:[%s1 + $0x4] sm:$0xf]
        %v348 = vld [vmem:[%s1 + $0x8] sm:$0xf]
        %v349 = vld [vmem:[%s1 + $0xc] sm:$0xf]
        %v350 = vld [vmem:[%s1 + $0x10] sm:$0xf]
        %v351 = vld [vmem:[%s1 + $0x14] sm:$0xf]
        %v352 = vld [vmem:[%s1 + $0x18] sm:$0xf]
        %v353 = vld [vmem:[%s1 + $0x1c] sm:$0xf]
        %v354 = vld [vmem:[%s1 + $0x20] sm:$0xf]
        %v355 = vld [vmem:[%s1 + $0x24] sm:$0xf]
        %v356 = vld [vmem:[%s1 + $0x28] sm:$0xf]
        %v357 = vld [vmem:[%s1 + $0x2c] sm:$0xf]
        %v358 = vld [vmem:[%s1 + $0x30] sm:$0xf]
        %v359 = vld [vmem:[%s1 + $0x34] sm:$0xf]
        %v360 = vld [vmem:[%s1 + $0x38] sm:$0xf]
        %v361 = vld [vmem:[%s1 + $0x3c] sm:$0xf]
        %v362 = vld [vmem:[%s1 + $0x40] sm:$0xf]
        %v363 = vld [vmem:[%s1 + $0x44] sm:$0xf]
        %v364 = vld [vmem:[%s1 + $0x48] sm:$0xf]
        %v365 = vld [vmem:[%s1 + $0x4c] sm:$0xf]
        %v366 = vld [vmem:[%s1 + $0x50] sm:$0xf]
        %v367 = vld [vmem:[%s1 + $0x54] sm:$0xf]
        %v368 = vld [vmem:[%s1 + $0x58] sm:$0xf]
        %v369 = vld [vmem:[%s1 + $0x5c] sm:$0xf]
        %v370 = vld [vmem:[%s1 + $0x60] sm:$0xf]
        %v371 = vld [vmem:[%s1 + $0x64] sm:$0xf]
        %v372 = vld [vmem:[%s1 + $0x68] sm:$0xf]
        %v373 = vld [vmem:[%s1 + $0x6c] sm:$0xf]
        %v374 = vld [vmem:[%s1 + $0x70] sm:$0xf]
        %v375 = vld [vmem:[%s1 + $0x74] sm:$0xf]
        %v376 = vld [vmem:[%s1 + $0x78] sm:$0xf]
        %v377 = vld [vmem:[%s1 + $0x7c] sm:$0xf]
        %v378 = vld [vmem:[%s1 + $0x80] sm:$0xf]
        %v379 = vld [vmem:[%s1 + $0x84] sm:$0xf]
        %v380 = vld [vmem:[%s1 + $0x88] sm:$0xf]
        %v381 = vld [vmem:[%s1 + $0x8c] sm:$0xf]
        %v430 = vunpack.c.l.b16 %v298
        %v431 = vunpack.c.h.b16 %v298
        %v432 = vunpack.c.l.b16 %v299
        %v433 = vunpack.c.l.b16 %v300
        %v434 = vunpack.c.h.b16 %v300
        %v435 = vunpack.c.l.b16 %v301
        %v436 = vunpack.c.l.b16 %v302
        %v437 = vunpack.c.h.b16 %v302
        %v438 = vunpack.c.l.b16 %v303
        %v439 = vunpack.c.l.b16 %v304
        %v440 = vunpack.c.h.b16 %v304
        %v441 = vunpack.c.l.b16 %v305
        %v442 = vunpack.c.l.b16 %v306
        %v443 = vunpack.c.h.b16 %v306
        %v444 = vunpack.c.l.b16 %v307
        %v445 = vunpack.c.l.b16 %v308
        %v446 = vunpack.c.h.b16 %v308
        %v447 = vunpack.c.l.b16 %v309
        %v448 = vunpack.c.l.b16 %v310
        %v449 = vunpack.c.h.b16 %v310
        %v450 = vunpack.c.l.b16 %v311
        %v451 = vunpack.c.l.b16 %v312
        %v452 = vunpack.c.h.b16 %v312
        %v453 = vunpack.c.l.b16 %v313
        %v454 = vunpack.c.l.b16 %v314
        %v455 = vunpack.c.h.b16 %v314
        %v456 = vunpack.c.l.b16 %v315
        %v457 = vunpack.c.l.b16 %v316
        %v458 = vunpack.c.h.b16 %v316
        %v459 = vunpack.c.l.b16 %v317
        %v460 = vunpack.c.l.b16 %v318
        %v461 = vunpack.c.h.b16 %v318
        %v462 = vunpack.c.l.b16 %v319
        %v463 = vunpack.c.l.b16 %v320
        %v464 = vunpack.c.h.b16 %v320
        %v465 = vunpack.c.l.b16 %v321
        %v466 = vunpack.c.l.b16 %v322
        %v467 = vunpack.c.h.b16 %v322
        %v468 = vunpack.c.l.b16 %v323
        %v469 = vunpack.c.l.b16 %v324
        %v470 = vunpack.c.h.b16 %v324
        %v471 = vunpack.c.l.b16 %v325
        %v472 = vunpack.c.l.b16 %v326
        %v473 = vunpack.c.h.b16 %v326
        %v474 = vunpack.c.l.b16 %v327
        %v475 = vunpack.c.l.b16 %v328
        %v476 = vunpack.c.h.b16 %v328
        %v477 = vunpack.c.l.b16 %v329
        %v478 = vunpack.c.l.b16 %v330
        %v479 = vunpack.c.h.b16 %v330
        %v480 = vunpack.c.l.b16 %v331
        %v481 = vunpack.c.l.b16 %v332
        %v482 = vunpack.c.h.b16 %v332
        %v483 = vunpack.c.l.b16 %v333
        %v484 = vunpack.c.l.b16 %v334
        %v485 = vunpack.c.h.b16 %v334
        %v486 = vunpack.c.l.b16 %v335
        %v487 = vunpack.c.l.b16 %v336
        %v488 = vunpack.c.h.b16 %v336
        %v489 = vunpack.c.l.b16 %v337
        %v490 = vunpack.c.l.b16 %v338
        %v491 = vunpack.c.h.b16 %v338
        %v492 = vunpack.c.l.b16 %v339
        %v493 = vunpack.c.l.b16 %v340
        %v494 = vunpack.c.h.b16 %v340
        %v495 = vunpack.c.l.b16 %v341
        %v496 = vunpack.c.l.b16 %v342
        %v497 = vunpack.c.h.b16 %v342
        %v498 = vunpack.c.l.b16 %v343
        %v499 = vunpack.c.l.b16 %v344
        %v500 = vunpack.c.h.b16 %v344
        %v501 = vunpack.c.l.b16 %v345
        %v502 = vpack.c.b16 %v433, %v430
        %v503 = vpack.c.b16 %v434, %v431
        %v504 = vpack.c.b16 %v435, %v432
        %v505 = vpack.c.b16 %v439, %v436
        %v506 = vpack.c.b16 %v440, %v437
        %v507 = vpack.c.b16 %v441, %v438
        %v508 = vpack.c.b16 %v445, %v442
        %v509 = vpack.c.b16 %v446, %v443
        %v510 = vpack.c.b16 %v447, %v444
        %v511 = vpack.c.b16 %v451, %v448
        %v512 = vpack.c.b16 %v452, %v449
        %v513 = vpack.c.b16 %v453, %v450
        %v514 = vpack.c.b16 %v457, %v454
        %v515 = vpack.c.b16 %v458, %v455
        %v516 = vpack.c.b16 %v459, %v456
        %v517 = vpack.c.b16 %v463, %v460
        %v518 = vpack.c.b16 %v464, %v461
        %v519 = vpack.c.b16 %v465, %v462
        %v520 = vpack.c.b16 %v469, %v466
        %v521 = vpack.c.b16 %v470, %v467
        %v522 = vpack.c.b16 %v471, %v468
        %v523 = vpack.c.b16 %v475, %v472
        %v524 = vpack.c.b16 %v476, %v473
        %v525 = vpack.c.b16 %v477, %v474
        %v526 = vpack.c.b16 %v481, %v478
        %v527 = vpack.c.b16 %v482, %v479
        %v528 = vpack.c.b16 %v483, %v480
        %v529 = vpack.c.b16 %v487, %v484
        %v530 = vpack.c.b16 %v488, %v485
        %v531 = vpack.c.b16 %v489, %v486
        %v532 = vpack.c.b16 %v493, %v490
        %v533 = vpack.c.b16 %v494, %v491
        %v534 = vpack.c.b16 %v495, %v492
        %v535 = vpack.c.b16 %v499, %v496
        %v536 = vpack.c.b16 %v500, %v497
        %v537 = vpack.c.b16 %v501, %v498
        %v598 = vunpack.c.l.b16 %v346
        %v599 = vunpack.c.l.b16 %v347
        %v600 = vunpack.c.l.b16 %v348
        %v601 = vunpack.c.l.b16 %v349
        %v602 = vunpack.c.l.b16 %v350
        %v603 = vunpack.c.l.b16 %v351
        %v604 = vunpack.c.l.b16 %v352
        %v605 = vunpack.c.l.b16 %v353
        %v606 = vunpack.c.l.b16 %v354
        %v607 = vunpack.c.l.b16 %v355
        %v608 = vunpack.c.l.b16 %v356
        %v609 = vunpack.c.l.b16 %v357
        %v610 = vunpack.c.l.b16 %v358
        %v611 = vunpack.c.l.b16 %v359
        %v612 = vunpack.c.l.b16 %v360
        %v613 = vunpack.c.l.b16 %v361
        %v614 = vunpack.c.l.b16 %v362
        %v615 = vunpack.c.l.b16 %v363
        %v616 = vunpack.c.l.b16 %v364
        %v617 = vunpack.c.l.b16 %v365
        %v618 = vunpack.c.l.b16 %v366
        %v619 = vunpack.c.l.b16 %v367
        %v620 = vunpack.c.l.b16 %v368
        %v621 = vunpack.c.l.b16 %v369
        %v622 = vunpack.c.l.b16 %v370
        %v623 = vunpack.c.l.b16 %v371
        %v624 = vunpack.c.l.b16 %v372
        %v625 = vunpack.c.l.b16 %v373
        %v626 = vunpack.c.l.b16 %v374
        %v627 = vunpack.c.l.b16 %v375
        %v628 = vunpack.c.l.b16 %v376
        %v629 = vunpack.c.l.b16 %v377
        %v630 = vunpack.c.l.b16 %v378
        %v631 = vunpack.c.l.b16 %v379
        %v632 = vunpack.c.l.b16 %v380
        %v633 = vunpack.c.l.b16 %v381
        %v634 = vpack.c.b16 %v599, %v598
        %v635 = vpack.c.b16 %v601, %v600
        %v636 = vpack.c.b16 %v603, %v602
        %v637 = vpack.c.b16 %v605, %v604
        %v638 = vpack.c.b16 %v607, %v606
        %v639 = vpack.c.b16 %v609, %v608
        %v640 = vpack.c.b16 %v611, %v610
        %v641 = vpack.c.b16 %v613, %v612
        %v642 = vpack.c.b16 %v615, %v614
        %v643 = vpack.c.b16 %v617, %v616
        %v644 = vpack.c.b16 %v619, %v618
        %v645 = vpack.c.b16 %v621, %v620
        %v646 = vpack.c.b16 %v623, %v622
        %v647 = vpack.c.b16 %v625, %v624
        %v648 = vpack.c.b16 %v627, %v626
        %v649 = vpack.c.b16 %v629, %v628
        %v650 = vpack.c.b16 %v631, %v630
        %v651 = vpack.c.b16 %v633, %v632
        %vm670 = vcmask 261120
        %v672 = vsel %vm670, %v504, 0
        %v675 = vsel %vm670, %v507, 0
        %v678 = vsel %vm670, %v510, 0
        %v681 = vsel %vm670, %v513, 0
        %v684 = vsel %vm670, %v516, 0
        %v687 = vsel %vm670, %v519, 0
        %v690 = vsel %vm670, %v522, 0
        %v693 = vsel %vm670, %v525, 0
        %v696 = vsel %vm670, %v528, 0
        %v699 = vsel %vm670, %v531, 0
        %v702 = vsel %vm670, %v534, 0
        %v705 = vsel %vm670, %v537, 0
        %707 = vmatprep.subr.bf16.mxu0 0
        %708 = vmatpush1.bf16.msra.mxu0 %v634
        %709 = vmatprep.subr.bf16.mxu0 0
        %710 = vmatpush1.bf16.msra.mxu0 %v635
        %711 = vmatprep.subr.bf16.mxu0 0
        %712 = vmatpush1.bf16.msra.mxu0 %v636
        %713 = vmatprep.subr.bf16.mxu0 0
        %714 = vmatpush1.bf16.msra.mxu0 %v637
        %715 = vmatprep.subr.bf16.mxu0 0
        %716 = vmatpush1.bf16.msra.mxu0 %v638
        %717 = vmatprep.subr.bf16.mxu0 0
        %718 = vmatpush1.bf16.msra.mxu0 %v639
        %719 = vmatprep.subr.bf16.mxu0 0
        %720 = vmatpush1.bf16.msra.mxu0 %v640
        %721 = vmatprep.subr.bf16.mxu0 0
        %722 = vmatpush1.bf16.msra.mxu0 %v641
        %723 = vmatprep.subr.bf16.mxu0 0
        %724 = vmatpush1.bf16.msra.mxu0 %v642
        %725 = vmatprep.subr.bf16.mxu0 0
        %726 = vmatpush1.bf16.msra.mxu0 %v643
        %727 = vmatprep.subr.bf16.mxu0 0
        %728 = vmatpush1.bf16.msra.mxu0 %v644
        %729 = vmatprep.subr.bf16.mxu0 0
        %730 = vmatpush1.bf16.msra.mxu0 %v645
        %731 = vmatprep.subr.bf16.mxu0 0
        %732 = vmatpush1.bf16.msra.mxu0 %v646
        %733 = vmatprep.subr.bf16.mxu0 0
        %734 = vmatpush1.bf16.msra.mxu0 %v647
        %735 = vmatprep.subr.bf16.mxu0 0
        %736 = vmatpush1.bf16.msra.mxu0 %v648
        %737 = vmatprep.subr.bf16.mxu0 0
        %738 = vmatpush1.bf16.msra.mxu0 %v649
        %739 = vmatprep.mubr.bf16.mxu0 %v503
        %740 = vmatmul.mubr.bf16.gmra.mrb[0].mxu0 %v502
        %v741 = vpop.f32.mrb[0].mxu0
        %v742 = vadd.f32 0.0, %v741
        %v743 = vpop.f32.mrb[0].mxu0
        %v744 = vpop.f32.mrb[0].mxu0
        %v745 = vadd.f32 0.0, %v744
        %v746 = vpop.f32.mrb[0].mxu0
        %747 = vmatprep.mubr.bf16.mxu0 %v506
        %748 = vmatmul.mubr.bf16.gmra.mrb[0].mxu0 %v505
        %v749 = vpop.f32.mrb[0].mxu0
        %v750 = vadd.f32 0.0, %v749
        %v751 = vpop.f32.mrb[0].mxu0
        %v752 = vpop.f32.mrb[0].mxu0
        %v753 = vadd.f32 0.0, %v752
        %v754 = vpop.f32.mrb[0].mxu0
        %755 = vmatprep.mubr.bf16.mxu0 %v509
        %756 = vmatmul.mubr.bf16.gmra.mrb[0].mxu0 %v508
        %v757 = vpop.f32.mrb[0].mxu0
        %v758 = vadd.f32 0.0, %v757
        %v759 = vpop.f32.mrb[0].mxu0
        %v760 = vpop.f32.mrb[0].mxu0
        %v761 = vadd.f32 0.0, %v760
        %v762 = vpop.f32.mrb[0].mxu0
        %763 = vmatprep.mubr.bf16.mxu0 %v512
        %764 = vmatmul.mubr.bf16.gmra.mrb[0].mxu0 %v511
        %v765 = vpop.f32.mrb[0].mxu0
        %v766 = vadd.f32 0.0, %v765
        %v767 = vpop.f32.mrb[0].mxu0
        %v768 = vpop.f32.mrb[0].mxu0
        %v769 = vadd.f32 0.0, %v768
        %v770 = vpop.f32.mrb[0].mxu0
        %771 = vmatprep.mubr.bf16.mxu0 %v515
        %772 = vmatmul.mubr.bf16.gmra.mrb[0].mxu0 %v514
        %v773 = vpop.f32.mrb[0].mxu0
        %v774 = vadd.f32 0.0, %v773
        %v775 = vpop.f32.mrb[0].mxu0
        %v776 = vpop.f32.mrb[0].mxu0
        %v777 = vadd.f32 0.0, %v776
        %v778 = vpop.f32.mrb[0].mxu0
        %779 = vmatprep.mubr.bf16.mxu0 %v518
        %780 = vmatmul.mubr.bf16.gmra.mrb[0].mxu0 %v517
        %v781 = vpop.f32.mrb[0].mxu0
        %v782 = vadd.f32 0.0, %v781
        %v783 = vpop.f32.mrb[0].mxu0
        %v784 = vpop.f32.mrb[0].mxu0
        %v785 = vadd.f32 0.0, %v784
        %v786 = vpop.f32.mrb[0].mxu0
        %787 = vmatprep.mubr.bf16.mxu0 %v521
        %788 = vmatmul.mubr.bf16.gmra.mrb[0].mxu0 %v520
        %v789 = vpop.f32.mrb[0].mxu0
        %v790 = vadd.f32 0.0, %v789
        %v791 = vpop.f32.mrb[0].mxu0
        %v792 = vpop.f32.mrb[0].mxu0
        %v793 = vadd.f32 0.0, %v792
        %v794 = vpop.f32.mrb[0].mxu0
        %795 = vmatprep.mubr.bf16.mxu0 %v524
        %796 = vmatmul.mubr.bf16.gmra.mrb[0].mxu0 %v523
        %v797 = vpop.f32.mrb[0].mxu0
        %v798 = vadd.f32 0.0, %v797
        %v799 = vpop.f32.mrb[0].mxu0
        %v800 = vpop.f32.mrb[0].mxu0
        %v801 = vadd.f32 0.0, %v800
        %v802 = vpop.f32.mrb[0].mxu0
        %803 = vmatprep.mubr.bf16.mxu0 %v527
        %804 = vmatmul.mubr.bf16.gmra.mrb[0].mxu0 %v526
        %v805 = vpop.f32.mrb[0].mxu0
        %v806 = vadd.f32 0.0, %v805
        %v807 = vpop.f32.mrb[0].mxu0
        %v808 = vpop.f32.mrb[0].mxu0
        %v809 = vadd.f32 0.0, %v808
        %v810 = vpop.f32.mrb[0].mxu0
        %811 = vmatprep.mubr.bf16.mxu0 %v530
        %812 = vmatmul.mubr.bf16.gmra.mrb[0].mxu0 %v529
        %v813 = vpop.f32.mrb[0].mxu0
        %v814 = vadd.f32 0.0, %v813
        %v815 = vpop.f32.mrb[0].mxu0
        %v816 = vpop.f32.mrb[0].mxu0
        %v817 = vadd.f32 0.0, %v816
        %v818 = vpop.f32.mrb[0].mxu0
        %819 = vmatprep.mubr.bf16.mxu0 %v533
        %820 = vmatmul.mubr.bf16.gmra.mrb[0].mxu0 %v532
        %v821 = vpop.f32.mrb[0].mxu0
        %v822 = vadd.f32 0.0, %v821
        %v823 = vpop.f32.mrb[0].mxu0
        %v824 = vpop.f32.mrb[0].mxu0
        %v825 = vadd.f32 0.0, %v824
        %v826 = vpop.f32.mrb[0].mxu0
        %827 = vmatprep.mubr.bf16.mxu0 %v536
        %828 = vmatmul.mubr.bf16.gmra.mrb[0].mxu0 %v535
        %v829 = vpop.f32.mrb[0].mxu0
        %v830 = vadd.f32 0.0, %v829
        %v831 = vpop.f32.mrb[0].mxu0
        %v832 = vpop.f32.mrb[0].mxu0
        %v833 = vadd.f32 0.0, %v832
        %v834 = vpop.f32.mrb[0].mxu0
        %835 = vdwg.mxu0
        %836 = vmatprep.subr.bf16.mxu0 0
        %837 = vmatpush1.bf16.msra.mxu0 %v650
        %838 = vmatprep.subr.bf16.mxu0 0
        %839 = vmatpush1.bf16.msra.mxu0 %v651
        %840 = vmatprep.subr.bf16.mxu0 0
        %841 = vmatpush1.bf16.msra.mxu0 0
        %842 = vmatprep.subr.bf16.mxu0 0
        %843 = vmatpush1.bf16.msra.mxu0 0
        %844 = vmatprep.subr.bf16.mxu0 0
        %845 = vmatpush1.bf16.msra.mxu0 0
        %846 = vmatprep.subr.bf16.mxu0 0
        %847 = vmatpush1.bf16.msra.mxu0 0
        %848 = vmatprep.subr.bf16.mxu0 0
        %849 = vmatpush1.bf16.msra.mxu0 0
        %850 = vmatprep.subr.bf16.mxu0 0
        %851 = vmatpush1.bf16.msra.mxu0 0
        %852 = vmatprep.subr.bf16.mxu0 0
        %853 = vmatpush1.bf16.msra.mxu0 0
        %854 = vmatprep.subr.bf16.mxu0 0
        %855 = vmatpush1.bf16.msra.mxu0 0
        %856 = vmatprep.subr.bf16.mxu0 0
        %857 = vmatpush1.bf16.msra.mxu0 0
        %858 = vmatprep.subr.bf16.mxu0 0
        %859 = vmatpush1.bf16.msra.mxu0 0
        %860 = vmatprep.subr.bf16.mxu0 0
        %861 = vmatpush1.bf16.msra.mxu0 0
        %862 = vmatprep.subr.bf16.mxu0 0
        %863 = vmatpush1.bf16.msra.mxu0 0
        %864 = vmatprep.subr.bf16.mxu0 0
        %865 = vmatpush1.bf16.msra.mxu0 0
        %866 = vmatprep.subr.bf16.mxu0 0
        %867 = vmatpush1.bf16.msra.mxu0 0
        %868 = vmatprep.mubr.bf16.mxu0 0
        %869 = vmatmul.mubr.bf16.gmra.mrb[0].mxu0 %v672
        %v870 = vpop.f32.mrb[0].mxu0
        %v871 = vadd.f32 %v742, %v870
        %v872 = vpop.f32.mrb[0].mxu0
        %v873 = vpop.f32.mrb[0].mxu0
        %v874 = vadd.f32 %v745, %v873
        %v875 = vpop.f32.mrb[0].mxu0
        %876 = vmatprep.mubr.bf16.mxu0 0
        %877 = vmatmul.mubr.bf16.gmra.mrb[0].mxu0 %v675
        %v878 = vpop.f32.mrb[0].mxu0
        %v879 = vadd.f32 %v750, %v878
        %v880 = vpop.f32.mrb[0].mxu0
        %v881 = vpop.f32.mrb[0].mxu0
        %v882 = vadd.f32 %v753, %v881
        %v883 = vpop.f32.mrb[0].mxu0
        %884 = vmatprep.mubr.bf16.mxu0 0
        %885 = vmatmul.mubr.bf16.gmra.mrb[0].mxu0 %v678
        %v886 = vpop.f32.mrb[0].mxu0
        %v887 = vadd.f32 %v758, %v886
        %v888 = vpop.f32.mrb[0].mxu0
        %v889 = vpop.f32.mrb[0].mxu0
        %v890 = vadd.f32 %v761, %v889
        %v891 = vpop.f32.mrb[0].mxu0
        %892 = vmatprep.mubr.bf16.mxu0 0
        %893 = vmatmul.mubr.bf16.gmra.mrb[0].mxu0 %v681
        %v894 = vpop.f32.mrb[0].mxu0
        %v895 = vadd.f32 %v766, %v894
        %v896 = vpop.f32.mrb[0].mxu0
        %v897 = vpop.f32.mrb[0].mxu0
        %v898 = vadd.f32 %v769, %v897
        %v899 = vpop.f32.mrb[0].mxu0
        %900 = vmatprep.mubr.bf16.mxu0 0
        %901 = vmatmul.mubr.bf16.gmra.mrb[0].mxu0 %v684
        %v902 = vpop.f32.mrb[0].mxu0
        %v903 = vadd.f32 %v774, %v902
        %v904 = vpop.f32.mrb[0].mxu0
        %v905 = vpop.f32.mrb[0].mxu0
        %v906 = vadd.f32 %v777, %v905
        %v907 = vpop.f32.mrb[0].mxu0
        %908 = vmatprep.mubr.bf16.mxu0 0
        %909 = vmatmul.mubr.bf16.gmra.mrb[0].mxu0 %v687
        %v910 = vpop.f32.mrb[0].mxu0
        %v911 = vadd.f32 %v782, %v910
        %v912 = vpop.f32.mrb[0].mxu0
        %v913 = vpop.f32.mrb[0].mxu0
        %v914 = vadd.f32 %v785, %v913
        %v915 = vpop.f32.mrb[0].mxu0
        %916 = vmatprep.mubr.bf16.mxu0 0
        %917 = vmatmul.mubr.bf16.gmra.mrb[0].mxu0 %v690
        %v918 = vpop.f32.mrb[0].mxu0
        %v919 = vadd.f32 %v790, %v918
        %v920 = vpop.f32.mrb[0].mxu0
        %v921 = vpop.f32.mrb[0].mxu0
        %v922 = vadd.f32 %v793, %v921
        %v923 = vpop.f32.mrb[0].mxu0
        %924 = vmatprep.mubr.bf16.mxu0 0
        %925 = vmatmul.mubr.bf16.gmra.mrb[0].mxu0 %v693
        %v926 = vpop.f32.mrb[0].mxu0
        %v927 = vadd.f32 %v798, %v926
        %v928 = vpop.f32.mrb[0].mxu0
        %v929 = vpop.f32.mrb[0].mxu0
        %v930 = vadd.f32 %v801, %v929
        %v931 = vpop.f32.mrb[0].mxu0
        %932 = vmatprep.mubr.bf16.mxu0 0
        %933 = vmatmul.mubr.bf16.gmra.mrb[0].mxu0 %v696
        %v934 = vpop.f32.mrb[0].mxu0
        %v935 = vadd.f32 %v806, %v934
        %v936 = vpop.f32.mrb[0].mxu0
        %v937 = vpop.f32.mrb[0].mxu0
        %v938 = vadd.f32 %v809, %v937
        %v939 = vpop.f32.mrb[0].mxu0
        %940 = vmatprep.mubr.bf16.mxu0 0
        %941 = vmatmul.mubr.bf16.gmra.mrb[0].mxu0 %v699
        %v942 = vpop.f32.mrb[0].mxu0
        %v943 = vadd.f32 %v814, %v942
        %v944 = vpop.f32.mrb[0].mxu0
        %v945 = vpop.f32.mrb[0].mxu0
        %v946 = vadd.f32 %v817, %v945
        %v947 = vpop.f32.mrb[0].mxu0
        %948 = vmatprep.mubr.bf16.mxu0 0
        %949 = vmatmul.mubr.bf16.gmra.mrb[0].mxu0 %v702
        %v950 = vpop.f32.mrb[0].mxu0
        %v951 = vadd.f32 %v822, %v950
        %v952 = vpop.f32.mrb[0].mxu0
        %v953 = vpop.f32.mrb[0].mxu0
        %v954 = vadd.f32 %v825, %v953
        %v955 = vpop.f32.mrb[0].mxu0
        %956 = vmatprep.mubr.bf16.mxu0 0
        %957 = vmatmul.mubr.bf16.gmra.mrb[0].mxu0 %v705
        %v958 = vpop.f32.mrb[0].mxu0
        %v959 = vadd.f32 %v830, %v958
        %v960 = vpop.f32.mrb[0].mxu0
        %v961 = vpop.f32.mrb[0].mxu0
        %v962 = vadd.f32 %v833, %v961
        %v963 = vpop.f32.mrb[0].mxu0
        %964 = vdwg.mxu0
        %v965 = vmax.f32 %v871, %v895
        %v966 = vmax.f32 %v874, %v898
        %v967 = vmax.f32 %v879, %v903
        %v968 = vmax.f32 %v882, %v906
        %v969 = vmax.f32 %v887, %v911
        %v970 = vmax.f32 %v890, %v914
        %v971 = vmax.f32 %v965, %v919
        %v972 = vmax.f32 %v966, %v922
        %v973 = vmax.f32 %v967, %v927
        %v974 = vmax.f32 %v968, %v930
        %v975 = vmax.f32 %v969, %v935
        %v976 = vmax.f32 %v970, %v938
        %v977 = vmax.f32 %v971, %v943
        %v978 = vmax.f32 %v972, %v946
        %v979 = vmax.f32 %v973, %v951
        %v980 = vmax.f32 %v974, %v954
        %v981 = vmax.f32 %v975, %v959
        %v982 = vmax.f32 %v976, %v962
        %v983 = vld [vmem:[%s2] sm:$0x1]
        %v985 = vlaneseq
        %v986 = vshrl.u32 %v985, 7
        %v987 = vsub.s32 0, %v986
        %v988 = vrot.slane %v983, %v987
        %v990 = vadd.f32 %v977, %v988
        %v991 = vadd.f32 %v978, %v988
        %v992 = vadd.f32 %v979, %v988
        %v993 = vadd.f32 %v980, %v988
        %v994 = vadd.f32 %v981, %v988
        %v995 = vadd.f32 %v982, %v988
        %v996 = vmax.f32 %v990, 0.0
        %v997 = vmax.f32 %v991, 0.0
        %v998 = vmax.f32 %v992, 0.0
        %v999 = vmax.f32 %v993, 0.0
        %v1000 = vmax.f32 %v994, 0.0
        %v1001 = vmax.f32 %v995, 0.0
        %v1002 = vpack.c.bf16 %v997, %v996
        %v1003 = vpack.c.bf16 %v999, %v998
        %v1004 = vpack.c.bf16 %v1001, %v1000
        %v1008 = vunpack.c.l.b16 %v1002
        %v1009 = vunpack.c.h.b16 %v1002
        %v1010 = vunpack.c.l.b16 %v1003
        %v1011 = vunpack.c.h.b16 %v1003
        %v1012 = vunpack.c.l.b16 %v1004
        %v1013 = vunpack.c.h.b16 %v1004
        %v1014 = vpack.c.b16 %v1008, %v1008
        %v1015 = vpack.c.b16 %v1009, %v1009
        %v1016 = vpack.c.b16 %v1010, %v1010
        %v1017 = vpack.c.b16 %v1011, %v1011
        %v1018 = vpack.c.b16 %v1012, %v1012
        %v1019 = vpack.c.b16 %v1013, %v1013
        %1026 = vst [vmem:[%s295] sm:$0xf] %v1014
        %1027 = vst [vmem:[%s295 + $0x4] sm:$0xf] %v1015
        %1028 = vst [vmem:[%s295 + $0x8] sm:$0xf] %v1016
        %1029 = vst [vmem:[%s295 + $0xc] sm:$0xf] %v1017
        %1030 = vst [vmem:[%s295 + $0x10] sm:$0xf] %v1018
        %1031 = vst [vmem:[%s295 + $0x14] sm:$0xf] %v1019
        %s1032 = smul.u32 6, %s14
        %p1033 = scmp.lt.s32.totalorder %s1032, 11
        %s1034 = scalar_select %p1033, %s1032, 11
        %s1035 = smul.addr %s1034, 4
        %s1036 = scalar_lea.vmem %s3, %s1035
        // Predicated region
        $region59: #{cnn_cifar100_forward.5} parent=53 // pred_check
          %p1037 = pneg %p100
        $region60: #{cnn_cifar100_forward.5} parent=53 // pred_check_branch
          %1039 = sbr.rel (%p1037) target = $region62
        $region61: #{cnn_cifar100_forward.5} parent=53 // pred_region
          %s1040 = smul.u32 6, %s14
        $region62: #{cnn_cifar100_forward.5} parent=53 // pred_fallthru
          _
      $region54: #{cnn_cifar100_forward.5} parent=5 // pred_fallthru
        _
      %p1041 = scmp.le.s32.totalorder 2, %s9
      // Predicated region
      $region63: #{cnn_cifar100_forward.5} parent=5 // pred_check
        %p1042 = pneg %p1041
      $region64: #{cnn_cifar100_forward.5} parent=5 // pred_check_branch
        %1044 = sbr.rel (%p1042) target = $region66
      $region65: #{cnn_cifar100_forward.5} parent=5 // pred_region
        %s1045 = ssub.s32 %s9, 2
        // Predicated region
        $region67: #{cnn_cifar100_forward.5} parent=65 // pred_check
          %p1046 = pneg %p106
        $region68: #{cnn_cifar100_forward.5} parent=65 // pred_check_branch
          %1048 = sbr.rel (%p1046) target = $region70
        $region69: #{cnn_cifar100_forward.5} parent=65 // pred_region
          %s1049 = smul.u32 6, %s15
          %p1050 = scmp.lt.s32.totalorder %s1049, 11
          %s1051 = scalar_select %p1050, %s1049, 11
          %s1052 = smul.addr %s1051, 4
          %s1053 = scalar_lea.vmem %s3, %s1052
        $region70: #{cnn_cifar100_forward.5} parent=65 // pred_fallthru
          _
      $region66: #{cnn_cifar100_forward.5} parent=5 // pred_fallthru
        _
    $region6: #{cnn_cifar100_forward.5} parent=1 // loop_footer
      %s13 = sadd.s32 1, %s9
    $region7: #{cnn_cifar100_forward.5} parent=1 // loop_footer_branch
      %8 = sbr.rel target = $region3
    $region8: #{cnn_cifar100_forward.5} parent=1 // loop_exit
      _

// kernel: cnn_cifar100_forward.6
$region0: #{cnn_cifar100_forward.6}
  #allocation0 [shape = 'u32[]', space=smem, size = 0x4, offset = 0x4, fixed_abs, tag = 'smem constant byte address 0x4 - core index']
  #allocation1 [shape = 'u32[144,128]{1,0:T(1,128)}', space=vmem, size = 0x12000, scoped, tag = 'internal scratch']
  %s0 = inlined_call_operand.vmem [shape: bf16[1,32,576], index: 0, kind: input, shape index: {}]
  %s1 = inlined_call_operand.vmem [shape: bf16[576,128], index: 1, kind: input, shape index: {}]
  %s2 = inlined_call_operand.vmem [shape: f32[1,128], index: 2, kind: input, shape index: {}]
  %s3 = inlined_call_operand.vmem [shape: bf16[32,128], index: 3, kind: output, shape index: {}]
  %s4 = sld [smem:[#allocation0]]
  $region45: #{cnn_cifar100_forward.6} parent=0
    _
  %s6 = ssub.s32 1, %s4
  %s7 = scalar_select 0, %s6, %s4
  loop: start=0, step=1, limit=4
  $region2: #{cnn_cifar100_forward.6} parent=0 // loop_pre_header
    _
  $region3: #{cnn_cifar100_forward.6} parent=0 // loop_header
    %s9 = sphi 0, %s13
    %p10 = scmp.ge.s32.totalorder %s9, 4
    %s19 = sphi 0, %s21
    %s22 = sphi 0, %s19
    %s23 = sphi 0, %s22
    %s39 = sphi 0, %s23
    %s43 = sphi 0, %s43
    %s45 = sphi 0, %s43
    %s46 = sphi 0, %s45
    %s60 = sphi 0, %s46
    %s64 = sphi 0, %s64
    %s66 = sphi 0, %s64
    %s67 = sphi 0, %s66
    %s81 = sphi 0, %s67
    %s87 = sphi 0, %s89
    %s90 = sphi 0, %s87
    %s91 = sphi 0, %s90
    %s107 = sphi 0, %s91
  $region4: #{cnn_cifar100_forward.6} parent=0 // loop_header_branch
    %12 = sbr.rel (%p10) target = $region8
  $region5: #{cnn_cifar100_forward.6} parent=0 // loop_body
    %s14 = ssub.s32 %s9, 1
    %s15 = ssub.s32 %s9, 2
    %s16 = sadd.s32 %s9, 1
    %s17 = ssub.s32 %s9, %s16
    %p18 = scmp.eq.s32.totalorder %s17, 0
    %s20 = sadd.s32 %s19, 1
    %s21 = scalar_select %p18, %s19, %s20
    %p24 = pneg %p18
    %p25 = scmp.eq.s32.totalorder %s9, 1
    %p26 = por %p24, %p25
    %p27 = scmp.ne.s32.totalorder %s19, %s22
    %p28 = scmp.eq.s32.totalorder %s9, 0
    %p29 = por %p27, %p28
    %p30 = scmp.ne.s32.totalorder %s19, %s22
    %p31 = scmp.eq.s32.totalorder %s14, 1
    %p32 = por %p30, %p31
    %p33 = scmp.ne.s32.totalorder %s22, %s23
    %p34 = scmp.eq.s32.totalorder %s14, 0
    %p35 = por %p33, %p34
    %p36 = scmp.ne.s32.totalorder %s22, %s23
    %p37 = scmp.eq.s32.totalorder %s15, 1
    %p38 = por %p36, %p37
    %p40 = scmp.ne.s32.totalorder %s23, %s39
    %p41 = scmp.eq.s32.totalorder %s15, 0
    %p42 = por %p40, %p41
    %s44 = sadd.s32 %s43, 1
    %p47 = scmp.eq.s32.totalorder %s9, 1
    %p48 = scmp.ne.s32.totalorder %s43, %s45
    %p49 = scmp.eq.s32.totalorder %s9, 0
    %p50 = por %p48, %p49
    %p51 = scmp.ne.s32.totalorder %s43, %s45
    %p52 = scmp.eq.s32.totalorder %s14, 1
    %p53 = por %p51, %p52
    %p54 = scmp.ne.s32.totalorder %s45, %s46
    %p55 = scmp.eq.s32.totalorder %s14, 0
    %p56 = por %p54, %p55
    %p57 = scmp.ne.s32.totalorder %s45, %s46
    %p58 = scmp.eq.s32.totalorder %s15, 1
    %p59 = por %p57, %p58
    %p61 = scmp.ne.s32.totalorder %s46, %s60
    %p62 = scmp.eq.s32.totalorder %s15, 0
    %p63 = por %p61, %p62
    %s65 = sadd.s32 %s64, 1
    %p68 = scmp.eq.s32.totalorder %s9, 1
    %p69 = scmp.ne.s32.totalorder %s64, %s66
    %p70 = scmp.eq.s32.totalorder %s9, 0
    %p71 = por %p69, %p70
    %p72 = scmp.ne.s32.totalorder %s64, %s66
    %p73 = scmp.eq.s32.totalorder %s14, 1
    %p74 = por %p72, %p73
    %p75 = scmp.ne.s32.totalorder %s66, %s67
    %p76 = scmp.eq.s32.totalorder %s14, 0
    %p77 = por %p75, %p76
    %p78 = scmp.ne.s32.totalorder %s66, %s67
    %p79 = scmp.eq.s32.totalorder %s15, 1
    %p80 = por %p78, %p79
    %p82 = scmp.ne.s32.totalorder %s67, %s81
    %p83 = scmp.eq.s32.totalorder %s15, 0
    %p84 = por %p82, %p83
    %s85 = ssub.s32 %s9, %s16
    %p86 = scmp.eq.s32.totalorder %s85, 0
    %s88 = sadd.s32 %s87, 1
    %s89 = scalar_select %p86, %s87, %s88
    %p92 = pneg %p86
    %p93 = scmp.eq.s32.totalorder %s9, 1
    %p94 = por %p92, %p93
    %p95 = scmp.ne.s32.totalorder %s87, %s90
    %p96 = scmp.eq.s32.totalorder %s9, 0
    %p97 = por %p95, %p96
    %p98 = scmp.ne.s32.totalorder %s87, %s90
    %p99 = scmp.eq.s32.totalorder %s14, 1
    %p100 = por %p98, %p99
    %p101 = scmp.ne.s32.totalorder %s90, %s91
    %p102 = scmp.eq.s32.totalorder %s14, 0
    %p103 = por %p101, %p102
    %p104 = scmp.ne.s32.totalorder %s90, %s91
    %p105 = scmp.eq.s32.totalorder %s15, 1
    %p106 = por %p104, %p105
    %p108 = scmp.ne.s32.totalorder %s91, %s107
    %p109 = scmp.eq.s32.totalorder %s15, 0
    %p110 = por %p108, %p109
    %p111 = scmp.le.s32.totalorder 1, %s9
    %p112 = scmp.lt.s32.totalorder %s9, 3
    %p113 = pnand %p111, %p112
    %p114 = pneg %p113
    // Predicated region
    $region9: #{cnn_cifar100_forward.6} parent=5 // pred_check
      _
    $region10: #{cnn_cifar100_forward.6} parent=5 // pred_check_branch
      %116 = sbr.rel (%p113) target = $region12
    $region11: #{cnn_cifar100_forward.6} parent=5 // pred_region
      %s117 = ssub.s32 %s9, 1
      // Predicated region
      $region13: #{cnn_cifar100_forward.6} parent=11 // pred_check
        %p118 = pneg %p56
      $region14: #{cnn_cifar100_forward.6} parent=11 // pred_check_branch
        %120 = sbr.rel (%p118) target = $region16
      $region15: #{cnn_cifar100_forward.6} parent=11 // pred_region
        _
      $region16: #{cnn_cifar100_forward.6} parent=11 // pred_fallthru
        _
      // Predicated region
      $region17: #{cnn_cifar100_forward.6} parent=11 // pred_check
        %p121 = pneg %p77
      $region18: #{cnn_cifar100_forward.6} parent=11 // pred_check_branch
        %123 = sbr.rel (%p121) target = $region20
      $region19: #{cnn_cifar100_forward.6} parent=11 // pred_region
        _
      $region20: #{cnn_cifar100_forward.6} parent=11 // pred_fallthru
        _
    $region12: #{cnn_cifar100_forward.6} parent=5 // pred_fallthru
      _
    %p124 = scmp.lt.s32.totalorder %s9, 2
    // Predicated region
    $region21: #{cnn_cifar100_forward.6} parent=5 // pred_check
      %p125 = pneg %p124
    $region22: #{cnn_cifar100_forward.6} parent=5 // pred_check_branch
      %127 = sbr.rel (%p125) target = $region24
    $region23: #{cnn_cifar100_forward.6} parent=5 // pred_region
      // Predicated region
      $region25: #{cnn_cifar100_forward.6} parent=23 // pred_check
        %p128 = pneg %p29
      $region26: #{cnn_cifar100_forward.6} parent=23 // pred_check_branch
        %130 = sbr.rel (%p128) target = $region28
      $region27: #{cnn_cifar100_forward.6} parent=23 // pred_region
        %s131 = smul.u32 2, %s9
        %p132 = scmp.lt.s32.totalorder %s131, 3
        %s133 = scalar_select %p132, %s131, 3
        %s134 = smul.addr %s133, 5
        %s135 = smul.addr %s134, 4
        %s136 = scalar_lea.vmem %s0, %s135
        %s137 = smul.u32 2, %s9
      $region28: #{cnn_cifar100_forward.6} parent=23 // pred_fallthru
        _
    $region24: #{cnn_cifar100_forward.6} parent=5 // pred_fallthru
      _
    %p138 = scmp.le.s32.totalorder 1, %s9
    %p139 = scmp.lt.s32.totalorder %s9, 3
    %p140 = pnand %p138, %p139
    %p141 = pneg %p140
    // Predicated region
    $region29: #{cnn_cifar100_forward.6} parent=5 // pred_check
      _
    $region30: #{cnn_cifar100_forward.6} parent=5 // pred_check_branch
      %143 = sbr.rel (%p140) target = $region32
    $region31: #{cnn_cifar100_forward.6} parent=5 // pred_region
      %s144 = ssub.s32 %s9, 1
      %s145 = smul.u32 2, %s14
      %p146 = scmp.lt.s32.totalorder %s145, 3
      %s147 = scalar_select %p146, %s145, 3
      %s148 = smul.addr %s147, 5
      %s149 = smul.addr %s148, 4
      %s150 = scalar_lea.vmem %s0, %s149
      %p151 = pneg %p35
      %p152 = pneg %p32
      %p153 = pneg %p56
      %p154 = pneg %p53
      %p155 = pneg %p77
      %p156 = pneg %p74
      %p157 = pneg %p103
      %p158 = pneg %p100
      %s159 = smul.u32 2, %s14
      %p160 = scmp.lt.s32.totalorder %s159, 3
      %s161 = scalar_select %p160, %s159, 3
      %s162 = smul.addr %s161, 4
      %s163 = scalar_lea.vmem %s3, %s162
      %s164 = smul.u32 2, %s14
      %p165 = scmp.lt.s32.totalorder %s164, 3
      %s166 = scalar_select %p165, %s164, 3
      %s167 = smul.addr %s166, 5
      %s168 = smul.addr %s167, 4
      %s169 = scalar_lea.vmem %s0, %s168
      %s170 = smul.u32 2, %s14
      %s171 = smul.u32 2, %s14
      %p172 = scmp.lt.s32.totalorder %s171, 3
      %s173 = scalar_select %p172, %s171, 3
      %s174 = smul.addr %s173, 4
      %s175 = scalar_lea.vmem %s3, %s174
      %s176 = smul.u32 2, %s14
      %v178 = vld [vmem:[%s169] sm:$0xff]
      %v179 = vld [vmem:[%s169 + $0x8] sm:$0xff]
      %v180 = vld [vmem:[%s169 + $0x10] sm:$0xf]
      %v181 = vld [vmem:[%s169 + $0x14] sm:$0xff]
      %v182 = vld [vmem:[%s169 + $0x1c] sm:$0xff]
      %v183 = vld [vmem:[%s169 + $0x24] sm:$0xf]
      %v184 = vld [vmem:[%s1] sm:$0xf]
      %v185 = vld [vmem:[%s1 + $0x4] sm:$0xf]
      %v186 = vld [vmem:[%s1 + $0x8] sm:$0xf]
      %v187 = vld [vmem:[%s1 + $0xc] sm:$0xf]
      %v188 = vld [vmem:[%s1 + $0x10] sm:$0xf]
      %v189 = vld [vmem:[%s1 + $0x14] sm:$0xf]
      %v190 = vld [vmem:[%s1 + $0x18] sm:$0xf]
      %v191 = vld [vmem:[%s1 + $0x1c] sm:$0xf]
      %v192 = vld [vmem:[%s1 + $0x20] sm:$0xf]
      %v193 = vld [vmem:[%s1 + $0x24] sm:$0xf]
      %v194 = vld [vmem:[%s1 + $0x28] sm:$0xf]
      %v195 = vld [vmem:[%s1 + $0x2c] sm:$0xf]
      %v196 = vld [vmem:[%s1 + $0x30] sm:$0xf]
      %v197 = vld [vmem:[%s1 + $0x34] sm:$0xf]
      %v198 = vld [vmem:[%s1 + $0x38] sm:$0xf]
      %v199 = vld [vmem:[%s1 + $0x3c] sm:$0xf]
      %v200 = vld [vmem:[%s1 + $0x40] sm:$0xf]
      %v201 = vld [vmem:[%s1 + $0x44] sm:$0xf]
      %v202 = vld [vmem:[%s1 + $0x48] sm:$0xf]
      %v203 = vld [vmem:[%s1 + $0x4c] sm:$0xf]
      %v204 = vld [vmem:[%s1 + $0x50] sm:$0xf]
      %v205 = vld [vmem:[%s1 + $0x54] sm:$0xf]
      %v206 = vld [vmem:[%s1 + $0x58] sm:$0xf]
      %v207 = vld [vmem:[%s1 + $0x5c] sm:$0xf]
      %v208 = vld [vmem:[%s1 + $0x60] sm:$0xf]
      %v209 = vld [vmem:[%s1 + $0x64] sm:$0xf]
      %v210 = vld [vmem:[%s1 + $0x68] sm:$0xf]
      %v211 = vld [vmem:[%s1 + $0x6c] sm:$0xf]
      %v212 = vld [vmem:[%s1 + $0x70] sm:$0xf]
      %v213 = vld [vmem:[%s1 + $0x74] sm:$0xf]
      %v214 = vld [vmem:[%s1 + $0x78] sm:$0xf]
      %v215 = vld [vmem:[%s1 + $0x7c] sm:$0xf]
      %v216 = vld [vmem:[%s1 + $0x80] sm:$0xf]
      %v217 = vld [vmem:[%s1 + $0x84] sm:$0xf]
      %v218 = vld [vmem:[%s1 + $0x88] sm:$0xf]
      %v219 = vld [vmem:[%s1 + $0x8c] sm:$0xf]
      %v220 = vld [vmem:[%s1 + $0x90] sm:$0xf]
      %v221 = vld [vmem:[%s1 + $0x94] sm:$0xf]
      %v222 = vld [vmem:[%s1 + $0x98] sm:$0xf]
      %v223 = vld [vmem:[%s1 + $0x9c] sm:$0xf]
      %v224 = vld [vmem:[%s1 + $0xa0] sm:$0xf]
      %v225 = vld [vmem:[%s1 + $0xa4] sm:$0xf]
      %v226 = vld [vmem:[%s1 + $0xa8] sm:$0xf]
      %v227 = vld [vmem:[%s1 + $0xac] sm:$0xf]
      %v228 = vld [vmem:[%s1 + $0xb0] sm:$0xf]
      %v229 = vld [vmem:[%s1 + $0xb4] sm:$0xf]
      %v230 = vld [vmem:[%s1 + $0xb8] sm:$0xf]
      %v231 = vld [vmem:[%s1 + $0xbc] sm:$0xf]
      %v232 = vld [vmem:[%s1 + $0xc0] sm:$0xf]
      %v233 = vld [vmem:[%s1 + $0xc4] sm:$0xf]
      %v234 = vld [vmem:[%s1 + $0xc8] sm:$0xf]
      %v235 = vld [vmem:[%s1 + $0xcc] sm:$0xf]
      %v236 = vld [vmem:[%s1 + $0xd0] sm:$0xf]
      %v237 = vld [vmem:[%s1 + $0xd4] sm:$0xf]
      %v238 = vld [vmem:[%s1 + $0xd8] sm:$0xf]
      %v239 = vld [vmem:[%s1 + $0xdc] sm:$0xf]
      %v240 = vld [vmem:[%s1 + $0xe0] sm:$0xf]
      %v241 = vld [vmem:[%s1 + $0xe4] sm:$0xf]
      %v242 = vld [vmem:[%s1 + $0xe8] sm:$0xf]
      %v243 = vld [vmem:[%s1 + $0xec] sm:$0xf]
      %v244 = vld [vmem:[%s1 + $0xf0] sm:$0xf]
      %v245 = vld [vmem:[%s1 + $0xf4] sm:$0xf]
      %v246 = vld [vmem:[%s1 + $0xf8] sm:$0xf]
      %v247 = vld [vmem:[%s1 + $0xfc] sm:$0xf]
      %v248 = vld [vmem:[%s1 + $0x100] sm:$0xf]
      %v249 = vld [vmem:[%s1 + $0x104] sm:$0xf]
      %v250 = vld [vmem:[%s1 + $0x108] sm:$0xf]
      %v251 = vld [vmem:[%s1 + $0x10c] sm:$0xf]
      %v252 = vld [vmem:[%s1 + $0x110] sm:$0xf]
      %v253 = vld [vmem:[%s1 + $0x114] sm:$0xf]
      %v254 = vld [vmem:[%s1 + $0x118] sm:$0xf]
      %v255 = vld [vmem:[%s1 + $0x11c] sm:$0xf]
      %v256 = vld [vmem:[%s2] sm:$0x1]
      %v258 = vlaneseq
      %v259 = vshrl.u32 %v258, 7
      %v260 = vsub.s32 0, %v259
      %v261 = vrot.slane %v256, %v260
      %v269 = vunpack.c.l.b16 %v178
      %v270 = vunpack.c.h.b16 %v178
      %v271 = vunpack.c.l.b16 %v179
      %v272 = vunpack.c.h.b16 %v179
      %v273 = vunpack.c.l.b16 %v180
      %v274 = vunpack.c.l.b16 %v181
      %v275 = vunpack.c.h.b16 %v181
      %v276 = vunpack.c.l.b16 %v182
      %v277 = vunpack.c.h.b16 %v182
      %v278 = vunpack.c.l.b16 %v183
      %v279 = vpack.c.b16 %v274, %v269
      %v280 = vpack.c.b16 %v275, %v270
      %v281 = vpack.c.b16 %v276, %v271
      %v282 = vpack.c.b16 %v277, %v272
      %v283 = vpack.c.b16 %v278, %v273
      %v360 = vunpack.c.l.b16 %v184
      %v361 = vunpack.c.l.b16 %v185
      %v362 = vunpack.c.l.b16 %v186
      %v363 = vunpack.c.l.b16 %v187
      %v364 = vunpack.c.l.b16 %v188
      %v365 = vunpack.c.l.b16 %v189
      %v366 = vunpack.c.l.b16 %v190
      %v367 = vunpack.c.l.b16 %v191
      %v368 = vunpack.c.l.b16 %v192
      %v369 = vunpack.c.l.b16 %v193
      %v370 = vunpack.c.l.b16 %v194
      %v371 = vunpack.c.l.b16 %v195
      %v372 = vunpack.c.l.b16 %v196
      %v373 = vunpack.c.l.b16 %v197
      %v374 = vunpack.c.l.b16 %v198
      %v375 = vunpack.c.l.b16 %v199
      %v376 = vunpack.c.l.b16 %v200
      %v377 = vunpack.c.l.b16 %v201
      %v378 = vunpack.c.l.b16 %v202
      %v379 = vunpack.c.l.b16 %v203
      %v380 = vunpack.c.l.b16 %v204
      %v381 = vunpack.c.l.b16 %v205
      %v382 = vunpack.c.l.b16 %v206
      %v383 = vunpack.c.l.b16 %v207
      %v384 = vunpack.c.l.b16 %v208
      %v385 = vunpack.c.l.b16 %v209
      %v386 = vunpack.c.l.b16 %v210
      %v387 = vunpack.c.l.b16 %v211
      %v388 = vunpack.c.l.b16 %v212
      %v389 = vunpack.c.l.b16 %v213
      %v390 = vunpack.c.l.b16 %v214
      %v391 = vunpack.c.l.b16 %v215
      %v392 = vunpack.c.l.b16 %v216
      %v393 = vunpack.c.l.b16 %v217
      %v394 = vunpack.c.l.b16 %v218
      %v395 = vunpack.c.l.b16 %v219
      %v396 = vunpack.c.l.b16 %v220
      %v397 = vunpack.c.l.b16 %v221
      %v398 = vunpack.c.l.b16 %v222
      %v399 = vunpack.c.l.b16 %v223
      %v400 = vunpack.c.l.b16 %v224
      %v401 = vunpack.c.l.b16 %v225
      %v402 = vunpack.c.l.b16 %v226
      %v403 = vunpack.c.l.b16 %v227
      %v404 = vunpack.c.l.b16 %v228
      %v405 = vunpack.c.l.b16 %v229
      %v406 = vunpack.c.l.b16 %v230
      %v407 = vunpack.c.l.b16 %v231
      %v408 = vunpack.c.l.b16 %v232
      %v409 = vunpack.c.l.b16 %v233
      %v410 = vunpack.c.l.b16 %v234
      %v411 = vunpack.c.l.b16 %v235
      %v412 = vunpack.c.l.b16 %v236
      %v413 = vunpack.c.l.b16 %v237
      %v414 = vunpack.c.l.b16 %v238
      %v415 = vunpack.c.l.b16 %v239
      %v416 = vunpack.c.l.b16 %v240
      %v417 = vunpack.c.l.b16 %v241
      %v418 = vunpack.c.l.b16 %v242
      %v419 = vunpack.c.l.b16 %v243
      %v420 = vunpack.c.l.b16 %v244
      %v421 = vunpack.c.l.b16 %v245
      %v422 = vunpack.c.l.b16 %v246
      %v423 = vunpack.c.l.b16 %v247
      %v424 = vunpack.c.l.b16 %v248
      %v425 = vunpack.c.l.b16 %v249
      %v426 = vunpack.c.l.b16 %v250
      %v427 = vunpack.c.l.b16 %v251
      %v428 = vunpack.c.l.b16 %v252
      %v429 = vunpack.c.l.b16 %v253
      %v430 = vunpack.c.l.b16 %v254
      %v431 = vunpack.c.l.b16 %v255
      %v432 = vpack.c.b16 %v361, %v360
      %v433 = vpack.c.b16 %v363, %v362
      %v434 = vpack.c.b16 %v365, %v364
      %v435 = vpack.c.b16 %v367, %v366
      %v436 = vpack.c.b16 %v369, %v368
      %v437 = vpack.c.b16 %v371, %v370
      %v438 = vpack.c.b16 %v373, %v372
      %v439 = vpack.c.b16 %v375, %v374
      %v440 = vpack.c.b16 %v377, %v376
      %v441 = vpack.c.b16 %v379, %v378
      %v442 = vpack.c.b16 %v381, %v380
      %v443 = vpack.c.b16 %v383, %v382
      %v444 = vpack.c.b16 %v385, %v384
      %v445 = vpack.c.b16 %v387, %v386
      %v446 = vpack.c.b16 %v389, %v388
      %v447 = vpack.c.b16 %v391, %v390
      %v448 = vpack.c.b16 %v393, %v392
      %v449 = vpack.c.b16 %v395, %v394
      %v450 = vpack.c.b16 %v397, %v396
      %v451 = vpack.c.b16 %v399, %v398
      %v452 = vpack.c.b16 %v401, %v400
      %v453 = vpack.c.b16 %v403, %v402
      %v454 = vpack.c.b16 %v405, %v404
      %v455 = vpack.c.b16 %v407, %v406
      %v456 = vpack.c.b16 %v409, %v408
      %v457 = vpack.c.b16 %v411, %v410
      %v458 = vpack.c.b16 %v413, %v412
      %v459 = vpack.c.b16 %v415, %v414
      %v460 = vpack.c.b16 %v417, %v416
      %v461 = vpack.c.b16 %v419, %v418
      %v462 = vpack.c.b16 %v421, %v420
      %v463 = vpack.c.b16 %v423, %v422
      %v464 = vpack.c.b16 %v425, %v424
      %v465 = vpack.c.b16 %v427, %v426
      %v466 = vpack.c.b16 %v429, %v428
      %v467 = vpack.c.b16 %v431, %v430
      %vm504 = vcmask 523264
      %v506 = vsel %vm504, %v283, 0
      %508 = vmatprep.subr.bf16.mxu0 0
      %509 = vmatpush1.bf16.msra.mxu0 %v432
      %510 = vmatprep.subr.bf16.mxu0 0
      %511 = vmatpush1.bf16.msra.mxu0 %v433
      %512 = vmatprep.subr.bf16.mxu0 0
      %513 = vmatpush1.bf16.msra.mxu0 %v434
      %514 = vmatprep.subr.bf16.mxu0 0
      %515 = vmatpush1.bf16.msra.mxu0 %v435
      %516 = vmatprep.subr.bf16.mxu0 0
      %517 = vmatpush1.bf16.msra.mxu0 %v436
      %518 = vmatprep.subr.bf16.mxu0 0
      %519 = vmatpush1.bf16.msra.mxu0 %v437
      %520 = vmatprep.subr.bf16.mxu0 0
      %521 = vmatpush1.bf16.msra.mxu0 %v438
      %522 = vmatprep.subr.bf16.mxu0 0
      %523 = vmatpush1.bf16.msra.mxu0 %v439
      %524 = vmatprep.subr.bf16.mxu0 0
      %525 = vmatpush1.bf16.msra.mxu0 %v440
      %526 = vmatprep.subr.bf16.mxu0 0
      %527 = vmatpush1.bf16.msra.mxu0 %v441
      %528 = vmatprep.subr.bf16.mxu0 0
      %529 = vmatpush1.bf16.msra.mxu0 %v442
      %530 = vmatprep.subr.bf16.mxu0 0
      %531 = vmatpush1.bf16.msra.mxu0 %v443
      %532 = vmatprep.subr.bf16.mxu0 0
      %533 = vmatpush1.bf16.msra.mxu0 %v444
      %534 = vmatprep.subr.bf16.mxu0 0
      %535 = vmatpush1.bf16.msra.mxu0 %v445
      %536 = vmatprep.subr.bf16.mxu0 0
      %537 = vmatpush1.bf16.msra.mxu0 %v446
      %538 = vmatprep.subr.bf16.mxu0 0
      %539 = vmatpush1.bf16.msra.mxu0 %v447
      %540 = vmatprep.mubr.bf16.mxu0 %v280
      %541 = vmatmul.mubr.bf16.gmra.mrb[0].mxu0 %v279
      %v542 = vpop.f32.mrb[0].mxu0
      %v543 = vadd.f32 %v261, %v542
      %v544 = vpop.f32.mrb[0].mxu0
      %v545 = vpop.f32.mrb[0].mxu0
      %v546 = vadd.f32 %v261, %v545
      %v547 = vpop.f32.mrb[0].mxu0
      %548 = vdwg.mxu0
      %549 = vmatprep.subr.bf16.mxu0 0
      %550 = vmatpush1.bf16.msra.mxu0 %v448
      %551 = vmatprep.subr.bf16.mxu0 0
      %552 = vmatpush1.bf16.msra.mxu0 %v449
      %553 = vmatprep.subr.bf16.mxu0 0
      %554 = vmatpush1.bf16.msra.mxu0 %v450
      %555 = vmatprep.subr.bf16.mxu0 0
      %556 = vmatpush1.bf16.msra.mxu0 %v451
      %557 = vmatprep.subr.bf16.mxu0 0
      %558 = vmatpush1.bf16.msra.mxu0 %v452
      %559 = vmatprep.subr.bf16.mxu0 0
      %560 = vmatpush1.bf16.msra.mxu0 %v453
      %561 = vmatprep.subr.bf16.mxu0 0
      %562 = vmatpush1.bf16.msra.mxu0 %v454
      %563 = vmatprep.subr.bf16.mxu0 0
      %564 = vmatpush1.bf16.msra.mxu0 %v455
      %565 = vmatprep.subr.bf16.mxu0 0
      %566 = vmatpush1.bf16.msra.mxu0 %v456
      %567 = vmatprep.subr.bf16.mxu0 0
      %568 = vmatpush1.bf16.msra.mxu0 %v457
      %569 = vmatprep.subr.bf16.mxu0 0
      %570 = vmatpush1.bf16.msra.mxu0 %v458
      %571 = vmatprep.subr.bf16.mxu0 0
      %572 = vmatpush1.bf16.msra.mxu0 %v459
      %573 = vmatprep.subr.bf16.mxu0 0
      %574 = vmatpush1.bf16.msra.mxu0 %v460
      %575 = vmatprep.subr.bf16.mxu0 0
      %576 = vmatpush1.bf16.msra.mxu0 %v461
      %577 = vmatprep.subr.bf16.mxu0 0
      %578 = vmatpush1.bf16.msra.mxu0 %v462
      %579 = vmatprep.subr.bf16.mxu0 0
      %580 = vmatpush1.bf16.msra.mxu0 %v463
      %581 = vmatprep.mubr.bf16.mxu0 %v282
      %582 = vmatmul.mubr.bf16.gmra.mrb[0].mxu0 %v281
      %v583 = vpop.f32.mrb[0].mxu0
      %v584 = vadd.f32 %v543, %v583
      %v585 = vpop.f32.mrb[0].mxu0
      %v586 = vpop.f32.mrb[0].mxu0
      %v587 = vadd.f32 %v546, %v586
      %v588 = vpop.f32.mrb[0].mxu0
      %589 = vdwg.mxu0
      %590 = vmatprep.subr.bf16.mxu0 0
      %591 = vmatpush1.bf16.msra.mxu0 %v464
      %592 = vmatprep.subr.bf16.mxu0 0
      %593 = vmatpush1.bf16.msra.mxu0 %v465
      %594 = vmatprep.subr.bf16.mxu0 0
      %595 = vmatpush1.bf16.msra.mxu0 %v466
      %596 = vmatprep.subr.bf16.mxu0 0
      %597 = vmatpush1.bf16.msra.mxu0 %v467
      %598 = vmatprep.subr.bf16.mxu0 0
      %599 = vmatpush1.bf16.msra.mxu0 0
      %600 = vmatprep.subr.bf16.mxu0 0
      %601 = vmatpush1.bf16.msra.mxu0 0
      %602 = vmatprep.subr.bf16.mxu0 0
      %603 = vmatpush1.bf16.msra.mxu0 0
      %604 = vmatprep.subr.bf16.mxu0 0
      %605 = vmatpush1.bf16.msra.mxu0 0
      %606 = vmatprep.subr.bf16.mxu0 0
      %607 = vmatpush1.bf16.msra.mxu0 0
      %608 = vmatprep.subr.bf16.mxu0 0
      %609 = vmatpush1.bf16.msra.mxu0 0
      %610 = vmatprep.subr.bf16.mxu0 0
      %611 = vmatpush1.bf16.msra.mxu0 0
      %612 = vmatprep.subr.bf16.mxu0 0
      %613 = vmatpush1.bf16.msra.mxu0 0
      %614 = vmatprep.subr.bf16.mxu0 0
      %615 = vmatpush1.bf16.msra.mxu0 0
      %616 = vmatprep.subr.bf16.mxu0 0
      %617 = vmatpush1.bf16.msra.mxu0 0
      %618 = vmatprep.subr.bf16.mxu0 0
      %619 = vmatpush1.bf16.msra.mxu0 0
      %620 = vmatprep.subr.bf16.mxu0 0
      %621 = vmatpush1.bf16.msra.mxu0 0
      %622 = vmatprep.mubr.bf16.mxu0 0
      %623 = vmatmul.mubr.bf16.gmra.mrb[0].mxu0 %v506
      %v624 = vpop.f32.mrb[0].mxu0
      %v625 = vadd.f32 %v584, %v624
      %v626 = vpop.f32.mrb[0].mxu0
      %v627 = vpop.f32.mrb[0].mxu0
      %v628 = vadd.f32 %v587, %v627
      %v629 = vpop.f32.mrb[0].mxu0
      %630 = vdwg.mxu0
      %v631 = vmax.f32 %v625, 0.0
      %v632 = vmax.f32 %v628, 0.0
      %v633 = vpack.c.bf16 %v632, %v631
      %v635 = vunpack.c.l.b16 %v633
      %v636 = vunpack.c.h.b16 %v633
      %v637 = vpack.c.b16 %v635, %v635
      %v638 = vpack.c.b16 %v636, %v636
      %641 = vst [vmem:[%s175] sm:$0xf] %v637
      %642 = vst [vmem:[%s175 + $0x4] sm:$0xf] %v638
      %s643 = smul.u32 2, %s14
      %p644 = scmp.lt.s32.totalorder %s643, 3
      %s645 = scalar_select %p644, %s643, 3
      %s646 = smul.addr %s645, 4
      %s647 = scalar_lea.vmem %s3, %s646
      // Predicated region
      $region33: #{cnn_cifar100_forward.6} parent=31 // pred_check
        %p648 = pneg %p100
      $region34: #{cnn_cifar100_forward.6} parent=31 // pred_check_branch
        %650 = sbr.rel (%p648) target = $region36
      $region35: #{cnn_cifar100_forward.6} parent=31 // pred_region
        %s651 = smul.u32 2, %s14
      $region36: #{cnn_cifar100_forward.6} parent=31 // pred_fallthru
        _
    $region32: #{cnn_cifar100_forward.6} parent=5 // pred_fallthru
      _
    %p652 = scmp.le.s32.totalorder 2, %s9
    // Predicated region
    $region37: #{cnn_cifar100_forward.6} parent=5 // pred_check
      %p653 = pneg %p652
    $region38: #{cnn_cifar100_forward.6} parent=5 // pred_check_branch
      %655 = sbr.rel (%p653) target = $region40
    $region39: #{cnn_cifar100_forward.6} parent=5 // pred_region
      %s656 = ssub.s32 %s9, 2
      // Predicated region
      $region41: #{cnn_cifar100_forward.6} parent=39 // pred_check
        %p657 = pneg %p106
      $region42: #{cnn_cifar100_forward.6} parent=39 // pred_check_branch
        %659 = sbr.rel (%p657) target = $region44
      $region43: #{cnn_cifar100_forward.6} parent=39 // pred_region
        %s660 = smul.u32 2, %s15
        %p661 = scmp.lt.s32.totalorder %s660, 3
        %s662 = scalar_select %p661, %s660, 3
        %s663 = smul.addr %s662, 4
        %s664 = scalar_lea.vmem %s3, %s663
      $region44: #{cnn_cifar100_forward.6} parent=39 // pred_fallthru
        _
    $region40: #{cnn_cifar100_forward.6} parent=5 // pred_fallthru
      _
  $region6: #{cnn_cifar100_forward.6} parent=0 // loop_footer
    %s13 = sadd.s32 1, %s9
  $region7: #{cnn_cifar100_forward.6} parent=0 // loop_footer_branch
    %8 = sbr.rel target = $region3
  $region8: #{cnn_cifar100_forward.6} parent=0 // loop_exit
    _

// kernel: cnn_cifar100_forward.7
$region0: #{cnn_cifar100_forward.7}
  #allocation0 [shape = 'u32[]', space=smem, size = 0x4, offset = 0x4, fixed_abs, tag = 'smem constant byte address 0x4 - core index']
  #allocation1 [shape = 'u32[144,128]{1,0:T(1,128)}', space=vmem, size = 0x12000, scoped, tag = 'internal scratch']
  %s0 = inlined_call_operand.vmem [shape: bf16[16,1024], index: 0, kind: input, shape index: {}]
  %s1 = inlined_call_operand.vmem [shape: bf16[1024,64], index: 1, kind: input, shape index: {}]
  %s2 = inlined_call_operand.vmem [shape: f32[1,64], index: 2, kind: input, shape index: {}]
  %s3 = inlined_call_operand.vmem [shape: bf16[64,128], index: 3, kind: input, shape index: {}]
  %s4 = inlined_call_operand.vmem [shape: f32[1,128], index: 4, kind: input, shape index: {}]
  %s5 = inlined_call_operand.vmem [shape: f32[16,128], index: 5, kind: output, shape index: {}]
  %s6 = sld [smem:[#allocation0]]
  $region30: #{cnn_cifar100_forward.7} parent=0
    _
  %s8 = ssub.s32 1, %s6
  %s9 = scalar_select 0, %s8, %s6
  // Predicated region
  $region2: #{cnn_cifar100_forward.7} parent=0 // pred_check
    _
  $region3: #{cnn_cifar100_forward.7} parent=0 // pred_check_branch
    %11 = sbr.rel (0) target = $region5
  $region4: #{cnn_cifar100_forward.7} parent=0 // pred_region
    _
  $region5: #{cnn_cifar100_forward.7} parent=0 // pred_fallthru
    _
  // Predicated region
  $region6: #{cnn_cifar100_forward.7} parent=0 // pred_check
    _
  $region7: #{cnn_cifar100_forward.7} parent=0 // pred_check_branch
    %13 = sbr.rel (0) target = $region9
  $region8: #{cnn_cifar100_forward.7} parent=0 // pred_region
    _
  $region9: #{cnn_cifar100_forward.7} parent=0 // pred_fallthru
    _
  // Predicated region
  $region10: #{cnn_cifar100_forward.7} parent=0 // pred_check
    _
  $region11: #{cnn_cifar100_forward.7} parent=0 // pred_check_branch
    %15 = sbr.rel (0) target = $region13
  $region12: #{cnn_cifar100_forward.7} parent=0 // pred_region
    _
  $region13: #{cnn_cifar100_forward.7} parent=0 // pred_fallthru
    _
  // Predicated region
  $region14: #{cnn_cifar100_forward.7} parent=0 // pred_check
    _
  $region15: #{cnn_cifar100_forward.7} parent=0 // pred_check_branch
    %17 = sbr.rel (0) target = $region17
  $region16: #{cnn_cifar100_forward.7} parent=0 // pred_region
    _
  $region17: #{cnn_cifar100_forward.7} parent=0 // pred_fallthru
    _
  // Predicated region
  $region18: #{cnn_cifar100_forward.7} parent=0 // pred_check
    _
  $region19: #{cnn_cifar100_forward.7} parent=0 // pred_check_branch
    %19 = sbr.rel (0) target = $region21
  $region20: #{cnn_cifar100_forward.7} parent=0 // pred_region
    _
  $region21: #{cnn_cifar100_forward.7} parent=0 // pred_fallthru
    _
  %v21 = vld [vmem:[%s0] sm:$0xff]
  %v22 = vld [vmem:[%s0 + $0x8] sm:$0xff]
  %v23 = vld [vmem:[%s0 + $0x10] sm:$0xff]
  %v24 = vld [vmem:[%s0 + $0x18] sm:$0xff]
  %v25 = vld [vmem:[%s0 + $0x20] sm:$0xff]
  %v26 = vld [vmem:[%s0 + $0x28] sm:$0xff]
  %v27 = vld [vmem:[%s0 + $0x30] sm:$0xff]
  %v28 = vld [vmem:[%s0 + $0x38] sm:$0xff]
  %v29 = vld [vmem:[%s1] sm:$0xf]
  %v30 = vld [vmem:[%s1 + $0x4] sm:$0xf]
  %v31 = vld [vmem:[%s1 + $0x8] sm:$0xf]
  %v32 = vld [vmem:[%s1 + $0xc] sm:$0xf]
  %v33 = vld [vmem:[%s1 + $0x10] sm:$0xf]
  %v34 = vld [vmem:[%s1 + $0x14] sm:$0xf]
  %v35 = vld [vmem:[%s1 + $0x18] sm:$0xf]
  %v36 = vld [vmem:[%s1 + $0x1c] sm:$0xf]
  %v37 = vld [vmem:[%s1 + $0x20] sm:$0xf]
  %v38 = vld [vmem:[%s1 + $0x24] sm:$0xf]
  %v39 = vld [vmem:[%s1 + $0x28] sm:$0xf]
  %v40 = vld [vmem:[%s1 + $0x2c] sm:$0xf]
  %v41 = vld [vmem:[%s1 + $0x30] sm:$0xf]
  %v42 = vld [vmem:[%s1 + $0x34] sm:$0xf]
  %v43 = vld [vmem:[%s1 + $0x38] sm:$0xf]
  %v44 = vld [vmem:[%s1 + $0x3c] sm:$0xf]
  %v45 = vld [vmem:[%s1 + $0x40] sm:$0xf]
  %v46 = vld [vmem:[%s1 + $0x44] sm:$0xf]
  %v47 = vld [vmem:[%s1 + $0x48] sm:$0xf]
  %v48 = vld [vmem:[%s1 + $0x4c] sm:$0xf]
  %v49 = vld [vmem:[%s1 + $0x50] sm:$0xf]
  %v50 = vld [vmem:[%s1 + $0x54] sm:$0xf]
  %v51 = vld [vmem:[%s1 + $0x58] sm:$0xf]
  %v52 = vld [vmem:[%s1 + $0x5c] sm:$0xf]
  %v53 = vld [vmem:[%s1 + $0x60] sm:$0xf]
  %v54 = vld [vmem:[%s1 + $0x64] sm:$0xf]
  %v55 = vld [vmem:[%s1 + $0x68] sm:$0xf]
  %v56 = vld [vmem:[%s1 + $0x6c] sm:$0xf]
  %v57 = vld [vmem:[%s1 + $0x70] sm:$0xf]
  %v58 = vld [vmem:[%s1 + $0x74] sm:$0xf]
  %v59 = vld [vmem:[%s1 + $0x78] sm:$0xf]
  %v60 = vld [vmem:[%s1 + $0x7c] sm:$0xf]
  %v61 = vld [vmem:[%s1 + $0x80] sm:$0xf]
  %v62 = vld [vmem:[%s1 + $0x84] sm:$0xf]
  %v63 = vld [vmem:[%s1 + $0x88] sm:$0xf]
  %v64 = vld [vmem:[%s1 + $0x8c] sm:$0xf]
  %v65 = vld [vmem:[%s1 + $0x90] sm:$0xf]
  %v66 = vld [vmem:[%s1 + $0x94] sm:$0xf]
  %v67 = vld [vmem:[%s1 + $0x98] sm:$0xf]
  %v68 = vld [vmem:[%s1 + $0x9c] sm:$0xf]
  %v69 = vld [vmem:[%s1 + $0xa0] sm:$0xf]
  %v70 = vld [vmem:[%s1 + $0xa4] sm:$0xf]
  %v71 = vld [vmem:[%s1 + $0xa8] sm:$0xf]
  %v72 = vld [vmem:[%s1 + $0xac] sm:$0xf]
  %v73 = vld [vmem:[%s1 + $0xb0] sm:$0xf]
  %v74 = vld [vmem:[%s1 + $0xb4] sm:$0xf]
  %v75 = vld [vmem:[%s1 + $0xb8] sm:$0xf]
  %v76 = vld [vmem:[%s1 + $0xbc] sm:$0xf]
  %v77 = vld [vmem:[%s1 + $0xc0] sm:$0xf]
  %v78 = vld [vmem:[%s1 + $0xc4] sm:$0xf]
  %v79 = vld [vmem:[%s1 + $0xc8] sm:$0xf]
  %v80 = vld [vmem:[%s1 + $0xcc] sm:$0xf]
  %v81 = vld [vmem:[%s1 + $0xd0] sm:$0xf]
  %v82 = vld [vmem:[%s1 + $0xd4] sm:$0xf]
  %v83 = vld [vmem:[%s1 + $0xd8] sm:$0xf]
  %v84 = vld [vmem:[%s1 + $0xdc] sm:$0xf]
  %v85 = vld [vmem:[%s1 + $0xe0] sm:$0xf]
  %v86 = vld [vmem:[%s1 + $0xe4] sm:$0xf]
  %v87 = vld [vmem:[%s1 + $0xe8] sm:$0xf]
  %v88 = vld [vmem:[%s1 + $0xec] sm:$0xf]
  %v89 = vld [vmem:[%s1 + $0xf0] sm:$0xf]
  %v90 = vld [vmem:[%s1 + $0xf4] sm:$0xf]
  %v91 = vld [vmem:[%s1 + $0xf8] sm:$0xf]
  %v92 = vld [vmem:[%s1 + $0xfc] sm:$0xf]
  %v93 = vld [vmem:[%s1 + $0x100] sm:$0xf]
  %v94 = vld [vmem:[%s1 + $0x104] sm:$0xf]
  %v95 = vld [vmem:[%s1 + $0x108] sm:$0xf]
  %v96 = vld [vmem:[%s1 + $0x10c] sm:$0xf]
  %v97 = vld [vmem:[%s1 + $0x110] sm:$0xf]
  %v98 = vld [vmem:[%s1 + $0x114] sm:$0xf]
  %v99 = vld [vmem:[%s1 + $0x118] sm:$0xf]
  %v100 = vld [vmem:[%s1 + $0x11c] sm:$0xf]
  %v101 = vld [vmem:[%s1 + $0x120] sm:$0xf]
  %v102 = vld [vmem:[%s1 + $0x124] sm:$0xf]
  %v103 = vld [vmem:[%s1 + $0x128] sm:$0xf]
  %v104 = vld [vmem:[%s1 + $0x12c] sm:$0xf]
  %v105 = vld [vmem:[%s1 + $0x130] sm:$0xf]
  %v106 = vld [vmem:[%s1 + $0x134] sm:$0xf]
  %v107 = vld [vmem:[%s1 + $0x138] sm:$0xf]
  %v108 = vld [vmem:[%s1 + $0x13c] sm:$0xf]
  %v109 = vld [vmem:[%s1 + $0x140] sm:$0xf]
  %v110 = vld [vmem:[%s1 + $0x144] sm:$0xf]
  %v111 = vld [vmem:[%s1 + $0x148] sm:$0xf]
  %v112 = vld [vmem:[%s1 + $0x14c] sm:$0xf]
  %v113 = vld [vmem:[%s1 + $0x150] sm:$0xf]
  %v114 = vld [vmem:[%s1 + $0x154] sm:$0xf]
  %v115 = vld [vmem:[%s1 + $0x158] sm:$0xf]
  %v116 = vld [vmem:[%s1 + $0x15c] sm:$0xf]
  %v117 = vld [vmem:[%s1 + $0x160] sm:$0xf]
  %v118 = vld [vmem:[%s1 + $0x164] sm:$0xf]
  %v119 = vld [vmem:[%s1 + $0x168] sm:$0xf]
  %v120 = vld [vmem:[%s1 + $0x16c] sm:$0xf]
  %v121 = vld [vmem:[%s1 + $0x170] sm:$0xf]
  %v122 = vld [vmem:[%s1 + $0x174] sm:$0xf]
  %v123 = vld [vmem:[%s1 + $0x178] sm:$0xf]
  %v124 = vld [vmem:[%s1 + $0x17c] sm:$0xf]
  %v125 = vld [vmem:[%s1 + $0x180] sm:$0xf]
  %v126 = vld [vmem:[%s1 + $0x184] sm:$0xf]
  %v127 = vld [vmem:[%s1 + $0x188] sm:$0xf]
  %v128 = vld [vmem:[%s1 + $0x18c] sm:$0xf]
  %v129 = vld [vmem:[%s1 + $0x190] sm:$0xf]
  %v130 = vld [vmem:[%s1 + $0x194] sm:$0xf]
  %v131 = vld [vmem:[%s1 + $0x198] sm:$0xf]
  %v132 = vld [vmem:[%s1 + $0x19c] sm:$0xf]
  %v133 = vld [vmem:[%s1 + $0x1a0] sm:$0xf]
  %v134 = vld [vmem:[%s1 + $0x1a4] sm:$0xf]
  %v135 = vld [vmem:[%s1 + $0x1a8] sm:$0xf]
  %v136 = vld [vmem:[%s1 + $0x1ac] sm:$0xf]
  %v137 = vld [vmem:[%s1 + $0x1b0] sm:$0xf]
  %v138 = vld [vmem:[%s1 + $0x1b4] sm:$0xf]
  %v139 = vld [vmem:[%s1 + $0x1b8] sm:$0xf]
  %v140 = vld [vmem:[%s1 + $0x1bc] sm:$0xf]
  %v141 = vld [vmem:[%s1 + $0x1c0] sm:$0xf]
  %v142 = vld [vmem:[%s1 + $0x1c4] sm:$0xf]
  %v143 = vld [vmem:[%s1 + $0x1c8] sm:$0xf]
  %v144 = vld [vmem:[%s1 + $0x1cc] sm:$0xf]
  %v145 = vld [vmem:[%s1 + $0x1d0] sm:$0xf]
  %v146 = vld [vmem:[%s1 + $0x1d4] sm:$0xf]
  %v147 = vld [vmem:[%s1 + $0x1d8] sm:$0xf]
  %v148 = vld [vmem:[%s1 + $0x1dc] sm:$0xf]
  %v149 = vld [vmem:[%s1 + $0x1e0] sm:$0xf]
  %v150 = vld [vmem:[%s1 + $0x1e4] sm:$0xf]
  %v151 = vld [vmem:[%s1 + $0x1e8] sm:$0xf]
  %v152 = vld [vmem:[%s1 + $0x1ec] sm:$0xf]
  %v153 = vld [vmem:[%s1 + $0x1f0] sm:$0xf]
  %v154 = vld [vmem:[%s1 + $0x1f4] sm:$0xf]
  %v155 = vld [vmem:[%s1 + $0x1f8] sm:$0xf]
  %v156 = vld [vmem:[%s1 + $0x1fc] sm:$0xf]
  %v157 = vld [vmem:[%s2] sm:$0x1]
  %v159 = vlaneseq
  %v160 = vshrl.u32 %v159, 7
  %v161 = vsub.s32 0, %v160
  %v162 = vrot.slane %v157, %v161
  %v172 = vunpack.c.l.b16 %v21
  %v173 = vunpack.c.h.b16 %v21
  %v174 = vunpack.c.l.b16 %v22
  %v175 = vunpack.c.h.b16 %v22
  %v176 = vunpack.c.l.b16 %v23
  %v177 = vunpack.c.h.b16 %v23
  %v178 = vunpack.c.l.b16 %v24
  %v179 = vunpack.c.h.b16 %v24
  %v180 = vunpack.c.l.b16 %v25
  %v181 = vunpack.c.h.b16 %v25
  %v182 = vunpack.c.l.b16 %v26
  %v183 = vunpack.c.h.b16 %v26
  %v184 = vunpack.c.l.b16 %v27
  %v185 = vunpack.c.h.b16 %v27
  %v186 = vunpack.c.l.b16 %v28
  %v187 = vunpack.c.h.b16 %v28
  %v188 = vpack.c.b16 %v180, %v172
  %v189 = vpack.c.b16 %v181, %v173
  %v190 = vpack.c.b16 %v182, %v174
  %v191 = vpack.c.b16 %v183, %v175
  %v192 = vpack.c.b16 %v184, %v176
  %v193 = vpack.c.b16 %v185, %v177
  %v194 = vpack.c.b16 %v186, %v178
  %v195 = vpack.c.b16 %v187, %v179
  %v332 = vunpack.c.l.b16 %v29
  %v333 = vunpack.c.l.b16 %v30
  %v334 = vunpack.c.l.b16 %v31
  %v335 = vunpack.c.l.b16 %v32
  %v336 = vunpack.c.l.b16 %v33
  %v337 = vunpack.c.l.b16 %v34
  %v338 = vunpack.c.l.b16 %v35
  %v339 = vunpack.c.l.b16 %v36
  %v340 = vunpack.c.l.b16 %v37
  %v341 = vunpack.c.l.b16 %v38
  %v342 = vunpack.c.l.b16 %v39
  %v343 = vunpack.c.l.b16 %v40
  %v344 = vunpack.c.l.b16 %v41
  %v345 = vunpack.c.l.b16 %v42
  %v346 = vunpack.c.l.b16 %v43
  %v347 = vunpack.c.l.b16 %v44
  %v348 = vunpack.c.l.b16 %v45
  %v349 = vunpack.c.l.b16 %v46
  %v350 = vunpack.c.l.b16 %v47
  %v351 = vunpack.c.l.b16 %v48
  %v352 = vunpack.c.l.b16 %v49
  %v353 = vunpack.c.l.b16 %v50
  %v354 = vunpack.c.l.b16 %v51
  %v355 = vunpack.c.l.b16 %v52
  %v356 = vunpack.c.l.b16 %v53
  %v357 = vunpack.c.l.b16 %v54
  %v358 = vunpack.c.l.b16 %v55
  %v359 = vunpack.c.l.b16 %v56
  %v360 = vunpack.c.l.b16 %v57
  %v361 = vunpack.c.l.b16 %v58
  %v362 = vunpack.c.l.b16 %v59
  %v363 = vunpack.c.l.b16 %v60
  %v364 = vunpack.c.l.b16 %v61
  %v365 = vunpack.c.l.b16 %v62
  %v366 = vunpack.c.l.b16 %v63
  %v367 = vunpack.c.l.b16 %v64
  %v368 = vunpack.c.l.b16 %v65
  %v369 = vunpack.c.l.b16 %v66
  %v370 = vunpack.c.l.b16 %v67
  %v371 = vunpack.c.l.b16 %v68
  %v372 = vunpack.c.l.b16 %v69
  %v373 = vunpack.c.l.b16 %v70
  %v374 = vunpack.c.l.b16 %v71
  %v375 = vunpack.c.l.b16 %v72
  %v376 = vunpack.c.l.b16 %v73
  %v377 = vunpack.c.l.b16 %v74
  %v378 = vunpack.c.l.b16 %v75
  %v379 = vunpack.c.l.b16 %v76
  %v380 = vunpack.c.l.b16 %v77
  %v381 = vunpack.c.l.b16 %v78
  %v382 = vunpack.c.l.b16 %v79
  %v383 = vunpack.c.l.b16 %v80
  %v384 = vunpack.c.l.b16 %v81
  %v385 = vunpack.c.l.b16 %v82
  %v386 = vunpack.c.l.b16 %v83
  %v387 = vunpack.c.l.b16 %v84
  %v388 = vunpack.c.l.b16 %v85
  %v389 = vunpack.c.l.b16 %v86
  %v390 = vunpack.c.l.b16 %v87
  %v391 = vunpack.c.l.b16 %v88
  %v392 = vunpack.c.l.b16 %v89
  %v393 = vunpack.c.l.b16 %v90
  %v394 = vunpack.c.l.b16 %v91
  %v395 = vunpack.c.l.b16 %v92
  %v396 = vunpack.c.l.b16 %v93
  %v397 = vunpack.c.l.b16 %v94
  %v398 = vunpack.c.l.b16 %v95
  %v399 = vunpack.c.l.b16 %v96
  %v400 = vunpack.c.l.b16 %v97
  %v401 = vunpack.c.l.b16 %v98
  %v402 = vunpack.c.l.b16 %v99
  %v403 = vunpack.c.l.b16 %v100
  %v404 = vunpack.c.l.b16 %v101
  %v405 = vunpack.c.l.b16 %v102
  %v406 = vunpack.c.l.b16 %v103
  %v407 = vunpack.c.l.b16 %v104
  %v408 = vunpack.c.l.b16 %v105
  %v409 = vunpack.c.l.b16 %v106
  %v410 = vunpack.c.l.b16 %v107
  %v411 = vunpack.c.l.b16 %v108
  %v412 = vunpack.c.l.b16 %v109
  %v413 = vunpack.c.l.b16 %v110
  %v414 = vunpack.c.l.b16 %v111
  %v415 = vunpack.c.l.b16 %v112
  %v416 = vunpack.c.l.b16 %v113
  %v417 = vunpack.c.l.b16 %v114
  %v418 = vunpack.c.l.b16 %v115
  %v419 = vunpack.c.l.b16 %v116
  %v420 = vunpack.c.l.b16 %v117
  %v421 = vunpack.c.l.b16 %v118
  %v422 = vunpack.c.l.b16 %v119
  %v423 = vunpack.c.l.b16 %v120
  %v424 = vunpack.c.l.b16 %v121
  %v425 = vunpack.c.l.b16 %v122
  %v426 = vunpack.c.l.b16 %v123
  %v427 = vunpack.c.l.b16 %v124
  %v428 = vunpack.c.l.b16 %v125
  %v429 = vunpack.c.l.b16 %v126
  %v430 = vunpack.c.l.b16 %v127
  %v431 = vunpack.c.l.b16 %v128
  %v432 = vunpack.c.l.b16 %v129
  %v433 = vunpack.c.l.b16 %v130
  %v434 = vunpack.c.l.b16 %v131
  %v435 = vunpack.c.l.b16 %v132
  %v436 = vunpack.c.l.b16 %v133
  %v437 = vunpack.c.l.b16 %v134
  %v438 = vunpack.c.l.b16 %v135
  %v439 = vunpack.c.l.b16 %v136
  %v440 = vunpack.c.l.b16 %v137
  %v441 = vunpack.c.l.b16 %v138
  %v442 = vunpack.c.l.b16 %v139
  %v443 = vunpack.c.l.b16 %v140
  %v444 = vunpack.c.l.b16 %v141
  %v445 = vunpack.c.l.b16 %v142
  %v446 = vunpack.c.l.b16 %v143
  %v447 = vunpack.c.l.b16 %v144
  %v448 = vunpack.c.l.b16 %v145
  %v449 = vunpack.c.l.b16 %v146
  %v450 = vunpack.c.l.b16 %v147
  %v451 = vunpack.c.l.b16 %v148
  %v452 = vunpack.c.l.b16 %v149
  %v453 = vunpack.c.l.b16 %v150
  %v454 = vunpack.c.l.b16 %v151
  %v455 = vunpack.c.l.b16 %v152
  %v456 = vunpack.c.l.b16 %v153
  %v457 = vunpack.c.l.b16 %v154
  %v458 = vunpack.c.l.b16 %v155
  %v459 = vunpack.c.l.b16 %v156
  %v460 = vpack.c.b16 %v333, %v332
  %v461 = vpack.c.b16 %v335, %v334
  %v462 = vpack.c.b16 %v337, %v336
  %v463 = vpack.c.b16 %v339, %v338
  %v464 = vpack.c.b16 %v341, %v340
  %v465 = vpack.c.b16 %v343, %v342
  %v466 = vpack.c.b16 %v345, %v344
  %v467 = vpack.c.b16 %v347, %v346
  %v468 = vpack.c.b16 %v349, %v348
  %v469 = vpack.c.b16 %v351, %v350
  %v470 = vpack.c.b16 %v353, %v352
  %v471 = vpack.c.b16 %v355, %v354
  %v472 = vpack.c.b16 %v357, %v356
  %v473 = vpack.c.b16 %v359, %v358
  %v474 = vpack.c.b16 %v361, %v360
  %v475 = vpack.c.b16 %v363, %v362
  %v476 = vpack.c.b16 %v365, %v364
  %v477 = vpack.c.b16 %v367, %v366
  %v478 = vpack.c.b16 %v369, %v368
  %v479 = vpack.c.b16 %v371, %v370
  %v480 = vpack.c.b16 %v373, %v372
  %v481 = vpack.c.b16 %v375, %v374
  %v482 = vpack.c.b16 %v377, %v376
  %v483 = vpack.c.b16 %v379, %v378
  %v484 = vpack.c.b16 %v381, %v380
  %v485 = vpack.c.b16 %v383, %v382
  %v486 = vpack.c.b16 %v385, %v384
  %v487 = vpack.c.b16 %v387, %v386
  %v488 = vpack.c.b16 %v389, %v388
  %v489 = vpack.c.b16 %v391, %v390
  %v490 = vpack.c.b16 %v393, %v392
  %v491 = vpack.c.b16 %v395, %v394
  %v492 = vpack.c.b16 %v397, %v396
  %v493 = vpack.c.b16 %v399, %v398
  %v494 = vpack.c.b16 %v401, %v400
  %v495 = vpack.c.b16 %v403, %v402
  %v496 = vpack.c.b16 %v405, %v404
  %v497 = vpack.c.b16 %v407, %v406
  %v498 = vpack.c.b16 %v409, %v408
  %v499 = vpack.c.b16 %v411, %v410
  %v500 = vpack.c.b16 %v413, %v412
  %v501 = vpack.c.b16 %v415, %v414
  %v502 = vpack.c.b16 %v417, %v416
  %v503 = vpack.c.b16 %v419, %v418
  %v504 = vpack.c.b16 %v421, %v420
  %v505 = vpack.c.b16 %v423, %v422
  %v506 = vpack.c.b16 %v425, %v424
  %v507 = vpack.c.b16 %v427, %v426
  %v508 = vpack.c.b16 %v429, %v428
  %v509 = vpack.c.b16 %v431, %v430
  %v510 = vpack.c.b16 %v433, %v432
  %v511 = vpack.c.b16 %v435, %v434
  %v512 = vpack.c.b16 %v437, %v436
  %v513 = vpack.c.b16 %v439, %v438
  %v514 = vpack.c.b16 %v441, %v440
  %v515 = vpack.c.b16 %v443, %v442
  %v516 = vpack.c.b16 %v445, %v444
  %v517 = vpack.c.b16 %v447, %v446
  %v518 = vpack.c.b16 %v449, %v448
  %v519 = vpack.c.b16 %v451, %v450
  %v520 = vpack.c.b16 %v453, %v452
  %v521 = vpack.c.b16 %v455, %v454
  %v522 = vpack.c.b16 %v457, %v456
  %v523 = vpack.c.b16 %v459, %v458
  %588 = vmatprep.subr.bf16.mxu0 0
  %589 = vmatpush1.bf16.msra.mxu0 %v460
  %590 = vmatprep.subr.bf16.mxu0 0
  %591 = vmatpush1.bf16.msra.mxu0 %v461
  %592 = vmatprep.subr.bf16.mxu0 0
  %593 = vmatpush1.bf16.msra.mxu0 %v462
  %594 = vmatprep.subr.bf16.mxu0 0
  %595 = vmatpush1.bf16.msra.mxu0 %v463
  %596 = vmatprep.subr.bf16.mxu0 0
  %597 = vmatpush1.bf16.msra.mxu0 %v464
  %598 = vmatprep.subr.bf16.mxu0 0
  %599 = vmatpush1.bf16.msra.mxu0 %v465
  %600 = vmatprep.subr.bf16.mxu0 0
  %601 = vmatpush1.bf16.msra.mxu0 %v466
  %602 = vmatprep.subr.bf16.mxu0 0
  %603 = vmatpush1.bf16.msra.mxu0 %v467
  %604 = vmatprep.subr.bf16.mxu0 0
  %605 = vmatpush1.bf16.msra.mxu0 %v468
  %606 = vmatprep.subr.bf16.mxu0 0
  %607 = vmatpush1.bf16.msra.mxu0 %v469
  %608 = vmatprep.subr.bf16.mxu0 0
  %609 = vmatpush1.bf16.msra.mxu0 %v470
  %610 = vmatprep.subr.bf16.mxu0 0
  %611 = vmatpush1.bf16.msra.mxu0 %v471
  %612 = vmatprep.subr.bf16.mxu0 0
  %613 = vmatpush1.bf16.msra.mxu0 %v472
  %614 = vmatprep.subr.bf16.mxu0 0
  %615 = vmatpush1.bf16.msra.mxu0 %v473
  %616 = vmatprep.subr.bf16.mxu0 0
  %617 = vmatpush1.bf16.msra.mxu0 %v474
  %618 = vmatprep.subr.bf16.mxu0 0
  %619 = vmatpush1.bf16.msra.mxu0 %v475
  %620 = vmatprep.mubr.bf16.mxu0 %v189
  %621 = vmatmul.mubr.bf16.gmra.mrb[0].mxu0 %v188
  %v622 = vpop.f32.mrb[0].mxu0
  %v623 = vadd.f32 %v162, %v622
  %v624 = vpop.f32.mrb[0].mxu0
  %v625 = vpop.f32.mrb[0].mxu0
  %v626 = vadd.f32 %v162, %v625
  %v627 = vpop.f32.mrb[0].mxu0
  %628 = vdwg.mxu0
  %629 = vmatprep.subr.bf16.mxu0 0
  %630 = vmatpush1.bf16.msra.mxu0 %v476
  %631 = vmatprep.subr.bf16.mxu0 0
  %632 = vmatpush1.bf16.msra.mxu0 %v477
  %633 = vmatprep.subr.bf16.mxu0 0
  %634 = vmatpush1.bf16.msra.mxu0 %v478
  %635 = vmatprep.subr.bf16.mxu0 0
  %636 = vmatpush1.bf16.msra.mxu0 %v479
  %637 = vmatprep.subr.bf16.mxu0 0
  %638 = vmatpush1.bf16.msra.mxu0 %v480
  %639 = vmatprep.subr.bf16.mxu0 0
  %640 = vmatpush1.bf16.msra.mxu0 %v481
  %641 = vmatprep.subr.bf16.mxu0 0
  %642 = vmatpush1.bf16.msra.mxu0 %v482
  %643 = vmatprep.subr.bf16.mxu0 0
  %644 = vmatpush1.bf16.msra.mxu0 %v483
  %645 = vmatprep.subr.bf16.mxu0 0
  %646 = vmatpush1.bf16.msra.mxu0 %v484
  %647 = vmatprep.subr.bf16.mxu0 0
  %648 = vmatpush1.bf16.msra.mxu0 %v485
  %649 = vmatprep.subr.bf16.mxu0 0
  %650 = vmatpush1.bf16.msra.mxu0 %v486
  %651 = vmatprep.subr.bf16.mxu0 0
  %652 = vmatpush1.bf16.msra.mxu0 %v487
  %653 = vmatprep.subr.bf16.mxu0 0
  %654 = vmatpush1.bf16.msra.mxu0 %v488
  %655 = vmatprep.subr.bf16.mxu0 0
  %656 = vmatpush1.bf16.msra.mxu0 %v489
  %657 = vmatprep.subr.bf16.mxu0 0
  %658 = vmatpush1.bf16.msra.mxu0 %v490
  %659 = vmatprep.subr.bf16.mxu0 0
  %660 = vmatpush1.bf16.msra.mxu0 %v491
  %661 = vmatprep.mubr.bf16.mxu0 %v191
  %662 = vmatmul.mubr.bf16.gmra.mrb[0].mxu0 %v190
  %v663 = vpop.f32.mrb[0].mxu0
  %v664 = vadd.f32 %v623, %v663
  %v665 = vpop.f32.mrb[0].mxu0
  %v666 = vpop.f32.mrb[0].mxu0
  %v667 = vadd.f32 %v626, %v666
  %v668 = vpop.f32.mrb[0].mxu0
  %669 = vdwg.mxu0
  %670 = vmatprep.subr.bf16.mxu0 0
  %671 = vmatpush1.bf16.msra.mxu0 %v492
  %672 = vmatprep.subr.bf16.mxu0 0
  %673 = vmatpush1.bf16.msra.mxu0 %v493
  %674 = vmatprep.subr.bf16.mxu0 0
  %675 = vmatpush1.bf16.msra.mxu0 %v494
  %676 = vmatprep.subr.bf16.mxu0 0
  %677 = vmatpush1.bf16.msra.mxu0 %v495
  %678 = vmatprep.subr.bf16.mxu0 0
  %679 = vmatpush1.bf16.msra.mxu0 %v496
  %680 = vmatprep.subr.bf16.mxu0 0
  %681 = vmatpush1.bf16.msra.mxu0 %v497
  %682 = vmatprep.subr.bf16.mxu0 0
  %683 = vmatpush1.bf16.msra.mxu0 %v498
  %684 = vmatprep.subr.bf16.mxu0 0
  %685 = vmatpush1.bf16.msra.mxu0 %v499
  %686 = vmatprep.subr.bf16.mxu0 0
  %687 = vmatpush1.bf16.msra.mxu0 %v500
  %688 = vmatprep.subr.bf16.mxu0 0
  %689 = vmatpush1.bf16.msra.mxu0 %v501
  %690 = vmatprep.subr.bf16.mxu0 0
  %691 = vmatpush1.bf16.msra.mxu0 %v502
  %692 = vmatprep.subr.bf16.mxu0 0
  %693 = vmatpush1.bf16.msra.mxu0 %v503
  %694 = vmatprep.subr.bf16.mxu0 0
  %695 = vmatpush1.bf16.msra.mxu0 %v504
  %696 = vmatprep.subr.bf16.mxu0 0
  %697 = vmatpush1.bf16.msra.mxu0 %v505
  %698 = vmatprep.subr.bf16.mxu0 0
  %699 = vmatpush1.bf16.msra.mxu0 %v506
  %700 = vmatprep.subr.bf16.mxu0 0
  %701 = vmatpush1.bf16.msra.mxu0 %v507
  %702 = vmatprep.mubr.bf16.mxu0 %v193
  %703 = vmatmul.mubr.bf16.gmra.mrb[0].mxu0 %v192
  %v704 = vpop.f32.mrb[0].mxu0
  %v705 = vadd.f32 %v664, %v704
  %v706 = vpop.f32.mrb[0].mxu0
  %v707 = vpop.f32.mrb[0].mxu0
  %v708 = vadd.f32 %v667, %v707
  %v709 = vpop.f32.mrb[0].mxu0
  %710 = vdwg.mxu0
  %711 = vmatprep.subr.bf16.mxu0 0
  %712 = vmatpush1.bf16.msra.mxu0 %v508
  %713 = vmatprep.subr.bf16.mxu0 0
  %714 = vmatpush1.bf16.msra.mxu0 %v509
  %715 = vmatprep.subr.bf16.mxu0 0
  %716 = vmatpush1.bf16.msra.mxu0 %v510
  %717 = vmatprep.subr.bf16.mxu0 0
  %718 = vmatpush1.bf16.msra.mxu0 %v511
  %719 = vmatprep.subr.bf16.mxu0 0
  %720 = vmatpush1.bf16.msra.mxu0 %v512
  %721 = vmatprep.subr.bf16.mxu0 0
  %722 = vmatpush1.bf16.msra.mxu0 %v513
  %723 = vmatprep.subr.bf16.mxu0 0
  %724 = vmatpush1.bf16.msra.mxu0 %v514
  %725 = vmatprep.subr.bf16.mxu0 0
  %726 = vmatpush1.bf16.msra.mxu0 %v515
  %727 = vmatprep.subr.bf16.mxu0 0
  %728 = vmatpush1.bf16.msra.mxu0 %v516
  %729 = vmatprep.subr.bf16.mxu0 0
  %730 = vmatpush1.bf16.msra.mxu0 %v517
  %731 = vmatprep.subr.bf16.mxu0 0
  %732 = vmatpush1.bf16.msra.mxu0 %v518
  %733 = vmatprep.subr.bf16.mxu0 0
  %734 = vmatpush1.bf16.msra.mxu0 %v519
  %735 = vmatprep.subr.bf16.mxu0 0
  %736 = vmatpush1.bf16.msra.mxu0 %v520
  %737 = vmatprep.subr.bf16.mxu0 0
  %738 = vmatpush1.bf16.msra.mxu0 %v521
  %739 = vmatprep.subr.bf16.mxu0 0
  %740 = vmatpush1.bf16.msra.mxu0 %v522
  %741 = vmatprep.subr.bf16.mxu0 0
  %742 = vmatpush1.bf16.msra.mxu0 %v523
  %743 = vmatprep.mubr.bf16.mxu0 %v195
  %744 = vmatmul.mubr.bf16.gmra.mrb[0].mxu0 %v194
  %v745 = vpop.f32.mrb[0].mxu0
  %v746 = vadd.f32 %v705, %v745
  %v747 = vpop.f32.mrb[0].mxu0
  %v748 = vpop.f32.mrb[0].mxu0
  %v749 = vadd.f32 %v708, %v748
  %v750 = vpop.f32.mrb[0].mxu0
  %751 = vdwg.mxu0
  %v752 = vmax.f32 %v746, 0.0
  %v753 = vmax.f32 %v749, 0.0
  %v754 = vpack.c.bf16 %v753, %v752
  %v755 = vld [vmem:[%s3] sm:$0xf]
  %v756 = vld [vmem:[%s3 + $0x4] sm:$0xf]
  %v757 = vld [vmem:[%s3 + $0x8] sm:$0xf]
  %v758 = vld [vmem:[%s3 + $0xc] sm:$0xf]
  %v759 = vld [vmem:[%s3 + $0x10] sm:$0xf]
  %v760 = vld [vmem:[%s3 + $0x14] sm:$0xf]
  %v761 = vld [vmem:[%s3 + $0x18] sm:$0xf]
  %v762 = vld [vmem:[%s3 + $0x1c] sm:$0xf]
  %v763 = vld [vmem:[%s4] sm:$0x1]
  %v765 = vlaneseq
  %v766 = vshrl.u32 %v765, 7
  %v767 = vsub.s32 0, %v766
  %v768 = vrot.slane %v763, %v767
  %v778 = vunpack.c.l.b16 %v755
  %v779 = vunpack.c.l.b16 %v756
  %v780 = vunpack.c.l.b16 %v757
  %v781 = vunpack.c.l.b16 %v758
  %v782 = vunpack.c.l.b16 %v759
  %v783 = vunpack.c.l.b16 %v760
  %v784 = vunpack.c.l.b16 %v761
  %v785 = vunpack.c.l.b16 %v762
  %v786 = vpack.c.b16 %v779, %v778
  %v787 = vpack.c.b16 %v781, %v780
  %v788 = vpack.c.b16 %v783, %v782
  %v789 = vpack.c.b16 %v785, %v784
  %vm794 = vcmask 523264
  %v796 = vsel %vm794, %v754, 0
  %798 = vmatprep.subr.bf16.mxu0 0
  %799 = vmatpush1.bf16.msra.mxu0 %v786
  %800 = vmatprep.subr.bf16.mxu0 0
  %801 = vmatpush1.bf16.msra.mxu0 %v787
  %802 = vmatprep.subr.bf16.mxu0 0
  %803 = vmatpush1.bf16.msra.mxu0 %v788
  %804 = vmatprep.subr.bf16.mxu0 0
  %805 = vmatpush1.bf16.msra.mxu0 %v789
  %806 = vmatprep.subr.bf16.mxu0 0
  %807 = vmatpush1.bf16.msra.mxu0 0
  %808 = vmatprep.subr.bf16.mxu0 0
  %809 = vmatpush1.bf16.msra.mxu0 0
  %810 = vmatprep.subr.bf16.mxu0 0
  %811 = vmatpush1.bf16.msra.mxu0 0
  %812 = vmatprep.subr.bf16.mxu0 0
  %813 = vmatpush1.bf16.msra.mxu0 0
  %814 = vmatprep.subr.bf16.mxu0 0
  %815 = vmatpush1.bf16.msra.mxu0 0
  %816 = vmatprep.subr.bf16.mxu0 0
  %817 = vmatpush1.bf16.msra.mxu0 0
  %818 = vmatprep.subr.bf16.mxu0 0
  %819 = vmatpush1.bf16.msra.mxu0 0
  %820 = vmatprep.subr.bf16.mxu0 0
  %821 = vmatpush1.bf16.msra.mxu0 0
  %822 = vmatprep.subr.bf16.mxu0 0
  %823 = vmatpush1.bf16.msra.mxu0 0
  %824 = vmatprep.subr.bf16.mxu0 0
  %825 = vmatpush1.bf16.msra.mxu0 0
  %826 = vmatprep.subr.bf16.mxu0 0
  %827 = vmatpush1.bf16.msra.mxu0 0
  %828 = vmatprep.subr.bf16.mxu0 0
  %829 = vmatpush1.bf16.msra.mxu0 0
  %830 = vmatprep.mubr.bf16.mxu0 0
  %831 = vmatmul.mubr.bf16.gmra.mrb[0].mxu0 %v796
  %v832 = vpop.f32.mrb[0].mxu0
  %v833 = vadd.f32 %v768, %v832
  %v834 = vpop.f32.mrb[0].mxu0
  %v835 = vpop.f32.mrb[0].mxu0
  %v836 = vadd.f32 %v768, %v835
  %v837 = vpop.f32.mrb[0].mxu0
  %838 = vdwg.mxu0
  %839 = vst [vmem:[%s5] sm:$0xff] %v833
  %840 = vst [vmem:[%s5 + $0x8] sm:$0xff] %v836
  // Predicated region
  $region22: #{cnn_cifar100_forward.7} parent=0 // pred_check
    _
  $region23: #{cnn_cifar100_forward.7} parent=0 // pred_check_branch
    %842 = sbr.rel (0) target = $region25
  $region24: #{cnn_cifar100_forward.7} parent=0 // pred_region
    _
  $region25: #{cnn_cifar100_forward.7} parent=0 // pred_fallthru
    _
  // Predicated region
  $region26: #{cnn_cifar100_forward.7} parent=0 // pred_check
    _
  $region27: #{cnn_cifar100_forward.7} parent=0 // pred_check_branch
    %844 = sbr.rel (0) target = $region29
  $region28: #{cnn_cifar100_forward.7} parent=0 // pred_region
    _
  $region29: #{cnn_cifar100_forward.7} parent=0 // pred_fallthru
    _

</llo_original>
